<compile_context>
chip_gen: v5e
topology: v5e:2x2
jax: 0.10.0
libtpu: 0.0.40
codegen_flags: <defaults>
</compile_context>

<pallas_src>
import functools

import jax
import jax.numpy as jnp
from jax.experimental import pallas as pl
from jax.experimental.pallas import tpu as pltpu


# --------------------------- tiling / spec helpers ---------------------------

def _row_tile(M, target=512):
    """Row tile: 512 for large M, else M rounded up to a multiple of 8."""
    if M >= target:
        return target
    return max(8, ((M + 7) // 8) * 8)


def _pad_rows(x, tm):
    """Pad rows of x up to a multiple of tm (zeros); returns (padded, original_M)."""
    M = x.shape[0]
    Mp = ((M + tm - 1) // tm) * tm
    if Mp == M:
        return x, M
    pad = jnp.zeros((Mp - M,) + x.shape[1:], x.dtype)
    return jnp.concatenate([x, pad], axis=0), M


_BUFFERED1_OK = None


def _probe_buffered1():
    """Eagerly check that pl.Buffered(1) (single-buffered constant blocks) lowers."""
    def run():
        buf1 = pl.Buffered(1)

        def k(x_ref, o_ref):
            o_ref[...] = x_ref[...] * 2.0

        f = pl.pallas_call(
            k,
            out_shape=jax.ShapeDtypeStruct((16, 128), jnp.float32),
            grid=(2,),
            in_specs=[pl.BlockSpec((8, 128), lambda i: (0, 0), pipeline_mode=buf1)],
            out_specs=pl.BlockSpec((8, 128), lambda i: (i, 0)),
        )
        jax.block_until_ready(f(jnp.ones((8, 128), jnp.float32)))

    try:
        run()
        return True
    except Exception:
        return False


def _buffered1_ok():
    global _BUFFERED1_OK
    if _BUFFERED1_OK is None:
        _BUFFERED1_OK = _probe_buffered1()
    return _BUFFERED1_OK


def _const_spec(shape):
    """BlockSpec for a grid-invariant (weight/bias) block; single-buffered if supported."""
    zeros = tuple(0 for _ in shape)
    idx = lambda i: zeros
    if _buffered1_ok():
        try:
            return pl.BlockSpec(shape, idx, pipeline_mode=pl.Buffered(1))
        except Exception:
            pass
    return pl.BlockSpec(shape, idx)


def _cparams(vmem_mb):
    return pltpu.CompilerParams(
        dimension_semantics=("parallel",),
        vmem_limit_bytes=vmem_mb << 20,
    )


# ------------------------------ Pallas kernels -------------------------------

def _emb_ln_proj_kernel(x_ref, g_ref, b_ref, w_ref, pb_ref, o_ref, *, eps):
    """LayerNorm(embeddings) @ W_proj + b_proj, fused (row-tiled)."""
    x = x_ref[...].astype(jnp.float32)                       # [TM, E]
    mean = jnp.mean(x, axis=-1, keepdims=True)
    var = jnp.mean(jnp.square(x - mean), axis=-1, keepdims=True)
    xn = (x - mean) * jax.lax.rsqrt(var + eps) * g_ref[...] + b_ref[...]
    y = jnp.dot(xn.astype(w_ref.dtype), w_ref[...],
                preferred_element_type=jnp.float32) + pb_ref[...]
    o_ref[...] = y.astype(o_ref.dtype)


def _layer_kernel(x_ref, bias_ref,
                  wq_ref, bq_ref, wk_ref, bk_ref, wv_ref, bv_ref,
                  wo_ref, bo_ref, g1_ref, b1_ref,
                  w1_ref, bi1_ref, w2_ref, bi2_ref, g2_ref, b2_ref,
                  o_ref, *, nhead, eps):
    """One full ALBERT layer for one batch element (QKV + MHA + out-proj + LN + FFN + LN)."""
    x = x_ref[0]                                             # [S, H] bf16
    bias = bias_ref[0]                                       # [1, S] f32 additive mask
    S, H = x.shape

    # ---- multi-head attention, head-major weights (no lane slicing / concat) ----
    acc = jnp.zeros((S, H), jnp.float32)
    for h in range(nhead):                                   # static unroll
        q = (jnp.dot(x, wq_ref[h], preferred_element_type=jnp.float32)
             + bq_ref[h]).astype(jnp.bfloat16)               # [S, D] (1/sqrt(D) folded in)
        k = (jnp.dot(x, wk_ref[h], preferred_element_type=jnp.float32)
             + bk_ref[h]).astype(jnp.bfloat16)               # [S, D]
        v = (jnp.dot(x, wv_ref[h], preferred_element_type=jnp.float32)
             + bv_ref[h]).astype(jnp.bfloat16)               # [S, D]
        # scores: contract D directly (no k.T materialization)
        s = jax.lax.dot_general(q, k, (((1,), (1,)), ((), ())),
                                preferred_element_type=jnp.float32)   # [S, S]
        s = s + bias
        s = s - jnp.max(s, axis=-1, keepdims=True)
        p = jnp.exp(s)
        p = p * pl.reciprocal(jnp.sum(p, axis=-1, keepdims=True), approx=True)
        ctx = jnp.dot(p.astype(jnp.bfloat16), v,
                      preferred_element_type=jnp.float32)             # [S, D]
        acc = acc + jnp.dot(ctx.astype(wo_ref.dtype), wo_ref[h],
                            preferred_element_type=jnp.float32)       # [S, H]

    # attention output bias + residual + layernorm
    y = acc + bo_ref[...] + x.astype(jnp.float32)
    mean = jnp.mean(y, axis=-1, keepdims=True)
    var = jnp.mean(jnp.square(y - mean), axis=-1, keepdims=True)
    y = (y - mean) * jax.lax.rsqrt(var + eps) * g1_ref[...] + b1_ref[...]

    # ---- FFN: gelu(y@W1+b1)@W2+b2 + y, then layernorm ----
    # TODO(synk): for S >= 1024 add a query/score tile loop (flash-style) instead of
    # materializing the full [S, S] f32 score matrix per head.
    yb = y.astype(jnp.bfloat16)
    t = jnp.dot(yb, w1_ref[...], preferred_element_type=jnp.float32) + bi1_ref[...]
    t = jax.nn.gelu(t, approximate=True)                     # ALBERT gelu_new, f32
    z = jnp.dot(t.astype(w2_ref.dtype), w2_ref[...],
                preferred_element_type=jnp.float32) + bi2_ref[...]
    z = z + y
    mean = jnp.mean(z, axis=-1, keepdims=True)
    var = jnp.mean(jnp.square(z - mean), axis=-1, keepdims=True)
    z = (z - mean) * jax.lax.rsqrt(var + eps) * g2_ref[...] + b2_ref[...]
    o_ref[0] = z.astype(o_ref.dtype)                         # [S, H] lane-dense store


def _head_kernel(x_ref, w1_ref, b1_ref, w2_ref, b2_ref, o_ref):
    """fc1 then fc2 fused; fc2 columns padded to 128 so the store is lane-dense."""
    t = jnp.dot(x_ref[...], w1_ref[...],
                preferred_element_type=jnp.float32) + b1_ref[...]
    y = jnp.dot(t.astype(w2_ref.dtype), w2_ref[...],
                preferred_element_type=jnp.float32) + b2_ref[...]
    o_ref[...] = y.astype(o_ref.dtype)


# ------------------------------ kernel wrappers -------------------------------

def embed_ln_proj(emb_flat, g, b, w, pb, eps=1e-12):
    M, E = emb_flat.shape
    H = w.shape[1]
    TM = _row_tile(M)
    xp, M0 = _pad_rows(emb_flat, TM)
    Mp = xp.shape[0]
    out = pl.pallas_call(
        functools.partial(_emb_ln_proj_kernel, eps=eps),
        out_shape=jax.ShapeDtypeStruct((Mp, H), jnp.bfloat16),
        grid=(Mp // TM,),
        in_specs=[
            pl.BlockSpec((TM, E), lambda i: (i, 0)),
            _const_spec((1, E)),
            _const_spec((1, E)),
            _const_spec((E, H)),
            _const_spec((1, H)),
        ],
        out_specs=pl.BlockSpec((TM, H), lambda i: (i, 0)),
        compiler_params=_cparams(32),
    )(xp, g.reshape(1, E), b.reshape(1, E), w, pb.reshape(1, H))
    return out[:M0]


def albert_layer(h, bias, p, nhead, eps=1e-12):
    """One shared ALBERT transformer layer, fully fused, grid over batch."""
    B, S, H = h.shape
    D = H // nhead
    I = p["ffn_w"].shape[1]
    return pl.pallas_call(
        functools.partial(_layer_kernel, nhead=nhead, eps=eps),
        out_shape=jax.ShapeDtypeStruct((B, S, H), jnp.bfloat16),
        grid=(B,),
        in_specs=[
            pl.BlockSpec((1, S, H), lambda i: (i, 0, 0)),    # activations
            pl.BlockSpec((1, 1, S), lambda i: (i, 0, 0)),    # additive mask
            _const_spec((nhead, H, D)), _const_spec((nhead, 1, D)),   # Wq (scaled), bq
            _const_spec((nhead, H, D)), _const_spec((nhead, 1, D)),   # Wk, bk
            _const_spec((nhead, H, D)), _const_spec((nhead, 1, D)),   # Wv, bv
            _const_spec((nhead, D, H)), _const_spec((1, H)),          # Wo, bo
            _const_spec((1, H)), _const_spec((1, H)),                 # attn LN
            _const_spec((H, I)), _const_spec((1, I)),                 # FFN in
            _const_spec((I, H)), _const_spec((1, H)),                 # FFN out
            _const_spec((1, H)), _const_spec((1, H)),                 # FFN LN
        ],
        out_specs=pl.BlockSpec((1, S, H), lambda i: (i, 0, 0)),
        compiler_params=_cparams(48),
    )(h, bias,
      p["wq_h"], p["bq_h"], p["wk_h"], p["bk_h"], p["wv_h"], p["bv_h"],
      p["wo_h"], p["attn_out_b"].reshape(1, H),
      p["attn_ln_g"].reshape(1, H), p["attn_ln_b"].reshape(1, H),
      p["ffn_w"], p["ffn_b"].reshape(1, I),
      p["ffn_out_w"], p["ffn_out_b"].reshape(1, H),
      p["ffn_ln_g"].reshape(1, H), p["ffn_ln_b"].reshape(1, H))


def head(x, w1, b1, w2p, b2p):
    M, H = x.shape
    F = w1.shape[1]                                          # 256
    NP = w2p.shape[1]                                        # padded (>=128, lane-dense)
    TM = _row_tile(M)
    xp, M0 = _pad_rows(x, TM)
    Mp = xp.shape[0]
    out = pl.pallas_call(
        _head_kernel,
        out_shape=jax.ShapeDtypeStruct((Mp, NP), jnp.float32),
        grid=(Mp // TM,),
        in_specs=[
            pl.BlockSpec((TM, H), lambda i: (i, 0)),
            _const_spec((H, F)),
            _const_spec((1, F)),
            _const_spec((F, NP)),
            _const_spec((1, NP)),
        ],
        out_specs=pl.BlockSpec((TM, NP), lambda i: (i, 0)),
        compiler_params=_cparams(32),
    )(xp, w1, b1.reshape(1, F), w2p, b2p.reshape(1, NP))
    return out[:M0]


# ------------------------------ model (glue) --------------------------------

def albert_crf_forward(params, cfg, inp_ids, seg_ids, mask_ids, trg=None):
    """Matches AlbertCrf.forward with trg=None: returns emission logits [B,S,C]."""
    B, S = inp_ids.shape
    H, nhead, nlayers, nclass = cfg["hid"], cfg["nhead"], cfg["nlayers"], cfg["nclass"]

    # ---- embeddings (gather in XLA; LN + projection fused in one kernel) ----
    emb = (params["word_emb"][inp_ids]
           + params["pos_emb"][None, :S, :]
           + params["type_emb"][seg_ids])                    # [B, S, E] f32
    E = emb.shape[-1]
    h = embed_ln_proj(emb.reshape(B * S, E),
                      params["emb_ln_g"], params["emb_ln_b"],
                      params["emb_proj_w"], params["emb_proj_b"])     # [B*S, H] bf16
    h = h.reshape(B, S, H)

    # ---- extended attention mask -> additive bias [B, 1, S] ----
    bias = ((1.0 - mask_ids.astype(jnp.float32)) * -10000.0)[:, None, :]

    # ---- shared ALBERT transformer layer applied nlayers times (1 kernel/layer) ----
    for _ in range(nlayers):
        h = albert_layer(h, bias, params, nhead)

    # dropout(0.1): identity at inference (deterministic)
    # ---- classification head: fc1 (H->256) + fc2 (256->C, padded to 128 lanes) ----
    logits = head(h.reshape(B * S, H), params["fc1_w"], params["fc1_b"],
                  params["fc2_w_pad"], params["fc2_b_pad"])           # [B*S, 128] f32
    # TODO(synk): CRF negative log-likelihood (trg is not None) and Viterbi decode
    # are not implemented; trg=None path returns emission logits like the module.
    return logits[:, :nclass].reshape(B, S, nclass)


# -------------------------------- params --------------------------------------

def init_params(key, *, vocab, types, maxpos, emb, hid, inter, nclass):
    keys = iter(jax.random.split(key, 64))

    def w(shape, scale=0.02):
        return (scale * jax.random.normal(next(keys), shape)).astype(jnp.float32)

    zeros = lambda n: jnp.zeros((n,), jnp.float32)
    ones = lambda n: jnp.ones((n,), jnp.float32)

    return {
        "word_emb": w((vocab, emb)),
        "pos_emb": w((maxpos, emb)),
        "type_emb": w((types, emb)),
        "emb_ln_g": ones(emb), "emb_ln_b": zeros(emb),
        "emb_proj_w": w((emb, hid)), "emb_proj_b": zeros(hid),
        # shared transformer layer (ALBERT shares weights across layers)
        "q_w": w((hid, hid)), "q_b": zeros(hid),
        "k_w": w((hid, hid)), "k_b": zeros(hid),
        "v_w": w((hid, hid)), "v_b": zeros(hid),
        "attn_out_w": w((hid, hid)), "attn_out_b": zeros(hid),
        "attn_ln_g": ones(hid), "attn_ln_b": zeros(hid),
        "ffn_w": w((hid, inter)), "ffn_b": zeros(inter),
        "ffn_out_w": w((inter, hid)), "ffn_out_b": zeros(hid),
        "ffn_ln_g": ones(hid), "ffn_ln_b": zeros(hid),
        # classification head
        "fc1_w": w((hid, 256)), "fc1_b": zeros(256),
        "fc2_w": w((256, nclass)), "fc2_b": zeros(nclass),
    }


def prepare_params(raw, cfg):
    """One-time inference prep: bf16 weights, head-major scaled QKV, padded fc2."""
    H, nhead, nclass = cfg["hid"], cfg["nhead"], cfg["nclass"]
    D = H // nhead
    scale = 1.0 / (D ** 0.5)
    bf = lambda x: x.astype(jnp.bfloat16)

    # head-major layouts: W [H_in, H_out] -> [nhead, H_in, D]; b [H_out] -> [nhead, 1, D]
    heads_w = lambda w_: jnp.transpose(w_.reshape(H, nhead, D), (1, 0, 2))
    heads_b = lambda b_: b_.reshape(nhead, 1, D)

    p = {
        "word_emb": raw["word_emb"], "pos_emb": raw["pos_emb"], "type_emb": raw["type_emb"],
        "emb_ln_g": raw["emb_ln_g"], "emb_ln_b": raw["emb_ln_b"],
        "emb_proj_w": bf(raw["emb_proj_w"]), "emb_proj_b": raw["emb_proj_b"],
        # per-head QKV with 1/sqrt(D) folded into the query projection (done once here)
        "wq_h": bf(heads_w(raw["q_w"] * scale)), "bq_h": heads_b(raw["q_b"] * scale),
        "wk_h": bf(heads_w(raw["k_w"])), "bk_h": heads_b(raw["k_b"]),
        "wv_h": bf(heads_w(raw["v_w"])), "bv_h": heads_b(raw["v_b"]),
        # attention output projection, head-major along its input dim
        "wo_h": bf(raw["attn_out_w"].reshape(nhead, D, H)),
        "attn_out_b": raw["attn_out_b"],
        "attn_ln_g": raw["attn_ln_g"], "attn_ln_b": raw["attn_ln_b"],
        "ffn_w": bf(raw["ffn_w"]), "ffn_b": raw["ffn_b"],
        "ffn_out_w": bf(raw["ffn_out_w"]), "ffn_out_b": raw["ffn_out_b"],
        "ffn_ln_g": raw["ffn_ln_g"], "ffn_ln_b": raw["ffn_ln_b"],
        "fc1_w": bf(raw["fc1_w"]), "fc1_b": raw["fc1_b"],
    }
    # pad fc2 output columns to a lane-dense multiple of 128 (sliced back in wrapper)
    NP = max(128, ((nclass + 127) // 128) * 128)
    fc2_w = jnp.zeros((raw["fc2_w"].shape[0], NP), jnp.float32).at[:, :nclass].set(raw["fc2_w"])
    fc2_b = jnp.zeros((NP,), jnp.float32).at[:nclass].set(raw["fc2_b"])
    p["fc2_w_pad"] = bf(fc2_w)
    p["fc2_b_pad"] = fc2_b
    return p


# -------------------------------- main ---------------------------------------

if __name__ == "__main__":
    B, S = 2, 16
    cfg = dict(vocab=64, types=2, maxpos=64, emb=64, hid=128,
               nhead=4, inter=256, nlayers=2, nclass=8)

    key = jax.random.PRNGKey(0)
    pkey, ikey, skey = jax.random.split(key, 3)

    raw_params = init_params(pkey, vocab=cfg["vocab"], types=cfg["types"],
                             maxpos=cfg["maxpos"], emb=cfg["emb"], hid=cfg["hid"],
                             inter=cfg["inter"], nclass=cfg["nclass"])
    params = prepare_params(raw_params, cfg)

    inp_ids = jax.random.randint(ikey, (B, S), 0, cfg["vocab"], dtype=jnp.int32)
    seg_ids = jax.random.randint(skey, (B, S), 0, cfg["types"], dtype=jnp.int32)
    mask_ids = jnp.ones((B, S), jnp.int32)

    # Eagerly probe pl.Buffered(1) support before tracing the jitted forward.
    _buffered1_ok()

    fwd = jax.jit(lambda p, i, s, m: albert_crf_forward(p, cfg, i, s, m))
    logits = fwd(params, inp_ids, seg_ids, mask_ids)
    logits = jax.block_until_ready(logits)

    assert logits.shape == (B, S, cfg["nclass"]), logits.shape
    assert bool(jnp.all(jnp.isfinite(logits)))
    print("KERNEL_OK")
</pallas_src>

<mosaic_0001>
module attributes {stable_mosaic.version = 11 : i64} {
  func.func @k(%arg0: i32, %arg1: memref<8x128xf32, #tpu.memory_space<vmem>>, %arg2: memref<8x128xf32, #tpu.memory_space<vmem>>) attributes {dimension_semantics = [#tpu.dimension_semantics<arbitrary>], iteration_bounds = array<i64: 2>, scalar_prefetch = 0 : i64, scratch_operands = 0 : i64, tpu.core_type = #tpu.core_type<tc>, window_params = [{pipeline_mode = #tpu.pipeline_mode<synchronous>, transform_indices = @transform_0, window_bounds = array<i64: 8, 128>}, {transform_indices = @transform_1, window_bounds = array<i64: 8, 128>}]} {
    %c0 = arith.constant 0 : index
    %c0_0 = arith.constant 0 : index
    %0 = vector.load %arg1[%c0, %c0_0] : memref<8x128xf32, #tpu.memory_space<vmem>>, vector<8x128xf32>
    %cst = arith.constant 2.000000e+00 : f32
    %1 = vector.broadcast %cst : f32 to vector<8x128xf32>
    %2 = arith.mulf %0, %1 : vector<8x128xf32>
    %c0_1 = arith.constant 0 : index
    %c0_2 = arith.constant 0 : index
    %3 = vector.load %arg2[%c0_1, %c0_2] : memref<8x128xf32, #tpu.memory_space<vmem>>, vector<8x128xf32>
    tpu.vector_store %arg2[%c0_1, %c0_2], %2 {strides = array<i32>} : memref<8x128xf32, #tpu.memory_space<vmem>>, vector<8x128xf32>,
    return
  }
  func.func @transform_0(%arg0: i32) -> (i32, i32) {
    %c0_i32 = arith.constant 0 : i32
    %c0_i32_0 = arith.constant 0 : i32
    %c0_i32_1 = arith.constant 0 : i32
    return %c0_i32, %c0_i32_0 : i32, i32
  }
  func.func @transform_1(%arg0: i32) -> (i32, i32) {
    %c0_i32 = arith.constant 0 : i32
    %c0_i32_0 = arith.constant 0 : i32
    return %arg0, %c0_i32 : i32, i32
  }
}

module attributes {stable_mosaic.version = 11 : i64} {
  func.func @_emb_ln_proj_kernel(%arg0: i32, %arg1: memref<32x64xf32, #tpu.memory_space<vmem>>, %arg2: memref<1x64xf32, #tpu.memory_space<vmem>>, %arg3: memref<1x64xf32, #tpu.memory_space<vmem>>, %arg4: memref<64x128xbf16, #tpu.memory_space<vmem>>, %arg5: memref<1x128xf32, #tpu.memory_space<vmem>>, %arg6: memref<32x128xbf16, #tpu.memory_space<vmem>>) attributes {dimension_semantics = [#tpu.dimension_semantics<parallel>], iteration_bounds = array<i64: 1>, scalar_prefetch = 0 : i64, scratch_operands = 0 : i64, tpu.core_type = #tpu.core_type<tc>, window_params = [{transform_indices = @transform_0, window_bounds = array<i64: 32, 64>}, {pipeline_mode = #tpu.pipeline_mode<synchronous>, transform_indices = @transform_1, window_bounds = array<i64: 1, 64>}, {pipeline_mode = #tpu.pipeline_mode<synchronous>, transform_indices = @transform_2, window_bounds = array<i64: 1, 64>}, {pipeline_mode = #tpu.pipeline_mode<synchronous>, transform_indices = @transform_3, window_bounds = array<i64: 64, 128>}, {pipeline_mode = #tpu.pipeline_mode<synchronous>, transform_indices = @transform_4, window_bounds = array<i64: 1, 128>}, {transform_indices = @transform_5, window_bounds = array<i64: 32, 128>}]} {
    %c0 = arith.constant 0 : index
    %c0_0 = arith.constant 0 : index
    %0 = vector.load %arg1[%c0, %c0_0] : memref<32x64xf32, #tpu.memory_space<vmem>>, vector<32x64xf32>
    %cst = arith.constant dense<0.000000e+00> : vector<32xf32>
    %1 = vector.multi_reduction <add>, %0, %cst [1] : vector<32x64xf32> to vector<32xf32>
    %2 = vector.shape_cast %1 : vector<32xf32> to vector<32x1xf32>
    %cst_1 = arith.constant 6.400000e+01 : f32
    %3 = vector.broadcast %cst_1 : f32 to vector<32x1xf32>
    %4 = arith.divf %2, %3 : vector<32x1xf32>
    %5 = vector.broadcast %4 : vector<32x1xf32> to vector<32x64xf32>
    %6 = arith.subf %0, %5 : vector<32x64xf32>
    %7 = arith.mulf %6, %6 : vector<32x64xf32>
    %cst_2 = arith.constant dense<0.000000e+00> : vector<32xf32>
    %8 = vector.multi_reduction <add>, %7, %cst_2 [1] : vector<32x64xf32> to vector<32xf32>
    %9 = vector.shape_cast %8 : vector<32xf32> to vector<32x1xf32>
    %cst_3 = arith.constant 6.400000e+01 : f32
    %10 = vector.broadcast %cst_3 : f32 to vector<32x1xf32>
    %11 = arith.divf %9, %10 : vector<32x1xf32>
    %12 = vector.broadcast %4 : vector<32x1xf32> to vector<32x64xf32>
    %13 = arith.subf %0, %12 : vector<32x64xf32>
    %cst_4 = arith.constant 9.99999996E-13 : f32
    %14 = vector.broadcast %cst_4 : f32 to vector<32x1xf32>
    %15 = arith.addf %11, %14 : vector<32x1xf32>
    %16 = math.rsqrt %15 : vector<32x1xf32>
    %17 = vector.broadcast %16 : vector<32x1xf32> to vector<32x64xf32>
    %18 = arith.mulf %13, %17 : vector<32x64xf32>
    %c0_5 = arith.constant 0 : index
    %c0_6 = arith.constant 0 : index
    %19 = vector.load %arg2[%c0_5, %c0_6] : memref<1x64xf32, #tpu.memory_space<vmem>>, vector<1x64xf32>
    %20 = vector.broadcast %19 : vector<1x64xf32> to vector<32x64xf32>
    %21 = arith.mulf %18, %20 : vector<32x64xf32>
    %c0_7 = arith.constant 0 : index
    %c0_8 = arith.constant 0 : index
    %22 = vector.load %arg3[%c0_7, %c0_8] : memref<1x64xf32, #tpu.memory_space<vmem>>, vector<1x64xf32>
    %23 = vector.broadcast %22 : vector<1x64xf32> to vector<32x64xf32>
    %24 = arith.addf %21, %23 : vector<32x64xf32>
    %25 = arith.truncf %24 : vector<32x64xf32> to vector<32x64xbf16>
    %c0_9 = arith.constant 0 : index
    %c0_10 = arith.constant 0 : index
    %26 = vector.load %arg4[%c0_9, %c0_10] : memref<64x128xbf16, #tpu.memory_space<vmem>>, vector<64x128xbf16>
    %cst_11 = arith.constant dense<0.000000e+00> : vector<32x128xf32>
    %27 = tpu.matmul %25, %26, %cst_11 {dimension_numbers = #tpu.dot_dimension_numbers<[1], [0], [0], [1], [0, 0, 1, 1], [], []>} : vector<32x64xbf16>, vector<64x128xbf16>, vector<32x128xf32> -> vector<32x128xf32>
    %c0_12 = arith.constant 0 : index
    %c0_13 = arith.constant 0 : index
    %28 = vector.load %arg5[%c0_12, %c0_13] : memref<1x128xf32, #tpu.memory_space<vmem>>, vector<1x128xf32>
    %29 = vector.broadcast %28 : vector<1x128xf32> to vector<32x128xf32>
    %30 = arith.addf %27, %29 : vector<32x128xf32>
    %31 = arith.truncf %30 : vector<32x128xf32> to vector<32x128xbf16>
    %c0_14 = arith.constant 0 : index
    %c0_15 = arith.constant 0 : index
    %32 = vector.load %arg6[%c0_14, %c0_15] : memref<32x128xbf16, #tpu.memory_space<vmem>>, vector<32x128xbf16>
    tpu.vector_store %arg6[%c0_14, %c0_15], %31 {strides = array<i32>} : memref<32x128xbf16, #tpu.memory_space<vmem>>, vector<32x128xbf16>,
    return
  }
  func.func @transform_0(%arg0: i32) -> (i32, i32) {
    %c0_i32 = arith.constant 0 : i32
    %c0_i32_0 = arith.constant 0 : i32
    return %arg0, %c0_i32 : i32, i32
  }
  func.func @transform_1(%arg0: i32) -> (i32, i32) {
    %c0_i32 = arith.constant 0 : i32
    %c0_i32_0 = arith.constant 0 : i32
    %c0_i32_1 = arith.constant 0 : i32
    return %c0_i32, %c0_i32_0 : i32, i32
  }
  func.func @transform_2(%arg0: i32) -> (i32, i32) {
    %c0_i32 = arith.constant 0 : i32
    %c0_i32_0 = arith.constant 0 : i32
    %c0_i32_1 = arith.constant 0 : i32
    return %c0_i32, %c0_i32_0 : i32, i32
  }
  func.func @transform_3(%arg0: i32) -> (i32, i32) {
    %c0_i32 = arith.constant 0 : i32
    %c0_i32_0 = arith.constant 0 : i32
    %c0_i32_1 = arith.constant 0 : i32
    return %c0_i32, %c0_i32_0 : i32, i32
  }
  func.func @transform_4(%arg0: i32) -> (i32, i32) {
    %c0_i32 = arith.constant 0 : i32
    %c0_i32_0 = arith.constant 0 : i32
    %c0_i32_1 = arith.constant 0 : i32
    return %c0_i32, %c0_i32_0 : i32, i32
  }
  func.func @transform_5(%arg0: i32) -> (i32, i32) {
    %c0_i32 = arith.constant 0 : i32
    %c0_i32_0 = arith.constant 0 : i32
    return %arg0, %c0_i32 : i32, i32
  }
}

module attributes {stable_mosaic.version = 11 : i64} {
  func.func @_head_kernel(%arg0: i32, %arg1: memref<32x128xbf16, #tpu.memory_space<vmem>>, %arg2: memref<128x256xbf16, #tpu.memory_space<vmem>>, %arg3: memref<1x256xf32, #tpu.memory_space<vmem>>, %arg4: memref<256x128xbf16, #tpu.memory_space<vmem>>, %arg5: memref<1x128xf32, #tpu.memory_space<vmem>>, %arg6: memref<32x128xf32, #tpu.memory_space<vmem>>) attributes {dimension_semantics = [#tpu.dimension_semantics<parallel>], iteration_bounds = array<i64: 1>, scalar_prefetch = 0 : i64, scratch_operands = 0 : i64, tpu.core_type = #tpu.core_type<tc>, window_params = [{transform_indices = @transform_0, window_bounds = array<i64: 32, 128>}, {pipeline_mode = #tpu.pipeline_mode<synchronous>, transform_indices = @transform_1, window_bounds = array<i64: 128, 256>}, {pipeline_mode = #tpu.pipeline_mode<synchronous>, transform_indices = @transform_2, window_bounds = array<i64: 1, 256>}, {pipeline_mode = #tpu.pipeline_mode<synchronous>, transform_indices = @transform_3, window_bounds = array<i64: 256, 128>}, {pipeline_mode = #tpu.pipeline_mode<synchronous>, transform_indices = @transform_4, window_bounds = array<i64: 1, 128>}, {transform_indices = @transform_5, window_bounds = array<i64: 32, 128>}]} {
    %c0 = arith.constant 0 : index
    %c0_0 = arith.constant 0 : index
    %0 = vector.load %arg1[%c0, %c0_0] : memref<32x128xbf16, #tpu.memory_space<vmem>>, vector<32x128xbf16>
    %c0_1 = arith.constant 0 : index
    %c0_2 = arith.constant 0 : index
    %1 = vector.load %arg2[%c0_1, %c0_2] : memref<128x256xbf16, #tpu.memory_space<vmem>>, vector<128x256xbf16>
    %cst = arith.constant dense<0.000000e+00> : vector<32x256xf32>
    %2 = tpu.matmul %0, %1, %cst {dimension_numbers = #tpu.dot_dimension_numbers<[1], [0], [0], [1], [0, 0, 1, 1], [], []>} : vector<32x128xbf16>, vector<128x256xbf16>, vector<32x256xf32> -> vector<32x256xf32>
    %c0_3 = arith.constant 0 : index
    %c0_4 = arith.constant 0 : index
    %3 = vector.load %arg3[%c0_3, %c0_4] : memref<1x256xf32, #tpu.memory_space<vmem>>, vector<1x256xf32>
    %4 = vector.broadcast %3 : vector<1x256xf32> to vector<32x256xf32>
    %5 = arith.addf %2, %4 : vector<32x256xf32>
    %6 = arith.truncf %5 : vector<32x256xf32> to vector<32x256xbf16>
    %c0_5 = arith.constant 0 : index
    %c0_6 = arith.constant 0 : index
    %7 = vector.load %arg4[%c0_5, %c0_6] : memref<256x128xbf16, #tpu.memory_space<vmem>>, vector<256x128xbf16>
    %cst_7 = arith.constant dense<0.000000e+00> : vector<32x128xf32>
    %8 = tpu.matmul %6, %7, %cst_7 {dimension_numbers = #tpu.dot_dimension_numbers<[1], [0], [0], [1], [0, 0, 1, 1], [], []>} : vector<32x256xbf16>, vector<256x128xbf16>, vector<32x128xf32> -> vector<32x128xf32>
    %c0_8 = arith.constant 0 : index
    %c0_9 = arith.constant 0 : index
    %9 = vector.load %arg5[%c0_8, %c0_9] : memref<1x128xf32, #tpu.memory_space<vmem>>, vector<1x128xf32>
    %10 = vector.broadcast %9 : vector<1x128xf32> to vector<32x128xf32>
    %11 = arith.addf %8, %10 : vector<32x128xf32>
    %c0_10 = arith.constant 0 : index
    %c0_11 = arith.constant 0 : index
    %12 = vector.load %arg6[%c0_10, %c0_11] : memref<32x128xf32, #tpu.memory_space<vmem>>, vector<32x128xf32>
    tpu.vector_store %arg6[%c0_10, %c0_11], %11 {strides = array<i32>} : memref<32x128xf32, #tpu.memory_space<vmem>>, vector<32x128xf32>,
    return
  }
  func.func @transform_0(%arg0: i32) -> (i32, i32) {
    %c0_i32 = arith.constant 0 : i32
    %c0_i32_0 = arith.constant 0 : i32
    return %arg0, %c0_i32 : i32, i32
  }
  func.func @transform_1(%arg0: i32) -> (i32, i32) {
    %c0_i32 = arith.constant 0 : i32
    %c0_i32_0 = arith.constant 0 : i32
    %c0_i32_1 = arith.constant 0 : i32
    return %c0_i32, %c0_i32_0 : i32, i32
  }
  func.func @transform_2(%arg0: i32) -> (i32, i32) {
    %c0_i32 = arith.constant 0 : i32
    %c0_i32_0 = arith.constant 0 : i32
    %c0_i32_1 = arith.constant 0 : i32
    return %c0_i32, %c0_i32_0 : i32, i32
  }
  func.func @transform_3(%arg0: i32) -> (i32, i32) {
    %c0_i32 = arith.constant 0 : i32
    %c0_i32_0 = arith.constant 0 : i32
    %c0_i32_1 = arith.constant 0 : i32
    return %c0_i32, %c0_i32_0 : i32, i32
  }
  func.func @transform_4(%arg0: i32) -> (i32, i32) {
    %c0_i32 = arith.constant 0 : i32
    %c0_i32_0 = arith.constant 0 : i32
    %c0_i32_1 = arith.constant 0 : i32
    return %c0_i32, %c0_i32_0 : i32, i32
  }
  func.func @transform_5(%arg0: i32) -> (i32, i32) {
    %c0_i32 = arith.constant 0 : i32
    %c0_i32_0 = arith.constant 0 : i32
    return %arg0, %c0_i32 : i32, i32
  }
}

module attributes {stable_mosaic.version = 11 : i64} {
  func.func @_layer_kernel(%arg0: i32, %arg1: memref<1x16x128xbf16, #tpu.memory_space<vmem>>, %arg2: memref<1x1x16xf32, #tpu.memory_space<vmem>>, %arg3: memref<4x128x32xbf16, #tpu.memory_space<vmem>>, %arg4: memref<4x1x32xf32, #tpu.memory_space<vmem>>, %arg5: memref<4x128x32xbf16, #tpu.memory_space<vmem>>, %arg6: memref<4x1x32xf32, #tpu.memory_space<vmem>>, %arg7: memref<4x128x32xbf16, #tpu.memory_space<vmem>>, %arg8: memref<4x1x32xf32, #tpu.memory_space<vmem>>, %arg9: memref<4x32x128xbf16, #tpu.memory_space<vmem>>, %arg10: memref<1x128xf32, #tpu.memory_space<vmem>>, %arg11: memref<1x128xf32, #tpu.memory_space<vmem>>, %arg12: memref<1x128xf32, #tpu.memory_space<vmem>>, %arg13: memref<128x256xbf16, #tpu.memory_space<vmem>>, %arg14: memref<1x256xf32, #tpu.memory_space<vmem>>, %arg15: memref<256x128xbf16, #tpu.memory_space<vmem>>, %arg16: memref<1x128xf32, #tpu.memory_space<vmem>>, %arg17: memref<1x128xf32, #tpu.memory_space<vmem>>, %arg18: memref<1x128xf32, #tpu.memory_space<vmem>>, %arg19: memref<1x16x128xbf16, #tpu.memory_space<vmem>>) attributes {dimension_semantics = [#tpu.dimension_semantics<parallel>], iteration_bounds = array<i64: 2>, scalar_prefetch = 0 : i64, scratch_operands = 0 : i64, tpu.core_type = #tpu.core_type<tc>, window_params = [{transform_indices = @transform_0, window_bounds = array<i64: 1, 16, 128>}, {transform_indices = @transform_1, window_bounds = array<i64: 1, 1, 16>}, {pipeline_mode = #tpu.pipeline_mode<synchronous>, transform_indices = @transform_2, window_bounds = array<i64: 4, 128, 32>}, {pipeline_mode = #tpu.pipeline_mode<synchronous>, transform_indices = @transform_3, window_bounds = array<i64: 4, 1, 32>}, {pipeline_mode = #tpu.pipeline_mode<synchronous>, transform_indices = @transform_4, window_bounds = array<i64: 4, 128, 32>}, {pipeline_mode = #tpu.pipeline_mode<synchronous>, transform_indices = @transform_5, window_bounds = array<i64: 4, 1, 32>}, {pipeline_mode = #tpu.pipeline_mode<synchronous>, transform_indices = @transform_6, window_bounds = array<i64: 4, 128, 32>}, {pipeline_mode = #tpu.pipeline_mode<synchronous>, transform_indices = @transform_7, window_bounds = array<i64: 4, 1, 32>}, {pipeline_mode = #tpu.pipeline_mode<synchronous>, transform_indices = @transform_8, window_bounds = array<i64: 4, 32, 128>}, {pipeline_mode = #tpu.pipeline_mode<synchronous>, transform_indices = @transform_9, window_bounds = array<i64: 1, 128>}, {pipeline_mode = #tpu.pipeline_mode<synchronous>, transform_indices = @transform_10, window_bounds = array<i64: 1, 128>}, {pipeline_mode = #tpu.pipeline_mode<synchronous>, transform_indices = @transform_11, window_bounds = array<i64: 1, 128>}, {pipeline_mode = #tpu.pipeline_mode<synchronous>, transform_indices = @transform_12, window_bounds = array<i64: 128, 256>}, {pipeline_mode = #tpu.pipeline_mode<synchronous>, transform_indices = @transform_13, window_bounds = array<i64: 1, 256>}, {pipeline_mode = #tpu.pipeline_mode<synchronous>, transform_indices = @transform_14, window_bounds = array<i64: 256, 128>}, {pipeline_mode = #tpu.pipeline_mode<synchronous>, transform_indices = @transform_15, window_bounds = array<i64: 1, 128>}, {pipeline_mode = #tpu.pipeline_mode<synchronous>, transform_indices = @transform_16, window_bounds = array<i64: 1, 128>}, {pipeline_mode = #tpu.pipeline_mode<synchronous>, transform_indices = @transform_17, window_bounds = array<i64: 1, 128>}, {transform_indices = @transform_18, window_bounds = array<i64: 1, 16, 128>}]} {
    %c0 = arith.constant 0 : index
    %c0_0 = arith.constant 0 : index
    %c0_1 = arith.constant 0 : index
    %0 = vector.load %arg1[%c0, %c0_0, %c0_1] : memref<1x16x128xbf16, #tpu.memory_space<vmem>>, vector<1x16x128xbf16>
    %1 = vector.shape_cast %0 : vector<1x16x128xbf16> to vector<16x128xbf16>
    %c0_2 = arith.constant 0 : index
    %c0_3 = arith.constant 0 : index
    %c0_4 = arith.constant 0 : index
    %2 = vector.load %arg2[%c0_2, %c0_3, %c0_4] : memref<1x1x16xf32, #tpu.memory_space<vmem>>, vector<1x1x16xf32>
    %3 = vector.shape_cast %2 : vector<1x1x16xf32> to vector<1x16xf32>
    %cst = arith.constant 0.000000e+00 : f32
    %4 = vector.broadcast %cst : f32 to vector<16x128xf32>
    %c0_5 = arith.constant 0 : index
    %c0_6 = arith.constant 0 : index
    %c0_7 = arith.constant 0 : index
    %5 = vector.load %arg3[%c0_5, %c0_6, %c0_7] : memref<4x128x32xbf16, #tpu.memory_space<vmem>>, vector<1x128x32xbf16>
    %6 = vector.shape_cast %5 : vector<1x128x32xbf16> to vector<128x32xbf16>
    %cst_8 = arith.constant dense<0.000000e+00> : vector<16x32xf32>
    %7 = tpu.matmul %1, %6, %cst_8 {dimension_numbers = #tpu.dot_dimension_numbers<[1], [0], [0], [1], [0, 0, 1, 1], [], []>} : vector<16x128xbf16>, vector<128x32xbf16>, vector<16x32xf32> -> vector<16x32xf32>
    %c0_9 = arith.constant 0 : index
    %c0_10 = arith.constant 0 : index
    %c0_11 = arith.constant 0 : index
    %8 = vector.load %arg4[%c0_9, %c0_10, %c0_11] : memref<4x1x32xf32, #tpu.memory_space<vmem>>, vector<1x1x32xf32>
    %9 = vector.shape_cast %8 : vector<1x1x32xf32> to vector<1x32xf32>
    %10 = vector.broadcast %9 : vector<1x32xf32> to vector<16x32xf32>
    %11 = arith.addf %7, %10 : vector<16x32xf32>
    %12 = arith.truncf %11 : vector<16x32xf32> to vector<16x32xbf16>
    %c0_12 = arith.constant 0 : index
    %c0_13 = arith.constant 0 : index
    %c0_14 = arith.constant 0 : index
    %13 = vector.load %arg5[%c0_12, %c0_13, %c0_14] : memref<4x128x32xbf16, #tpu.memory_space<vmem>>, vector<1x128x32xbf16>
    %14 = vector.shape_cast %13 : vector<1x128x32xbf16> to vector<128x32xbf16>
    %cst_15 = arith.constant dense<0.000000e+00> : vector<16x32xf32>
    %15 = tpu.matmul %1, %14, %cst_15 {dimension_numbers = #tpu.dot_dimension_numbers<[1], [0], [0], [1], [0, 0, 1, 1], [], []>} : vector<16x128xbf16>, vector<128x32xbf16>, vector<16x32xf32> -> vector<16x32xf32>
    %c0_16 = arith.constant 0 : index
    %c0_17 = arith.constant 0 : index
    %c0_18 = arith.constant 0 : index
    %16 = vector.load %arg6[%c0_16, %c0_17, %c0_18] : memref<4x1x32xf32, #tpu.memory_space<vmem>>, vector<1x1x32xf32>
    %17 = vector.shape_cast %16 : vector<1x1x32xf32> to vector<1x32xf32>
    %18 = vector.broadcast %17 : vector<1x32xf32> to vector<16x32xf32>
    %19 = arith.addf %15, %18 : vector<16x32xf32>
    %20 = arith.truncf %19 : vector<16x32xf32> to vector<16x32xbf16>
    %c0_19 = arith.constant 0 : index
    %c0_20 = arith.constant 0 : index
    %c0_21 = arith.constant 0 : index
    %21 = vector.load %arg7[%c0_19, %c0_20, %c0_21] : memref<4x128x32xbf16, #tpu.memory_space<vmem>>, vector<1x128x32xbf16>
    %22 = vector.shape_cast %21 : vector<1x128x32xbf16> to vector<128x32xbf16>
    %cst_22 = arith.constant dense<0.000000e+00> : vector<16x32xf32>
    %23 = tpu.matmul %1, %22, %cst_22 {dimension_numbers = #tpu.dot_dimension_numbers<[1], [0], [0], [1], [0, 0, 1, 1], [], []>} : vector<16x128xbf16>, vector<128x32xbf16>, vector<16x32xf32> -> vector<16x32xf32>
    %c0_23 = arith.constant 0 : index
    %c0_24 = arith.constant 0 : index
    %c0_25 = arith.constant 0 : index
    %24 = vector.load %arg8[%c0_23, %c0_24, %c0_25] : memref<4x1x32xf32, #tpu.memory_space<vmem>>, vector<1x1x32xf32>
    %25 = vector.shape_cast %24 : vector<1x1x32xf32> to vector<1x32xf32>
    %26 = vector.broadcast %25 : vector<1x32xf32> to vector<16x32xf32>
    %27 = arith.addf %23, %26 : vector<16x32xf32>
    %28 = arith.truncf %27 : vector<16x32xf32> to vector<16x32xbf16>
    %cst_26 = arith.constant dense<0.000000e+00> : vector<16x16xf32>
    %29 = tpu.matmul %12, %20, %cst_26 {dimension_numbers = #tpu.dot_dimension_numbers<[1], [1], [0], [0], [0, 0, 1, 0], [], []>} : vector<16x32xbf16>, vector<16x32xbf16>, vector<16x16xf32> -> vector<16x16xf32>
    %30 = vector.broadcast %3 : vector<1x16xf32> to vector<16x16xf32>
    %31 = arith.addf %29, %30 : vector<16x16xf32>
    %cst_27 = arith.constant dense<0xFF800000> : vector<16xf32>
    %32 = vector.multi_reduction <maximumf>, %31, %cst_27 [1] : vector<16x16xf32> to vector<16xf32>
    %33 = vector.shape_cast %32 : vector<16xf32> to vector<16x1xf32>
    %34 = vector.broadcast %33 : vector<16x1xf32> to vector<16x16xf32>
    %35 = arith.subf %31, %34 : vector<16x16xf32>
    %36 = math.exp %35 : vector<16x16xf32>
    %cst_28 = arith.constant dense<0.000000e+00> : vector<16xf32>
    %37 = vector.multi_reduction <add>, %36, %cst_28 [1] : vector<16x16xf32> to vector<16xf32>
    %38 = vector.shape_cast %37 : vector<16xf32> to vector<16x1xf32>
    %39 = tpu.reciprocal %38 {approx = true} : vector<16x1xf32> -> vector<16x1xf32>
    %40 = vector.broadcast %39 : vector<16x1xf32> to vector<16x16xf32>
    %41 = arith.mulf %36, %40 : vector<16x16xf32>
    %42 = arith.truncf %41 : vector<16x16xf32> to vector<16x16xbf16>
    %cst_29 = arith.constant dense<0.000000e+00> : vector<16x32xf32>
    %43 = tpu.matmul %42, %28, %cst_29 {dimension_numbers = #tpu.dot_dimension_numbers<[1], [0], [0], [1], [0, 0, 1, 1], [], []>} : vector<16x16xbf16>, vector<16x32xbf16>, vector<16x32xf32> -> vector<16x32xf32>
    %44 = arith.truncf %43 : vector<16x32xf32> to vector<16x32xbf16>
    %c0_30 = arith.constant 0 : index
    %c0_31 = arith.constant 0 : index
    %c0_32 = arith.constant 0 : index
    %45 = vector.load %arg9[%c0_30, %c0_31, %c0_32] : memref<4x32x128xbf16, #tpu.memory_space<vmem>>, vector<1x32x128xbf16>
    %46 = vector.shape_cast %45 : vector<1x32x128xbf16> to vector<32x128xbf16>
    %cst_33 = arith.constant dense<0.000000e+00> : vector<16x128xf32>
    %47 = tpu.matmul %44, %46, %cst_33 {dimension_numbers = #tpu.dot_dimension_numbers<[1], [0], [0], [1], [0, 0, 1, 1], [], []>} : vector<16x32xbf16>, vector<32x128xbf16>, vector<16x128xf32> -> vector<16x128xf32>
    %48 = arith.addf %4, %47 : vector<16x128xf32>
    %c1 = arith.constant 1 : index
    %c0_34 = arith.constant 0 : index
    %c0_35 = arith.constant 0 : index
    %49 = vector.load %arg3[%c1, %c0_34, %c0_35] : memref<4x128x32xbf16, #tpu.memory_space<vmem>>, vector<1x128x32xbf16>
    %50 = vector.shape_cast %49 : vector<1x128x32xbf16> to vector<128x32xbf16>
    %cst_36 = arith.constant dense<0.000000e+00> : vector<16x32xf32>
    %51 = tpu.matmul %1, %50, %cst_36 {dimension_numbers = #tpu.dot_dimension_numbers<[1], [0], [0], [1], [0, 0, 1, 1], [], []>} : vector<16x128xbf16>, vector<128x32xbf16>, vector<16x32xf32> -> vector<16x32xf32>
    %c1_37 = arith.constant 1 : index
    %c0_38 = arith.constant 0 : index
    %c0_39 = arith.constant 0 : index
    %52 = vector.load %arg4[%c1_37, %c0_38, %c0_39] : memref<4x1x32xf32, #tpu.memory_space<vmem>>, vector<1x1x32xf32>
    %53 = vector.shape_cast %52 : vector<1x1x32xf32> to vector<1x32xf32>
    %54 = vector.broadcast %53 : vector<1x32xf32> to vector<16x32xf32>
    %55 = arith.addf %51, %54 : vector<16x32xf32>
    %56 = arith.truncf %55 : vector<16x32xf32> to vector<16x32xbf16>
    %c1_40 = arith.constant 1 : index
    %c0_41 = arith.constant 0 : index
    %c0_42 = arith.constant 0 : index
    %57 = vector.load %arg5[%c1_40, %c0_41, %c0_42] : memref<4x128x32xbf16, #tpu.memory_space<vmem>>, vector<1x128x32xbf16>
    %58 = vector.shape_cast %57 : vector<1x128x32xbf16> to vector<128x32xbf16>
    %cst_43 = arith.constant dense<0.000000e+00> : vector<16x32xf32>
    %59 = tpu.matmul %1, %58, %cst_43 {dimension_numbers = #tpu.dot_dimension_numbers<[1], [0], [0], [1], [0, 0, 1, 1], [], []>} : vector<16x128xbf16>, vector<128x32xbf16>, vector<16x32xf32> -> vector<16x32xf32>
    %c1_44 = arith.constant 1 : index
    %c0_45 = arith.constant 0 : index
    %c0_46 = arith.constant 0 : index
    %60 = vector.load %arg6[%c1_44, %c0_45, %c0_46] : memref<4x1x32xf32, #tpu.memory_space<vmem>>, vector<1x1x32xf32>
    %61 = vector.shape_cast %60 : vector<1x1x32xf32> to vector<1x32xf32>
    %62 = vector.broadcast %61 : vector<1x32xf32> to vector<16x32xf32>
    %63 = arith.addf %59, %62 : vector<16x32xf32>
    %64 = arith.truncf %63 : vector<16x32xf32> to vector<16x32xbf16>
    %c1_47 = arith.constant 1 : index
    %c0_48 = arith.constant 0 : index
    %c0_49 = arith.constant 0 : index
    %65 = vector.load %arg7[%c1_47, %c0_48, %c0_49] : memref<4x128x32xbf16, #tpu.memory_space<vmem>>, vector<1x128x32xbf16>
    %66 = vector.shape_cast %65 : vector<1x128x32xbf16> to vector<128x32xbf16>
    %cst_50 = arith.constant dense<0.000000e+00> : vector<16x32xf32>
    %67 = tpu.matmul %1, %66, %cst_50 {dimension_numbers = #tpu.dot_dimension_numbers<[1], [0], [0], [1], [0, 0, 1, 1], [], []>} : vector<16x128xbf16>, vector<128x32xbf16>, vector<16x32xf32> -> vector<16x32xf32>
    %c1_51 = arith.constant 1 : index
    %c0_52 = arith.constant 0 : index
    %c0_53 = arith.constant 0 : index
    %68 = vector.load %arg8[%c1_51, %c0_52, %c0_53] : memref<4x1x32xf32, #tpu.memory_space<vmem>>, vector<1x1x32xf32>
    %69 = vector.shape_cast %68 : vector<1x1x32xf32> to vector<1x32xf32>
    %70 = vector.broadcast %69 : vector<1x32xf32> to vector<16x32xf32>
    %71 = arith.addf %67, %70 : vector<16x32xf32>
    %72 = arith.truncf %71 : vector<16x32xf32> to vector<16x32xbf16>
    %cst_54 = arith.constant dense<0.000000e+00> : vector<16x16xf32>
    %73 = tpu.matmul %56, %64, %cst_54 {dimension_numbers = #tpu.dot_dimension_numbers<[1], [1], [0], [0], [0, 0, 1, 0], [], []>} : vector<16x32xbf16>, vector<16x32xbf16>, vector<16x16xf32> -> vector<16x16xf32>
    %74 = vector.broadcast %3 : vector<1x16xf32> to vector<16x16xf32>
    %75 = arith.addf %73, %74 : vector<16x16xf32>
    %cst_55 = arith.constant dense<0xFF800000> : vector<16xf32>
    %76 = vector.multi_reduction <maximumf>, %75, %cst_55 [1] : vector<16x16xf32> to vector<16xf32>
    %77 = vector.shape_cast %76 : vector<16xf32> to vector<16x1xf32>
    %78 = vector.broadcast %77 : vector<16x1xf32> to vector<16x16xf32>
    %79 = arith.subf %75, %78 : vector<16x16xf32>
    %80 = math.exp %79 : vector<16x16xf32>
    %cst_56 = arith.constant dense<0.000000e+00> : vector<16xf32>
    %81 = vector.multi_reduction <add>, %80, %cst_56 [1] : vector<16x16xf32> to vector<16xf32>
    %82 = vector.shape_cast %81 : vector<16xf32> to vector<16x1xf32>
    %83 = tpu.reciprocal %82 {approx = true} : vector<16x1xf32> -> vector<16x1xf32>
    %84 = vector.broadcast %83 : vector<16x1xf32> to vector<16x16xf32>
    %85 = arith.mulf %80, %84 : vector<16x16xf32>
    %86 = arith.truncf %85 : vector<16x16xf32> to vector<16x16xbf16>
    %cst_57 = arith.constant dense<0.000000e+00> : vector<16x32xf32>
    %87 = tpu.matmul %86, %72, %cst_57 {dimension_numbers = #tpu.dot_dimension_numbers<[1], [0], [0], [1], [0, 0, 1, 1], [], []>} : vector<16x16xbf16>, vector<16x32xbf16>, vector<16x32xf32> -> vector<16x32xf32>
    %88 = arith.truncf %87 : vector<16x32xf32> to vector<16x32xbf16>
    %c1_58 = arith.constant 1 : index
    %c0_59 = arith.constant 0 : index
    %c0_60 = arith.constant 0 : index
    %89 = vector.load %arg9[%c1_58, %c0_59, %c0_60] : memref<4x32x128xbf16, #tpu.memory_space<vmem>>, vector<1x32x128xbf16>
    %90 = vector.shape_cast %89 : vector<1x32x128xbf16> to vector<32x128xbf16>
    %cst_61 = arith.constant dense<0.000000e+00> : vector<16x128xf32>
    %91 = tpu.matmul %88, %90, %cst_61 {dimension_numbers = #tpu.dot_dimension_numbers<[1], [0], [0], [1], [0, 0, 1, 1], [], []>} : vector<16x32xbf16>, vector<32x128xbf16>, vector<16x128xf32> -> vector<16x128xf32>
    %92 = arith.addf %48, %91 : vector<16x128xf32>
    %c2 = arith.constant 2 : index
    %c0_62 = arith.constant 0 : index
    %c0_63 = arith.constant 0 : index
    %93 = vector.load %arg3[%c2, %c0_62, %c0_63] : memref<4x128x32xbf16, #tpu.memory_space<vmem>>, vector<1x128x32xbf16>
    %94 = vector.shape_cast %93 : vector<1x128x32xbf16> to vector<128x32xbf16>
    %cst_64 = arith.constant dense<0.000000e+00> : vector<16x32xf32>
    %95 = tpu.matmul %1, %94, %cst_64 {dimension_numbers = #tpu.dot_dimension_numbers<[1], [0], [0], [1], [0, 0, 1, 1], [], []>} : vector<16x128xbf16>, vector<128x32xbf16>, vector<16x32xf32> -> vector<16x32xf32>
    %c2_65 = arith.constant 2 : index
    %c0_66 = arith.constant 0 : index
    %c0_67 = arith.constant 0 : index
    %96 = vector.load %arg4[%c2_65, %c0_66, %c0_67] : memref<4x1x32xf32, #tpu.memory_space<vmem>>, vector<1x1x32xf32>
    %97 = vector.shape_cast %96 : vector<1x1x32xf32> to vector<1x32xf32>
    %98 = vector.broadcast %97 : vector<1x32xf32> to vector<16x32xf32>
    %99 = arith.addf %95, %98 : vector<16x32xf32>
    %100 = arith.truncf %99 : vector<16x32xf32> to vector<16x32xbf16>
    %c2_68 = arith.constant 2 : index
    %c0_69 = arith.constant 0 : index
    %c0_70 = arith.constant 0 : index
    %101 = vector.load %arg5[%c2_68, %c0_69, %c0_70] : memref<4x128x32xbf16, #tpu.memory_space<vmem>>, vector<1x128x32xbf16>
    %102 = vector.shape_cast %101 : vector<1x128x32xbf16> to vector<128x32xbf16>
    %cst_71 = arith.constant dense<0.000000e+00> : vector<16x32xf32>
    %103 = tpu.matmul %1, %102, %cst_71 {dimension_numbers = #tpu.dot_dimension_numbers<[1], [0], [0], [1], [0, 0, 1, 1], [], []>} : vector<16x128xbf16>, vector<128x32xbf16>, vector<16x32xf32> -> vector<16x32xf32>
    %c2_72 = arith.constant 2 : index
    %c0_73 = arith.constant 0 : index
    %c0_74 = arith.constant 0 : index
    %104 = vector.load %arg6[%c2_72, %c0_73, %c0_74] : memref<4x1x32xf32, #tpu.memory_space<vmem>>, vector<1x1x32xf32>
    %105 = vector.shape_cast %104 : vector<1x1x32xf32> to vector<1x32xf32>
    %106 = vector.broadcast %105 : vector<1x32xf32> to vector<16x32xf32>
    %107 = arith.addf %103, %106 : vector<16x32xf32>
    %108 = arith.truncf %107 : vector<16x32xf32> to vector<16x32xbf16>
    %c2_75 = arith.constant 2 : index
    %c0_76 = arith.constant 0 : index
    %c0_77 = arith.constant 0 : index
    %109 = vector.load %arg7[%c2_75, %c0_76, %c0_77] : memref<4x128x32xbf16, #tpu.memory_space<vmem>>, vector<1x128x32xbf16>
    %110 = vector.shape_cast %109 : vector<1x128x32xbf16> to vector<128x32xbf16>
    %cst_78 = arith.constant dense<0.000000e+00> : vector<16x32xf32>
    %111 = tpu.matmul %1, %110, %cst_78 {dimension_numbers = #tpu.dot_dimension_numbers<[1], [0], [0], [1], [0, 0, 1, 1], [], []>} : vector<16x128xbf16>, vector<128x32xbf16>, vector<16x32xf32> -> vector<16x32xf32>
    %c2_79 = arith.constant 2 : index
    %c0_80 = arith.constant 0 : index
    %c0_81 = arith.constant 0 : index
    %112 = vector.load %arg8[%c2_79, %c0_80, %c0_81] : memref<4x1x32xf32, #tpu.memory_space<vmem>>, vector<1x1x32xf32>
    %113 = vector.shape_cast %112 : vector<1x1x32xf32> to vector<1x32xf32>
    %114 = vector.broadcast %113 : vector<1x32xf32> to vector<16x32xf32>
    %115 = arith.addf %111, %114 : vector<16x32xf32>
    %116 = arith.truncf %115 : vector<16x32xf32> to vector<16x32xbf16>
    %cst_82 = arith.constant dense<0.000000e+00> : vector<16x16xf32>
    %117 = tpu.matmul %100, %108, %cst_82 {dimension_numbers = #tpu.dot_dimension_numbers<[1], [1], [0], [0], [0, 0, 1, 0], [], []>} : vector<16x32xbf16>, vector<16x32xbf16>, vector<16x16xf32> -> vector<16x16xf32>
    %118 = vector.broadcast %3 : vector<1x16xf32> to vector<16x16xf32>
    %119 = arith.addf %117, %118 : vector<16x16xf32>
    %cst_83 = arith.constant dense<0xFF800000> : vector<16xf32>
    %120 = vector.multi_reduction <maximumf>, %119, %cst_83 [1] : vector<16x16xf32> to vector<16xf32>
    %121 = vector.shape_cast %120 : vector<16xf32> to vector<16x1xf32>
    %122 = vector.broadcast %121 : vector<16x1xf32> to vector<16x16xf32>
    %123 = arith.subf %119, %122 : vector<16x16xf32>
    %124 = math.exp %123 : vector<16x16xf32>
    %cst_84 = arith.constant dense<0.000000e+00> : vector<16xf32>
    %125 = vector.multi_reduction <add>, %124, %cst_84 [1] : vector<16x16xf32> to vector<16xf32>
    %126 = vector.shape_cast %125 : vector<16xf32> to vector<16x1xf32>
    %127 = tpu.reciprocal %126 {approx = true} : vector<16x1xf32> -> vector<16x1xf32>
    %128 = vector.broadcast %127 : vector<16x1xf32> to vector<16x16xf32>
    %129 = arith.mulf %124, %128 : vector<16x16xf32>
    %130 = arith.truncf %129 : vector<16x16xf32> to vector<16x16xbf16>
    %cst_85 = arith.constant dense<0.000000e+00> : vector<16x32xf32>
    %131 = tpu.matmul %130, %116, %cst_85 {dimension_numbers = #tpu.dot_dimension_numbers<[1], [0], [0], [1], [0, 0, 1, 1], [], []>} : vector<16x16xbf16>, vector<16x32xbf16>, vector<16x32xf32> -> vector<16x32xf32>
    %132 = arith.truncf %131 : vector<16x32xf32> to vector<16x32xbf16>
    %c2_86 = arith.constant 2 : index
    %c0_87 = arith.constant 0 : index
    %c0_88 = arith.constant 0 : index
    %133 = vector.load %arg9[%c2_86, %c0_87, %c0_88] : memref<4x32x128xbf16, #tpu.memory_space<vmem>>, vector<1x32x128xbf16>
    %134 = vector.shape_cast %133 : vector<1x32x128xbf16> to vector<32x128xbf16>
    %cst_89 = arith.constant dense<0.000000e+00> : vector<16x128xf32>
    %135 = tpu.matmul %132, %134, %cst_89 {dimension_numbers = #tpu.dot_dimension_numbers<[1], [0], [0], [1], [0, 0, 1, 1], [], []>} : vector<16x32xbf16>, vector<32x128xbf16>, vector<16x128xf32> -> vector<16x128xf32>
    %136 = arith.addf %92, %135 : vector<16x128xf32>
    %c3 = arith.constant 3 : index
    %c0_90 = arith.constant 0 : index
    %c0_91 = arith.constant 0 : index
    %137 = vector.load %arg3[%c3, %c0_90, %c0_91] : memref<4x128x32xbf16, #tpu.memory_space<vmem>>, vector<1x128x32xbf16>
    %138 = vector.shape_cast %137 : vector<1x128x32xbf16> to vector<128x32xbf16>
    %cst_92 = arith.constant dense<0.000000e+00> : vector<16x32xf32>
    %139 = tpu.matmul %1, %138, %cst_92 {dimension_numbers = #tpu.dot_dimension_numbers<[1], [0], [0], [1], [0, 0, 1, 1], [], []>} : vector<16x128xbf16>, vector<128x32xbf16>, vector<16x32xf32> -> vector<16x32xf32>
    %c3_93 = arith.constant 3 : index
    %c0_94 = arith.constant 0 : index
    %c0_95 = arith.constant 0 : index
    %140 = vector.load %arg4[%c3_93, %c0_94, %c0_95] : memref<4x1x32xf32, #tpu.memory_space<vmem>>, vector<1x1x32xf32>
    %141 = vector.shape_cast %140 : vector<1x1x32xf32> to vector<1x32xf32>
    %142 = vector.broadcast %141 : vector<1x32xf32> to vector<16x32xf32>
    %143 = arith.addf %139, %142 : vector<16x32xf32>
    %144 = arith.truncf %143 : vector<16x32xf32> to vector<16x32xbf16>
    %c3_96 = arith.constant 3 : index
    %c0_97 = arith.constant 0 : index
    %c0_98 = arith.constant 0 : index
    %145 = vector.load %arg5[%c3_96, %c0_97, %c0_98] : memref<4x128x32xbf16, #tpu.memory_space<vmem>>, vector<1x128x32xbf16>
    %146 = vector.shape_cast %145 : vector<1x128x32xbf16> to vector<128x32xbf16>
    %cst_99 = arith.constant dense<0.000000e+00> : vector<16x32xf32>
    %147 = tpu.matmul %1, %146, %cst_99 {dimension_numbers = #tpu.dot_dimension_numbers<[1], [0], [0], [1], [0, 0, 1, 1], [], []>} : vector<16x128xbf16>, vector<128x32xbf16>, vector<16x32xf32> -> vector<16x32xf32>
    %c3_100 = arith.constant 3 : index
    %c0_101 = arith.constant 0 : index
    %c0_102 = arith.constant 0 : index
    %148 = vector.load %arg6[%c3_100, %c0_101, %c0_102] : memref<4x1x32xf32, #tpu.memory_space<vmem>>, vector<1x1x32xf32>
    %149 = vector.shape_cast %148 : vector<1x1x32xf32> to vector<1x32xf32>
    %150 = vector.broadcast %149 : vector<1x32xf32> to vector<16x32xf32>
    %151 = arith.addf %147, %150 : vector<16x32xf32>
    %152 = arith.truncf %151 : vector<16x32xf32> to vector<16x32xbf16>
    %c3_103 = arith.constant 3 : index
    %c0_104 = arith.constant 0 : index
    %c0_105 = arith.constant 0 : index
    %153 = vector.load %arg7[%c3_103, %c0_104, %c0_105] : memref<4x128x32xbf16, #tpu.memory_space<vmem>>, vector<1x128x32xbf16>
    %154 = vector.shape_cast %153 : vector<1x128x32xbf16> to vector<128x32xbf16>
    %cst_106 = arith.constant dense<0.000000e+00> : vector<16x32xf32>
    %155 = tpu.matmul %1, %154, %cst_106 {dimension_numbers = #tpu.dot_dimension_numbers<[1], [0], [0], [1], [0, 0, 1, 1], [], []>} : vector<16x128xbf16>, vector<128x32xbf16>, vector<16x32xf32> -> vector<16x32xf32>
    %c3_107 = arith.constant 3 : index
    %c0_108 = arith.constant 0 : index
    %c0_109 = arith.constant 0 : index
    %156 = vector.load %arg8[%c3_107, %c0_108, %c0_109] : memref<4x1x32xf32, #tpu.memory_space<vmem>>, vector<1x1x32xf32>
    %157 = vector.shape_cast %156 : vector<1x1x32xf32> to vector<1x32xf32>
    %158 = vector.broadcast %157 : vector<1x32xf32> to vector<16x32xf32>
    %159 = arith.addf %155, %158 : vector<16x32xf32>
    %160 = arith.truncf %159 : vector<16x32xf32> to vector<16x32xbf16>
    %cst_110 = arith.constant dense<0.000000e+00> : vector<16x16xf32>
    %161 = tpu.matmul %144, %152, %cst_110 {dimension_numbers = #tpu.dot_dimension_numbers<[1], [1], [0], [0], [0, 0, 1, 0], [], []>} : vector<16x32xbf16>, vector<16x32xbf16>, vector<16x16xf32> -> vector<16x16xf32>
    %162 = vector.broadcast %3 : vector<1x16xf32> to vector<16x16xf32>
    %163 = arith.addf %161, %162 : vector<16x16xf32>
    %cst_111 = arith.constant dense<0xFF800000> : vector<16xf32>
    %164 = vector.multi_reduction <maximumf>, %163, %cst_111 [1] : vector<16x16xf32> to vector<16xf32>
    %165 = vector.shape_cast %164 : vector<16xf32> to vector<16x1xf32>
    %166 = vector.broadcast %165 : vector<16x1xf32> to vector<16x16xf32>
    %167 = arith.subf %163, %166 : vector<16x16xf32>
    %168 = math.exp %167 : vector<16x16xf32>
    %cst_112 = arith.constant dense<0.000000e+00> : vector<16xf32>
    %169 = vector.multi_reduction <add>, %168, %cst_112 [1] : vector<16x16xf32> to vector<16xf32>
    %170 = vector.shape_cast %169 : vector<16xf32> to vector<16x1xf32>
    %171 = tpu.reciprocal %170 {approx = true} : vector<16x1xf32> -> vector<16x1xf32>
    %172 = vector.broadcast %171 : vector<16x1xf32> to vector<16x16xf32>
    %173 = arith.mulf %168, %172 : vector<16x16xf32>
    %174 = arith.truncf %173 : vector<16x16xf32> to vector<16x16xbf16>
    %cst_113 = arith.constant dense<0.000000e+00> : vector<16x32xf32>
    %175 = tpu.matmul %174, %160, %cst_113 {dimension_numbers = #tpu.dot_dimension_numbers<[1], [0], [0], [1], [0, 0, 1, 1], [], []>} : vector<16x16xbf16>, vector<16x32xbf16>, vector<16x32xf32> -> vector<16x32xf32>
    %176 = arith.truncf %175 : vector<16x32xf32> to vector<16x32xbf16>
    %c3_114 = arith.constant 3 : index
    %c0_115 = arith.constant 0 : index
    %c0_116 = arith.constant 0 : index
    %177 = vector.load %arg9[%c3_114, %c0_115, %c0_116] : memref<4x32x128xbf16, #tpu.memory_space<vmem>>, vector<1x32x128xbf16>
    %178 = vector.shape_cast %177 : vector<1x32x128xbf16> to vector<32x128xbf16>
    %cst_117 = arith.constant dense<0.000000e+00> : vector<16x128xf32>
    %179 = tpu.matmul %176, %178, %cst_117 {dimension_numbers = #tpu.dot_dimension_numbers<[1], [0], [0], [1], [0, 0, 1, 1], [], []>} : vector<16x32xbf16>, vector<32x128xbf16>, vector<16x128xf32> -> vector<16x128xf32>
    %180 = arith.addf %136, %179 : vector<16x128xf32>
    %c0_118 = arith.constant 0 : index
    %c0_119 = arith.constant 0 : index
    %181 = vector.load %arg10[%c0_118, %c0_119] : memref<1x128xf32, #tpu.memory_space<vmem>>, vector<1x128xf32>
    %182 = vector.broadcast %181 : vector<1x128xf32> to vector<16x128xf32>
    %183 = arith.addf %180, %182 : vector<16x128xf32>
    %184 = arith.extf %1 : vector<16x128xbf16> to vector<16x128xf32>
    %185 = arith.addf %183, %184 : vector<16x128xf32>
    %cst_120 = arith.constant dense<0.000000e+00> : vector<16xf32>
    %186 = vector.multi_reduction <add>, %185, %cst_120 [1] : vector<16x128xf32> to vector<16xf32>
    %187 = vector.shape_cast %186 : vector<16xf32> to vector<16x1xf32>
    %cst_121 = arith.constant 1.280000e+02 : f32
    %188 = vector.broadcast %cst_121 : f32 to vector<16x1xf32>
    %189 = arith.divf %187, %188 : vector<16x1xf32>
    %190 = vector.broadcast %189 : vector<16x1xf32> to vector<16x128xf32>
    %191 = arith.subf %185, %190 : vector<16x128xf32>
    %192 = arith.mulf %191, %191 : vector<16x128xf32>
    %cst_122 = arith.constant dense<0.000000e+00> : vector<16xf32>
    %193 = vector.multi_reduction <add>, %192, %cst_122 [1] : vector<16x128xf32> to vector<16xf32>
    %194 = vector.shape_cast %193 : vector<16xf32> to vector<16x1xf32>
    %cst_123 = arith.constant 1.280000e+02 : f32
    %195 = vector.broadcast %cst_123 : f32 to vector<16x1xf32>
    %196 = arith.divf %194, %195 : vector<16x1xf32>
    %197 = vector.broadcast %189 : vector<16x1xf32> to vector<16x128xf32>
    %198 = arith.subf %185, %197 : vector<16x128xf32>
    %cst_124 = arith.constant 9.99999996E-13 : f32
    %199 = vector.broadcast %cst_124 : f32 to vector<16x1xf32>
    %200 = arith.addf %196, %199 : vector<16x1xf32>
    %201 = math.rsqrt %200 : vector<16x1xf32>
    %202 = vector.broadcast %201 : vector<16x1xf32> to vector<16x128xf32>
    %203 = arith.mulf %198, %202 : vector<16x128xf32>
    %c0_125 = arith.constant 0 : index
    %c0_126 = arith.constant 0 : index
    %204 = vector.load %arg11[%c0_125, %c0_126] : memref<1x128xf32, #tpu.memory_space<vmem>>, vector<1x128xf32>
    %205 = vector.broadcast %204 : vector<1x128xf32> to vector<16x128xf32>
    %206 = arith.mulf %203, %205 : vector<16x128xf32>
    %c0_127 = arith.constant 0 : index
    %c0_128 = arith.constant 0 : index
    %207 = vector.load %arg12[%c0_127, %c0_128] : memref<1x128xf32, #tpu.memory_space<vmem>>, vector<1x128xf32>
    %208 = vector.broadcast %207 : vector<1x128xf32> to vector<16x128xf32>
    %209 = arith.addf %206, %208 : vector<16x128xf32>
    %210 = arith.truncf %209 : vector<16x128xf32> to vector<16x128xbf16>
    %c0_129 = arith.constant 0 : index
    %c0_130 = arith.constant 0 : index
    %211 = vector.load %arg13[%c0_129, %c0_130] : memref<128x256xbf16, #tpu.memory_space<vmem>>, vector<128x256xbf16>
    %cst_131 = arith.constant dense<0.000000e+00> : vector<16x256xf32>
    %212 = tpu.matmul %210, %211, %cst_131 {dimension_numbers = #tpu.dot_dimension_numbers<[1], [0], [0], [1], [0, 0, 1, 1], [], []>} : vector<16x128xbf16>, vector<128x256xbf16>, vector<16x256xf32> -> vector<16x256xf32>
    %c0_132 = arith.constant 0 : index
    %c0_133 = arith.constant 0 : index
    %213 = vector.load %arg14[%c0_132, %c0_133] : memref<1x256xf32, #tpu.memory_space<vmem>>, vector<1x256xf32>
    %214 = vector.broadcast %213 : vector<1x256xf32> to vector<16x256xf32>
    %215 = arith.addf %212, %214 : vector<16x256xf32>
    %216 = arith.mulf %215, %215 : vector<16x256xf32>
    %217 = arith.mulf %215, %216 : vector<16x256xf32>
    %cst_134 = arith.constant 4.471500e-02 : f32
    %218 = vector.broadcast %cst_134 : f32 to vector<16x256xf32>
    %219 = arith.mulf %218, %217 : vector<16x256xf32>
    %220 = arith.addf %215, %219 : vector<16x256xf32>
    %cst_135 = arith.constant 0.797884583 : f32
    %221 = vector.broadcast %cst_135 : f32 to vector<16x256xf32>
    %222 = arith.mulf %221, %220 : vector<16x256xf32>
    %223 = math.tanh %222 : vector<16x256xf32>
    %cst_136 = arith.constant 1.000000e+00 : f32
    %224 = vector.broadcast %cst_136 : f32 to vector<16x256xf32>
    %225 = arith.addf %224, %223 : vector<16x256xf32>
    %cst_137 = arith.constant 5.000000e-01 : f32
    %226 = vector.broadcast %cst_137 : f32 to vector<16x256xf32>
    %227 = arith.mulf %226, %225 : vector<16x256xf32>
    %228 = arith.mulf %215, %227 : vector<16x256xf32>
    %229 = arith.truncf %228 : vector<16x256xf32> to vector<16x256xbf16>
    %c0_138 = arith.constant 0 : index
    %c0_139 = arith.constant 0 : index
    %230 = vector.load %arg15[%c0_138, %c0_139] : memref<256x128xbf16, #tpu.memory_space<vmem>>, vector<256x128xbf16>
    %cst_140 = arith.constant dense<0.000000e+00> : vector<16x128xf32>
    %231 = tpu.matmul %229, %230, %cst_140 {dimension_numbers = #tpu.dot_dimension_numbers<[1], [0], [0], [1], [0, 0, 1, 1], [], []>} : vector<16x256xbf16>, vector<256x128xbf16>, vector<16x128xf32> -> vector<16x128xf32>
    %c0_141 = arith.constant 0 : index
    %c0_142 = arith.constant 0 : index
    %232 = vector.load %arg16[%c0_141, %c0_142] : memref<1x128xf32, #tpu.memory_space<vmem>>, vector<1x128xf32>
    %233 = vector.broadcast %232 : vector<1x128xf32> to vector<16x128xf32>
    %234 = arith.addf %231, %233 : vector<16x128xf32>
    %235 = arith.addf %234, %209 : vector<16x128xf32>
    %cst_143 = arith.constant dense<0.000000e+00> : vector<16xf32>
    %236 = vector.multi_reduction <add>, %235, %cst_143 [1] : vector<16x128xf32> to vector<16xf32>
    %237 = vector.shape_cast %236 : vector<16xf32> to vector<16x1xf32>
    %cst_144 = arith.constant 1.280000e+02 : f32
    %238 = vector.broadcast %cst_144 : f32 to vector<16x1xf32>
    %239 = arith.divf %237, %238 : vector<16x1xf32>
    %240 = vector.broadcast %239 : vector<16x1xf32> to vector<16x128xf32>
    %241 = arith.subf %235, %240 : vector<16x128xf32>
    %242 = arith.mulf %241, %241 : vector<16x128xf32>
    %cst_145 = arith.constant dense<0.000000e+00> : vector<16xf32>
    %243 = vector.multi_reduction <add>, %242, %cst_145 [1] : vector<16x128xf32> to vector<16xf32>
    %244 = vector.shape_cast %243 : vector<16xf32> to vector<16x1xf32>
    %cst_146 = arith.constant 1.280000e+02 : f32
    %245 = vector.broadcast %cst_146 : f32 to vector<16x1xf32>
    %246 = arith.divf %244, %245 : vector<16x1xf32>
    %247 = vector.broadcast %239 : vector<16x1xf32> to vector<16x128xf32>
    %248 = arith.subf %235, %247 : vector<16x128xf32>
    %cst_147 = arith.constant 9.99999996E-13 : f32
    %249 = vector.broadcast %cst_147 : f32 to vector<16x1xf32>
    %250 = arith.addf %246, %249 : vector<16x1xf32>
    %251 = math.rsqrt %250 : vector<16x1xf32>
    %252 = vector.broadcast %251 : vector<16x1xf32> to vector<16x128xf32>
    %253 = arith.mulf %248, %252 : vector<16x128xf32>
    %c0_148 = arith.constant 0 : index
    %c0_149 = arith.constant 0 : index
    %254 = vector.load %arg17[%c0_148, %c0_149] : memref<1x128xf32, #tpu.memory_space<vmem>>, vector<1x128xf32>
    %255 = vector.broadcast %254 : vector<1x128xf32> to vector<16x128xf32>
    %256 = arith.mulf %253, %255 : vector<16x128xf32>
    %c0_150 = arith.constant 0 : index
    %c0_151 = arith.constant 0 : index
    %257 = vector.load %arg18[%c0_150, %c0_151] : memref<1x128xf32, #tpu.memory_space<vmem>>, vector<1x128xf32>
    %258 = vector.broadcast %257 : vector<1x128xf32> to vector<16x128xf32>
    %259 = arith.addf %256, %258 : vector<16x128xf32>
    %260 = arith.truncf %259 : vector<16x128xf32> to vector<16x128xbf16>
    %c0_152 = arith.constant 0 : index
    %c0_153 = arith.constant 0 : index
    %c0_154 = arith.constant 0 : index
    %261 = vector.load %arg19[%c0_152, %c0_153, %c0_154] : memref<1x16x128xbf16, #tpu.memory_space<vmem>>, vector<1x16x128xbf16>
    %262 = vector.shape_cast %261 : vector<1x16x128xbf16> to vector<16x128xbf16>
    %263 = vector.shape_cast %260 : vector<16x128xbf16> to vector<1x16x128xbf16>
    tpu.vector_store %arg19[%c0_152, %c0_153, %c0_154], %263 {strides = array<i32>} : memref<1x16x128xbf16, #tpu.memory_space<vmem>>, vector<1x16x128xbf16>,
    return
  }
  func.func @transform_0(%arg0: i32) -> (i32, i32, i32) {
    %c0_i32 = arith.constant 0 : i32
    %c0_i32_0 = arith.constant 0 : i32
    %c0_i32_1 = arith.constant 0 : i32
    return %arg0, %c0_i32, %c0_i32_0 : i32, i32, i32
  }
  func.func @transform_1(%arg0: i32) -> (i32, i32, i32) {
    %c0_i32 = arith.constant 0 : i32
    %c0_i32_0 = arith.constant 0 : i32
    %c0_i32_1 = arith.constant 0 : i32
    return %arg0, %c0_i32, %c0_i32_0 : i32, i32, i32
  }
  func.func @transform_2(%arg0: i32) -> (i32, i32, i32) {
    %c0_i32 = arith.constant 0 : i32
    %c0_i32_0 = arith.constant 0 : i32
    %c0_i32_1 = arith.constant 0 : i32
    %c0_i32_2 = arith.constant 0 : i32
    return %c0_i32, %c0_i32_0, %c0_i32_1 : i32, i32, i32
  }
  func.func @transform_3(%arg0: i32) -> (i32, i32, i32) {
    %c0_i32 = arith.constant 0 : i32
    %c0_i32_0 = arith.constant 0 : i32
    %c0_i32_1 = arith.constant 0 : i32
    %c0_i32_2 = arith.constant 0 : i32
    return %c0_i32, %c0_i32_0, %c0_i32_1 : i32, i32, i32
  }
  func.func @transform_4(%arg0: i32) -> (i32, i32, i32) {
    %c0_i32 = arith.constant 0 : i32
    %c0_i32_0 = arith.constant 0 : i32
    %c0_i32_1 = arith.constant 0 : i32
    %c0_i32_2 = arith.constant 0 : i32
    return %c0_i32, %c0_i32_0, %c0_i32_1 : i32, i32, i32
  }
  func.func @transform_5(%arg0: i32) -> (i32, i32, i32) {
    %c0_i32 = arith.constant 0 : i32
    %c0_i32_0 = arith.constant 0 : i32
    %c0_i32_1 = arith.constant 0 : i32
    %c0_i32_2 = arith.constant 0 : i32
    return %c0_i32, %c0_i32_0, %c0_i32_1 : i32, i32, i32
  }
  func.func @transform_6(%arg0: i32) -> (i32, i32, i32) {
    %c0_i32 = arith.constant 0 : i32
    %c0_i32_0 = arith.constant 0 : i32
    %c0_i32_1 = arith.constant 0 : i32
    %c0_i32_2 = arith.constant 0 : i32
    return %c0_i32, %c0_i32_0, %c0_i32_1 : i32, i32, i32
  }
  func.func @transform_7(%arg0: i32) -> (i32, i32, i32) {
    %c0_i32 = arith.constant 0 : i32
    %c0_i32_0 = arith.constant 0 : i32
    %c0_i32_1 = arith.constant 0 : i32
    %c0_i32_2 = arith.constant 0 : i32
    return %c0_i32, %c0_i32_0, %c0_i32_1 : i32, i32, i32
  }
  func.func @transform_8(%arg0: i32) -> (i32, i32, i32) {
    %c0_i32 = arith.constant 0 : i32
    %c0_i32_0 = arith.constant 0 : i32
    %c0_i32_1 = arith.constant 0 : i32
    %c0_i32_2 = arith.constant 0 : i32
    return %c0_i32, %c0_i32_0, %c0_i32_1 : i32, i32, i32
  }
  func.func @transform_9(%arg0: i32) -> (i32, i32) {
    %c0_i32 = arith.constant 0 : i32
    %c0_i32_0 = arith.constant 0 : i32
    %c0_i32_1 = arith.constant 0 : i32
    return %c0_i32, %c0_i32_0 : i32, i32
  }
  func.func @transform_10(%arg0: i32) -> (i32, i32) {
    %c0_i32 = arith.constant 0 : i32
    %c0_i32_0 = arith.constant 0 : i32
    %c0_i32_1 = arith.constant 0 : i32
    return %c0_i32, %c0_i32_0 : i32, i32
  }
  func.func @transform_11(%arg0: i32) -> (i32, i32) {
    %c0_i32 = arith.constant 0 : i32
    %c0_i32_0 = arith.constant 0 : i32
    %c0_i32_1 = arith.constant 0 : i32
    return %c0_i32, %c0_i32_0 : i32, i32
  }
  func.func @transform_12(%arg0: i32) -> (i32, i32) {
    %c0_i32 = arith.constant 0 : i32
    %c0_i32_0 = arith.constant 0 : i32
    %c0_i32_1 = arith.constant 0 : i32
    return %c0_i32, %c0_i32_0 : i32, i32
  }
  func.func @transform_13(%arg0: i32) -> (i32, i32) {
    %c0_i32 = arith.constant 0 : i32
    %c0_i32_0 = arith.constant 0 : i32
    %c0_i32_1 = arith.constant 0 : i32
    return %c0_i32, %c0_i32_0 : i32, i32
  }
  func.func @transform_14(%arg0: i32) -> (i32, i32) {
    %c0_i32 = arith.constant 0 : i32
    %c0_i32_0 = arith.constant 0 : i32
    %c0_i32_1 = arith.constant 0 : i32
    return %c0_i32, %c0_i32_0 : i32, i32
  }
  func.func @transform_15(%arg0: i32) -> (i32, i32) {
    %c0_i32 = arith.constant 0 : i32
    %c0_i32_0 = arith.constant 0 : i32
    %c0_i32_1 = arith.constant 0 : i32
    return %c0_i32, %c0_i32_0 : i32, i32
  }
  func.func @transform_16(%arg0: i32) -> (i32, i32) {
    %c0_i32 = arith.constant 0 : i32
    %c0_i32_0 = arith.constant 0 : i32
    %c0_i32_1 = arith.constant 0 : i32
    return %c0_i32, %c0_i32_0 : i32, i32
  }
  func.func @transform_17(%arg0: i32) -> (i32, i32) {
    %c0_i32 = arith.constant 0 : i32
    %c0_i32_0 = arith.constant 0 : i32
    %c0_i32_1 = arith.constant 0 : i32
    return %c0_i32, %c0_i32_0 : i32, i32
  }
  func.func @transform_18(%arg0: i32) -> (i32, i32, i32) {
    %c0_i32 = arith.constant 0 : i32
    %c0_i32_0 = arith.constant 0 : i32
    %c0_i32_1 = arith.constant 0 : i32
    return %arg0, %c0_i32, %c0_i32_0 : i32, i32, i32
  }
}

</mosaic_0001>

<llo_original>
// kernel: tpu_custom_call.1
$region0: #{tpu_custom_call.1}
  #allocation0 [shape = 'u32[]', space=smem, size = 0x4, offset = 0x4, fixed_abs, tag = 'smem constant byte address 0x4 - core index']
  #allocation1 [shape = 'u32[72,128]{1,0:T(1,128)}', space=vmem, size = 0x9000, scoped, tag = 'internal scratch']
  %s0 = inlined_call_operand.hbm [shape: f32[8,128], index: 0, kind: input, shape index: {}]
  %s1 = inlined_call_operand.hbm [shape: f32[16,128], index: 1, kind: output, shape index: {}]
  %s2 = sld [smem:[#allocation0]]
  $region41: #{tpu_custom_call.1} parent=0
    _
  %s4 = ssub.s32 1, %s2
  %s5 = scalar_select 0, %s4, %s2
  $region1: #{tpu_custom_call.1} parent=0
    #allocation2 [shape = 'u8[4096]{0}', space=vmem, size = 0x1000, scoped, tag = 'input window, operand 0, single buffered']
    #allocation3 [shape = 's32[2]{0}', space=sflag, size = 0x8, scoped, tag = 'scoped memory for tpu_custom_call.1']
    #allocation4 [shape = 's32[2]{0}', space=sflag, size = 0x8, scoped, tag = 'scoped memory for tpu_custom_call.1']
    #allocation5 [shape = 'u8[8192]{0}', space=vmem, size = 0x2000, scoped, tag = 'output window, operand 0']
    %6 = vsyncpa [#allocation3], 0
    %7 = vsyncpa [#allocation4], 0
    %s8 = scalar_lea.sflag [#allocation4], 1
    %9 = vsyncpa %s8, 0
    loop: start=0, step=1, limit=4
    $region2: #{tpu_custom_call.1} parent=1 // loop_pre_header
      _
    $region3: #{tpu_custom_call.1} parent=1 // loop_header
      %s11 = sphi 0, %s15
      %p12 = scmp.ge.s32.totalorder %s11, 4
      %s19 = sphi 0, %s19
      %s21 = sphi 0, %s19
      %s22 = sphi 0, %s21
      %s36 = sphi 0, %s22
      %s42 = sphi 0, %s44
      %s45 = sphi 0, %s42
      %s46 = sphi 0, %s45
      %s62 = sphi 0, %s46
    $region4: #{tpu_custom_call.1} parent=1 // loop_header_branch
      %14 = sbr.rel (%p12) target = $region8
    $region5: #{tpu_custom_call.1} parent=1 // loop_body
      %s16 = ssub.s32 %s11, 1
      %s17 = ssub.s32 %s11, 2
      %s18 = sadd.s32 %s11, 1
      %s20 = sadd.s32 %s19, 1
      %p23 = scmp.eq.s32.totalorder %s11, 1
      %p24 = scmp.ne.s32.totalorder %s19, %s21
      %p25 = scmp.eq.s32.totalorder %s11, 0
      %p26 = por %p24, %p25
      %p27 = scmp.ne.s32.totalorder %s19, %s21
      %p28 = scmp.eq.s32.totalorder %s16, 1
      %p29 = por %p27, %p28
      %p30 = scmp.ne.s32.totalorder %s21, %s22
      %p31 = scmp.eq.s32.totalorder %s16, 0
      %p32 = por %p30, %p31
      %p33 = scmp.ne.s32.totalorder %s21, %s22
      %p34 = scmp.eq.s32.totalorder %s17, 1
      %p35 = por %p33, %p34
      %p37 = scmp.ne.s32.totalorder %s22, %s36
      %p38 = scmp.eq.s32.totalorder %s17, 0
      %p39 = por %p37, %p38
      %s40 = ssub.s32 %s11, %s18
      %p41 = scmp.eq.s32.totalorder %s40, 0
      %s43 = sadd.s32 %s42, 1
      %s44 = scalar_select %p41, %s42, %s43
      %p47 = pneg %p41
      %p48 = scmp.eq.s32.totalorder %s11, 1
      %p49 = por %p47, %p48
      %p50 = scmp.ne.s32.totalorder %s42, %s45
      %p51 = scmp.eq.s32.totalorder %s11, 0
      %p52 = por %p50, %p51
      %p53 = scmp.ne.s32.totalorder %s42, %s45
      %p54 = scmp.eq.s32.totalorder %s16, 1
      %p55 = por %p53, %p54
      %p56 = scmp.ne.s32.totalorder %s45, %s46
      %p57 = scmp.eq.s32.totalorder %s16, 0
      %p58 = por %p56, %p57
      %p59 = scmp.ne.s32.totalorder %s45, %s46
      %p60 = scmp.eq.s32.totalorder %s17, 1
      %p61 = por %p59, %p60
      %p63 = scmp.ne.s32.totalorder %s46, %s62
      %p64 = scmp.eq.s32.totalorder %s17, 0
      %p65 = por %p63, %p64
      %p66 = scmp.le.s32.totalorder 1, %s11
      %p67 = scmp.lt.s32.totalorder %s11, 3
      %p68 = pnand %p66, %p67
      %p69 = pneg %p68
      // Predicated region
      $region9: #{tpu_custom_call.1} parent=5 // pred_check
        _
      $region10: #{tpu_custom_call.1} parent=5 // pred_check_branch
        %71 = sbr.rel (%p68) target = $region12
      $region11: #{tpu_custom_call.1} parent=5 // pred_region
        %s72 = ssub.s32 %s11, 1
        // Predicated region
        $region13: #{tpu_custom_call.1} parent=11 // pred_check
          %p73 = pneg %p32
        $region14: #{tpu_custom_call.1} parent=11 // pred_check_branch
          %75 = sbr.rel (%p73) target = $region16
        $region15: #{tpu_custom_call.1} parent=11 // pred_region
          %77 = vsyncadd [#allocation3], 0
          %s79 = sshll.u32 %s0, 4
          %s80 = int_to_ptr.hbm [resolvable:$true] %s79
          %s81 = sshll.u32 [#allocation2], 4
          %s82 = int_to_ptr.vmem [resolvable:$true] %s81
          %84 = dma.hbm_to_vmem [thread:$0]  %s80, 128, %s82, [#allocation3]
        $region16: #{tpu_custom_call.1} parent=11 // pred_fallthru
          _
      $region12: #{tpu_custom_call.1} parent=5 // pred_fallthru
        _
      %p85 = scmp.lt.s32.totalorder %s11, 2
      // Predicated region
      $region17: #{tpu_custom_call.1} parent=5 // pred_check
        %p86 = pneg %p85
      $region18: #{tpu_custom_call.1} parent=5 // pred_check_branch
        %88 = sbr.rel (%p86) target = $region20
      $region19: #{tpu_custom_call.1} parent=5 // pred_region
        _
      $region20: #{tpu_custom_call.1} parent=5 // pred_fallthru
        _
      %p89 = scmp.le.s32.totalorder 1, %s11
      %p90 = scmp.lt.s32.totalorder %s11, 3
      %p91 = pnand %p89, %p90
      %p92 = pneg %p91
      // Predicated region
      $region21: #{tpu_custom_call.1} parent=5 // pred_check
        _
      $region22: #{tpu_custom_call.1} parent=5 // pred_check_branch
        %94 = sbr.rel (%p91) target = $region24
      $region23: #{tpu_custom_call.1} parent=5 // pred_region
        %s95 = ssub.s32 %s11, 1
        // Predicated region
        $region25: #{tpu_custom_call.1} parent=23 // pred_check
          %p96 = pneg %p32
        $region26: #{tpu_custom_call.1} parent=23 // pred_check_branch
          %98 = sbr.rel (%p96) target = $region28
        $region27: #{tpu_custom_call.1} parent=23 // pred_region
          %100 = dma.done [#allocation3], 128
        $region28: #{tpu_custom_call.1} parent=23 // pred_fallthru
          _
        %p101 = pneg %p32
        %p102 = pneg %p29
        %p103 = pneg %p58
        %p104 = pneg %p55
        %s105 = sand.u32 %s45, 1
        %s106 = scalar_lea.sflag [#allocation4], %s105
        %s107 = sand.u32 %s45, 1
        %s108 = smul.addr %s107, 8
        %s109 = scalar_lea.vmem [#allocation5], %s108
        %v110 = vld [vmem:[#allocation2] sm:$0xff]
        %v111 = vmul.f32 %v110, 2.0
        %112 = vst [vmem:[%s109] sm:$0xff] %v111
        %s113 = sand.u32 %s45, 1
        %s114 = scalar_lea.sflag [#allocation4], %s113
        %s115 = sand.u32 %s45, 1
        %s116 = smul.addr %s115, 8
        %s117 = scalar_lea.vmem [#allocation5], %s116
        // Predicated region
        $region29: #{tpu_custom_call.1} parent=23 // pred_check
          %p118 = pneg %p55
        $region30: #{tpu_custom_call.1} parent=23 // pred_check_branch
          %120 = sbr.rel (%p118) target = $region32
        $region31: #{tpu_custom_call.1} parent=23 // pred_region
          %122 = vsyncadd %s114, 0
          %s123 = smul.addr %s16, 8
          %s124 = scalar_lea.hbm %s1, %s123
          %s126 = sshll.u32 %s117, 4
          %s127 = int_to_ptr.vmem [resolvable:$true] %s126
          %s128 = sshll.u32 %s124, 4
          %s129 = int_to_ptr.hbm [resolvable:$true] %s128
          %131 = dma.vmem_to_hbm [thread:$0]  %s127, 128, %s129, %s114
        $region32: #{tpu_custom_call.1} parent=23 // pred_fallthru
          _
      $region24: #{tpu_custom_call.1} parent=5 // pred_fallthru
        _
      %p132 = scmp.le.s32.totalorder 2, %s11
      // Predicated region
      $region33: #{tpu_custom_call.1} parent=5 // pred_check
        %p133 = pneg %p132
      $region34: #{tpu_custom_call.1} parent=5 // pred_check_branch
        %135 = sbr.rel (%p133) target = $region36
      $region35: #{tpu_custom_call.1} parent=5 // pred_region
        %s136 = ssub.s32 %s11, 2
        // Predicated region
        $region37: #{tpu_custom_call.1} parent=35 // pred_check
          %p137 = pneg %p61
        $region38: #{tpu_custom_call.1} parent=35 // pred_check_branch
          %139 = sbr.rel (%p137) target = $region40
        $region39: #{tpu_custom_call.1} parent=35 // pred_region
          %s140 = sand.u32 %s46, 1
          %s141 = scalar_lea.sflag [#allocation4], %s140
          %s142 = sand.u32 %s46, 1
          %s143 = smul.addr %s142, 8
          %s144 = scalar_lea.vmem [#allocation5], %s143
          %146 = dma.done %s141, 128
        $region40: #{tpu_custom_call.1} parent=35 // pred_fallthru
          _
      $region36: #{tpu_custom_call.1} parent=5 // pred_fallthru
        _
    $region6: #{tpu_custom_call.1} parent=1 // loop_footer
      %s15 = sadd.s32 1, %s11
    $region7: #{tpu_custom_call.1} parent=1 // loop_footer_branch
      %10 = sbr.rel target = $region3
    $region8: #{tpu_custom_call.1} parent=1 // loop_exit
      _
    %147 = vsyncpa [#allocation3], 1
    %s148 = scalar_lea.sflag [#allocation3], 1
    %149 = vsyncpa %s148, 1
    %150 = vsyncpa [#allocation4], 1
    %s151 = scalar_lea.sflag [#allocation4], 1
    %152 = vsyncpa %s151, 1

// kernel: _lambda_.4
$region0: #{_lambda_.4}
  #allocation0 [shape = 'u32[]', space=smem, size = 0x4, offset = 0x4, fixed_abs, tag = 'smem constant byte address 0x4 - core index']
  #allocation1 [shape = 'u32[72,128]{1,0:T(1,128)}', space=vmem, size = 0x9000, scoped, tag = 'internal scratch']
  %s0 = inlined_call_operand.vmem [shape: f32[32,64], index: 0, kind: input, shape index: {}]
  %s1 = inlined_call_operand.vmem [shape: f32[1,64], index: 1, kind: input, shape index: {}]
  %s2 = inlined_call_operand.vmem [shape: f32[1,64], index: 2, kind: input, shape index: {}]
  %s3 = inlined_call_operand.vmem [shape: bf16[64,128], index: 3, kind: input, shape index: {}]
  %s4 = inlined_call_operand.vmem [shape: f32[1,128], index: 4, kind: input, shape index: {}]
  %s5 = inlined_call_operand.vmem [shape: bf16[32,128], index: 5, kind: output, shape index: {}]
  %s6 = sld [smem:[#allocation0]]
  $region30: #{_lambda_.4} parent=0
    _
  %s8 = ssub.s32 1, %s6
  %s9 = scalar_select 0, %s8, %s6
  // Predicated region
  $region2: #{_lambda_.4} parent=0 // pred_check
    _
  $region3: #{_lambda_.4} parent=0 // pred_check_branch
    %11 = sbr.rel (0) target = $region5
  $region4: #{_lambda_.4} parent=0 // pred_region
    _
  $region5: #{_lambda_.4} parent=0 // pred_fallthru
    _
  // Predicated region
  $region6: #{_lambda_.4} parent=0 // pred_check
    _
  $region7: #{_lambda_.4} parent=0 // pred_check_branch
    %13 = sbr.rel (0) target = $region9
  $region8: #{_lambda_.4} parent=0 // pred_region
    _
  $region9: #{_lambda_.4} parent=0 // pred_fallthru
    _
  // Predicated region
  $region10: #{_lambda_.4} parent=0 // pred_check
    _
  $region11: #{_lambda_.4} parent=0 // pred_check_branch
    %15 = sbr.rel (0) target = $region13
  $region12: #{_lambda_.4} parent=0 // pred_region
    _
  $region13: #{_lambda_.4} parent=0 // pred_fallthru
    _
  // Predicated region
  $region14: #{_lambda_.4} parent=0 // pred_check
    _
  $region15: #{_lambda_.4} parent=0 // pred_check_branch
    %17 = sbr.rel (0) target = $region17
  $region16: #{_lambda_.4} parent=0 // pred_region
    _
  $region17: #{_lambda_.4} parent=0 // pred_fallthru
    _
  // Predicated region
  $region18: #{_lambda_.4} parent=0 // pred_check
    _
  $region19: #{_lambda_.4} parent=0 // pred_check_branch
    %19 = sbr.rel (0) target = $region21
  $region20: #{_lambda_.4} parent=0 // pred_region
    _
  $region21: #{_lambda_.4} parent=0 // pred_fallthru
    _
  %v21 = vld [vmem:[%s0] sm:$0xff]
  %v22 = vld [vmem:[%s0 + $0x8] sm:$0xff]
  %v23 = vld [vmem:[%s0 + $0x10] sm:$0xff]
  %v24 = vld [vmem:[%s0 + $0x18] sm:$0xff]
  %vm25 = vcmask 523264
  %v26 = vsel %vm25, %v21, 0.0
  %27 = vadd.xlane.f32.xlu0 %v26
  %v28 = vpop.xlane.xlu0 %27
  %v29 = vsel %vm25, %v22, 0.0
  %30 = vadd.xlane.f32.xlu0 %v29
  %v31 = vpop.xlane.xlu0 %30
  %v32 = vsel %vm25, %v23, 0.0
  %33 = vadd.xlane.f32.xlu0 %v32
  %v34 = vpop.xlane.xlu0 %33
  %v35 = vsel %vm25, %v24, 0.0
  %36 = vadd.xlane.f32.xlu0 %v35
  %v37 = vpop.xlane.xlu0 %36
  %v38 = vrcp.pop 64.0
  %v39 = vmul.f32 64.0, %v38
  %v40 = vsub.f32 1.0, %v39
  %v41 = vmul.f32 %v38, %v40
  %v42 = vadd.f32 %v38, %v41
  %vm43 = vweird.f32 %v38
  %v44 = vsel %vm43, %v38, %v42
  %v45 = vmul.f32 %v28, %v44
  %v46 = vmul.f32 %v31, %v44
  %v47 = vmul.f32 %v34, %v44
  %v48 = vmul.f32 %v37, %v44
  %v49 = vsub.f32 %v21, %v45
  %v50 = vsub.f32 %v22, %v46
  %v51 = vsub.f32 %v23, %v47
  %v52 = vsub.f32 %v24, %v48
  %v53 = vmul.f32 %v49, %v49
  %v54 = vmul.f32 %v50, %v50
  %v55 = vmul.f32 %v51, %v51
  %v56 = vmul.f32 %v52, %v52
  %v57 = vsel %vm25, %v53, 0.0
  %58 = vadd.xlane.f32.xlu0 %v57
  %v59 = vpop.xlane.xlu0 %58
  %v60 = vsel %vm25, %v54, 0.0
  %61 = vadd.xlane.f32.xlu0 %v60
  %v62 = vpop.xlane.xlu0 %61
  %v63 = vsel %vm25, %v55, 0.0
  %64 = vadd.xlane.f32.xlu0 %v63
  %v65 = vpop.xlane.xlu0 %64
  %v66 = vsel %vm25, %v56, 0.0
  %67 = vadd.xlane.f32.xlu0 %v66
  %v68 = vpop.xlane.xlu0 %67
  %v69 = vmul.f32 %v59, %v44
  %v70 = vmul.f32 %v62, %v44
  %v71 = vmul.f32 %v65, %v44
  %v72 = vmul.f32 %v68, %v44
  %v73 = vadd.f32 %v69, 1e-12
  %v74 = vadd.f32 %v70, 1e-12
  %v75 = vadd.f32 %v71, 1e-12
  %v76 = vadd.f32 %v72, 1e-12
  %v77 = vrsqrt.pop %v73
  %v78 = vmul.f32 %v77, %v73
  %v79 = vmul.f32 %v78, %v77
  %v80 = vmul.f32 0.5, %v79
  %v81 = vsub.f32 1.5, %v80
  %v82 = vmul.f32 %v77, %v81
  %vm83 = vweird.f32 %v73
  %vm84 = vweird.f32 %v77
  %vm85 = vmor %vm83, %vm84
  %v86 = vsel %vm85, %v77, %v82
  %v87 = vrsqrt.pop %v74
  %v88 = vmul.f32 %v87, %v74
  %v89 = vmul.f32 %v88, %v87
  %v90 = vmul.f32 0.5, %v89
  %v91 = vsub.f32 1.5, %v90
  %v92 = vmul.f32 %v87, %v91
  %vm93 = vweird.f32 %v74
  %vm94 = vweird.f32 %v87
  %vm95 = vmor %vm93, %vm94
  %v96 = vsel %vm95, %v87, %v92
  %v97 = vrsqrt.pop %v75
  %v98 = vmul.f32 %v97, %v75
  %v99 = vmul.f32 %v98, %v97
  %v100 = vmul.f32 0.5, %v99
  %v101 = vsub.f32 1.5, %v100
  %v102 = vmul.f32 %v97, %v101
  %vm103 = vweird.f32 %v75
  %vm104 = vweird.f32 %v97
  %vm105 = vmor %vm103, %vm104
  %v106 = vsel %vm105, %v97, %v102
  %v107 = vrsqrt.pop %v76
  %v108 = vmul.f32 %v107, %v76
  %v109 = vmul.f32 %v108, %v107
  %v110 = vmul.f32 0.5, %v109
  %v111 = vsub.f32 1.5, %v110
  %v112 = vmul.f32 %v107, %v111
  %vm113 = vweird.f32 %v76
  %vm114 = vweird.f32 %v107
  %vm115 = vmor %vm113, %vm114
  %v116 = vsel %vm115, %v107, %v112
  %v117 = vmul.f32 %v49, %v86
  %v118 = vmul.f32 %v50, %v96
  %v119 = vmul.f32 %v51, %v106
  %v120 = vmul.f32 %v52, %v116
  %v121 = vld [vmem:[%s1] sm:$0x1]
  %v123 = vperm.slane %v121, 0
  %v125 = vmul.f32 %v117, %v123
  %v126 = vmul.f32 %v118, %v123
  %v127 = vmul.f32 %v119, %v123
  %v128 = vmul.f32 %v120, %v123
  %v129 = vld [vmem:[%s2] sm:$0x1]
  %v131 = vperm.slane %v129, 0
  %v133 = vadd.f32 %v125, %v131
  %v134 = vadd.f32 %v126, %v131
  %v135 = vadd.f32 %v127, %v131
  %v136 = vadd.f32 %v128, %v131
  %v137 = vpack.c.bf16 %v134, %v133
  %v138 = vpack.c.bf16 %v136, %v135
  %v139 = vld [vmem:[%s3] sm:$0xf]
  %v140 = vld [vmem:[%s3 + $0x4] sm:$0xf]
  %v141 = vld [vmem:[%s3 + $0x8] sm:$0xf]
  %v142 = vld [vmem:[%s3 + $0xc] sm:$0xf]
  %v143 = vld [vmem:[%s3 + $0x10] sm:$0xf]
  %v144 = vld [vmem:[%s3 + $0x14] sm:$0xf]
  %v145 = vld [vmem:[%s3 + $0x18] sm:$0xf]
  %v146 = vld [vmem:[%s3 + $0x1c] sm:$0xf]
  %v147 = vld [vmem:[%s4] sm:$0x1]
  %v149 = vperm.slane %v147, 0
  %v159 = vunpack.c.l.b16 %v139
  %v160 = vunpack.c.l.b16 %v140
  %v161 = vunpack.c.l.b16 %v141
  %v162 = vunpack.c.l.b16 %v142
  %v163 = vunpack.c.l.b16 %v143
  %v164 = vunpack.c.l.b16 %v144
  %v165 = vunpack.c.l.b16 %v145
  %v166 = vunpack.c.l.b16 %v146
  %v167 = vpack.c.b16 %v160, %v159
  %v168 = vpack.c.b16 %v162, %v161
  %v169 = vpack.c.b16 %v164, %v163
  %v170 = vpack.c.b16 %v166, %v165
  %v176 = vsel %vm25, %v137, 0
  %v179 = vsel %vm25, %v138, 0
  %181 = vmatpush.bf16.msra.mxu0 0
  %182 = vmatpush.bf16.msra.mxu0 0
  %183 = vmatpush.bf16.msra.mxu0 0
  %184 = vmatpush.bf16.msra.mxu0 0
  %185 = vmatpush.bf16.msra.mxu0 %v170
  %186 = vmatpush.bf16.msra.mxu0 %v169
  %187 = vmatpush.bf16.msra.mxu0 %v168
  %188 = vmatpush.bf16.msra.mxu0 %v167
  %189 = vmatmul.bf16.gmra.mxu0 %v176
  %v190 = vpop.f32.mrf.mxu0
  %v191 = vadd.f32 %v149, %v190
  %v192 = vpop.f32.mrf.mxu0
  %v193 = vadd.f32 %v149, %v192
  %194 = vmatmul.bf16.gmra.mxu0 %v179
  %v195 = vpop.f32.mrf.mxu0
  %v196 = vadd.f32 %v149, %v195
  %v197 = vpop.f32.mrf.mxu0
  %v198 = vadd.f32 %v149, %v197
  %199 = vdwg.mxu0
  %v200 = vpack.c.bf16 %v191, %v191
  %v201 = vpack.c.bf16 %v193, %v193
  %v202 = vpack.c.bf16 %v196, %v196
  %v203 = vpack.c.bf16 %v198, %v198
  %204 = vst [vmem:[%s5] sm:$0xf] %v200
  %205 = vst [vmem:[%s5 + $0x4] sm:$0xf] %v201
  %206 = vst [vmem:[%s5 + $0x8] sm:$0xf] %v202
  %207 = vst [vmem:[%s5 + $0xc] sm:$0xf] %v203
  // Predicated region
  $region22: #{_lambda_.4} parent=0 // pred_check
    _
  $region23: #{_lambda_.4} parent=0 // pred_check_branch
    %209 = sbr.rel (0) target = $region25
  $region24: #{_lambda_.4} parent=0 // pred_region
    _
  $region25: #{_lambda_.4} parent=0 // pred_fallthru
    _
  // Predicated region
  $region26: #{_lambda_.4} parent=0 // pred_check
    _
  $region27: #{_lambda_.4} parent=0 // pred_check_branch
    %211 = sbr.rel (0) target = $region29
  $region28: #{_lambda_.4} parent=0 // pred_region
    _
  $region29: #{_lambda_.4} parent=0 // pred_fallthru
    _

// kernel: _lambda_.7
$region0: #{_lambda_.7}
  #allocation0 [shape = 'u32[]', space=smem, size = 0x4, offset = 0x4, fixed_abs, tag = 'smem constant byte address 0x4 - core index']
  #allocation1 [shape = 'u32[72,128]{1,0:T(1,128)}', space=vmem, size = 0x9000, scoped, tag = 'internal scratch']
  %s0 = inlined_call_operand.vmem [shape: bf16[32,128], index: 0, kind: input, shape index: {}]
  %s1 = inlined_call_operand.vmem [shape: bf16[128,256], index: 1, kind: input, shape index: {}]
  %s2 = inlined_call_operand.vmem [shape: f32[1,256], index: 2, kind: input, shape index: {}]
  %s3 = inlined_call_operand.vmem [shape: bf16[256,128], index: 3, kind: input, shape index: {}]
  %s4 = inlined_call_operand.vmem [shape: f32[1,128], index: 4, kind: input, shape index: {}]
  %s5 = inlined_call_operand.vmem [shape: f32[32,128], index: 5, kind: output, shape index: {}]
  %s6 = sld [smem:[#allocation0]]
  $region30: #{_lambda_.7} parent=0
    _
  %s8 = ssub.s32 1, %s6
  %s9 = scalar_select 0, %s8, %s6
  // Predicated region
  $region2: #{_lambda_.7} parent=0 // pred_check
    _
  $region3: #{_lambda_.7} parent=0 // pred_check_branch
    %11 = sbr.rel (0) target = $region5
  $region4: #{_lambda_.7} parent=0 // pred_region
    _
  $region5: #{_lambda_.7} parent=0 // pred_fallthru
    _
  // Predicated region
  $region6: #{_lambda_.7} parent=0 // pred_check
    _
  $region7: #{_lambda_.7} parent=0 // pred_check_branch
    %13 = sbr.rel (0) target = $region9
  $region8: #{_lambda_.7} parent=0 // pred_region
    _
  $region9: #{_lambda_.7} parent=0 // pred_fallthru
    _
  // Predicated region
  $region10: #{_lambda_.7} parent=0 // pred_check
    _
  $region11: #{_lambda_.7} parent=0 // pred_check_branch
    %15 = sbr.rel (0) target = $region13
  $region12: #{_lambda_.7} parent=0 // pred_region
    _
  $region13: #{_lambda_.7} parent=0 // pred_fallthru
    _
  // Predicated region
  $region14: #{_lambda_.7} parent=0 // pred_check
    _
  $region15: #{_lambda_.7} parent=0 // pred_check_branch
    %17 = sbr.rel (0) target = $region17
  $region16: #{_lambda_.7} parent=0 // pred_region
    _
  $region17: #{_lambda_.7} parent=0 // pred_fallthru
    _
  // Predicated region
  $region18: #{_lambda_.7} parent=0 // pred_check
    _
  $region19: #{_lambda_.7} parent=0 // pred_check_branch
    %19 = sbr.rel (0) target = $region21
  $region20: #{_lambda_.7} parent=0 // pred_region
    _
  $region21: #{_lambda_.7} parent=0 // pred_fallthru
    _
  %v20 = vld [vmem:[%s0] sm:$0xf]
  %v21 = vld [vmem:[%s0 + $0x4] sm:$0xf]
  %v22 = vld [vmem:[%s0 + $0x8] sm:$0xf]
  %v23 = vld [vmem:[%s0 + $0xc] sm:$0xf]
  %v24 = vld [vmem:[%s1] sm:$0xff]
  %v25 = vld [vmem:[%s1 + $0x8] sm:$0xff]
  %v26 = vld [vmem:[%s1 + $0x10] sm:$0xff]
  %v27 = vld [vmem:[%s1 + $0x18] sm:$0xff]
  %v28 = vld [vmem:[%s1 + $0x20] sm:$0xff]
  %v29 = vld [vmem:[%s1 + $0x28] sm:$0xff]
  %v30 = vld [vmem:[%s1 + $0x30] sm:$0xff]
  %v31 = vld [vmem:[%s1 + $0x38] sm:$0xff]
  %v32 = vld [vmem:[%s1 + $0x40] sm:$0xff]
  %v33 = vld [vmem:[%s1 + $0x48] sm:$0xff]
  %v34 = vld [vmem:[%s1 + $0x50] sm:$0xff]
  %v35 = vld [vmem:[%s1 + $0x58] sm:$0xff]
  %v36 = vld [vmem:[%s1 + $0x60] sm:$0xff]
  %v37 = vld [vmem:[%s1 + $0x68] sm:$0xff]
  %v38 = vld [vmem:[%s1 + $0x70] sm:$0xff]
  %v39 = vld [vmem:[%s1 + $0x78] sm:$0xff]
  %v40 = vld [vmem:[%s2] sm:$0x3]
  %v42 = vperm.slane %v40, 0
  %v43 = vperm.slane %v40, 1
  %v50 = vunpack.c.l.b16 %v20
  %v51 = vunpack.c.l.b16 %v21
  %v52 = vunpack.c.l.b16 %v22
  %v53 = vunpack.c.l.b16 %v23
  %v54 = vpack.c.b16 %v51, %v50
  %v55 = vpack.c.b16 %v53, %v52
  %v74 = vunpack.c.l.b16 %v24
  %v75 = vunpack.c.h.b16 %v24
  %v76 = vunpack.c.l.b16 %v25
  %v77 = vunpack.c.h.b16 %v25
  %v78 = vunpack.c.l.b16 %v26
  %v79 = vunpack.c.h.b16 %v26
  %v80 = vunpack.c.l.b16 %v27
  %v81 = vunpack.c.h.b16 %v27
  %v82 = vunpack.c.l.b16 %v28
  %v83 = vunpack.c.h.b16 %v28
  %v84 = vunpack.c.l.b16 %v29
  %v85 = vunpack.c.h.b16 %v29
  %v86 = vunpack.c.l.b16 %v30
  %v87 = vunpack.c.h.b16 %v30
  %v88 = vunpack.c.l.b16 %v31
  %v89 = vunpack.c.h.b16 %v31
  %v90 = vunpack.c.l.b16 %v32
  %v91 = vunpack.c.h.b16 %v32
  %v92 = vunpack.c.l.b16 %v33
  %v93 = vunpack.c.h.b16 %v33
  %v94 = vunpack.c.l.b16 %v34
  %v95 = vunpack.c.h.b16 %v34
  %v96 = vunpack.c.l.b16 %v35
  %v97 = vunpack.c.h.b16 %v35
  %v98 = vunpack.c.l.b16 %v36
  %v99 = vunpack.c.h.b16 %v36
  %v100 = vunpack.c.l.b16 %v37
  %v101 = vunpack.c.h.b16 %v37
  %v102 = vunpack.c.l.b16 %v38
  %v103 = vunpack.c.h.b16 %v38
  %v104 = vunpack.c.l.b16 %v39
  %v105 = vunpack.c.h.b16 %v39
  %v106 = vpack.c.b16 %v76, %v74
  %v107 = vpack.c.b16 %v77, %v75
  %v108 = vpack.c.b16 %v80, %v78
  %v109 = vpack.c.b16 %v81, %v79
  %v110 = vpack.c.b16 %v84, %v82
  %v111 = vpack.c.b16 %v85, %v83
  %v112 = vpack.c.b16 %v88, %v86
  %v113 = vpack.c.b16 %v89, %v87
  %v114 = vpack.c.b16 %v92, %v90
  %v115 = vpack.c.b16 %v93, %v91
  %v116 = vpack.c.b16 %v96, %v94
  %v117 = vpack.c.b16 %v97, %v95
  %v118 = vpack.c.b16 %v100, %v98
  %v119 = vpack.c.b16 %v101, %v99
  %v120 = vpack.c.b16 %v104, %v102
  %v121 = vpack.c.b16 %v105, %v103
  %138 = vmatpush.bf16.msra.mxu0 %v120
  %139 = vmatpush.bf16.msra.mxu0 %v118
  %140 = vmatpush.bf16.msra.mxu0 %v116
  %141 = vmatpush.bf16.msra.mxu0 %v114
  %142 = vmatpush.bf16.msra.mxu0 %v112
  %143 = vmatpush.bf16.msra.mxu0 %v110
  %144 = vmatpush.bf16.msra.mxu0 %v108
  %145 = vmatpush.bf16.msra.mxu0 %v106
  %146 = vmatmul.bf16.gmra.mxu0 %v54
  %v147 = vpop.f32.mrf.mxu0
  %v148 = vadd.f32 %v42, %v147
  %v149 = vpop.f32.mrf.mxu0
  %v150 = vadd.f32 %v42, %v149
  %151 = vmatmul.bf16.gmra.mxu0 %v55
  %v152 = vpop.f32.mrf.mxu0
  %v153 = vadd.f32 %v42, %v152
  %v154 = vpop.f32.mrf.mxu0
  %v155 = vadd.f32 %v42, %v154
  %156 = vdwg.mxu0
  %157 = vmatpush.bf16.msra.mxu0 %v121
  %158 = vmatpush.bf16.msra.mxu0 %v119
  %159 = vmatpush.bf16.msra.mxu0 %v117
  %160 = vmatpush.bf16.msra.mxu0 %v115
  %161 = vmatpush.bf16.msra.mxu0 %v113
  %162 = vmatpush.bf16.msra.mxu0 %v111
  %163 = vmatpush.bf16.msra.mxu0 %v109
  %164 = vmatpush.bf16.msra.mxu0 %v107
  %165 = vmatmul.bf16.gmra.mxu0 %v54
  %v166 = vpop.f32.mrf.mxu0
  %v167 = vadd.f32 %v43, %v166
  %v168 = vpop.f32.mrf.mxu0
  %v169 = vadd.f32 %v43, %v168
  %170 = vmatmul.bf16.gmra.mxu0 %v55
  %v171 = vpop.f32.mrf.mxu0
  %v172 = vadd.f32 %v43, %v171
  %v173 = vpop.f32.mrf.mxu0
  %v174 = vadd.f32 %v43, %v173
  %175 = vdwg.mxu0
  %v176 = vpack.c.bf16 %v150, %v148
  %v177 = vpack.c.bf16 %v169, %v167
  %v178 = vpack.c.bf16 %v155, %v153
  %v179 = vpack.c.bf16 %v174, %v172
  %v180 = vld [vmem:[%s3] sm:$0xf]
  %v181 = vld [vmem:[%s3 + $0x4] sm:$0xf]
  %v182 = vld [vmem:[%s3 + $0x8] sm:$0xf]
  %v183 = vld [vmem:[%s3 + $0xc] sm:$0xf]
  %v184 = vld [vmem:[%s3 + $0x10] sm:$0xf]
  %v185 = vld [vmem:[%s3 + $0x14] sm:$0xf]
  %v186 = vld [vmem:[%s3 + $0x18] sm:$0xf]
  %v187 = vld [vmem:[%s3 + $0x1c] sm:$0xf]
  %v188 = vld [vmem:[%s3 + $0x20] sm:$0xf]
  %v189 = vld [vmem:[%s3 + $0x24] sm:$0xf]
  %v190 = vld [vmem:[%s3 + $0x28] sm:$0xf]
  %v191 = vld [vmem:[%s3 + $0x2c] sm:$0xf]
  %v192 = vld [vmem:[%s3 + $0x30] sm:$0xf]
  %v193 = vld [vmem:[%s3 + $0x34] sm:$0xf]
  %v194 = vld [vmem:[%s3 + $0x38] sm:$0xf]
  %v195 = vld [vmem:[%s3 + $0x3c] sm:$0xf]
  %v196 = vld [vmem:[%s3 + $0x40] sm:$0xf]
  %v197 = vld [vmem:[%s3 + $0x44] sm:$0xf]
  %v198 = vld [vmem:[%s3 + $0x48] sm:$0xf]
  %v199 = vld [vmem:[%s3 + $0x4c] sm:$0xf]
  %v200 = vld [vmem:[%s3 + $0x50] sm:$0xf]
  %v201 = vld [vmem:[%s3 + $0x54] sm:$0xf]
  %v202 = vld [vmem:[%s3 + $0x58] sm:$0xf]
  %v203 = vld [vmem:[%s3 + $0x5c] sm:$0xf]
  %v204 = vld [vmem:[%s3 + $0x60] sm:$0xf]
  %v205 = vld [vmem:[%s3 + $0x64] sm:$0xf]
  %v206 = vld [vmem:[%s3 + $0x68] sm:$0xf]
  %v207 = vld [vmem:[%s3 + $0x6c] sm:$0xf]
  %v208 = vld [vmem:[%s3 + $0x70] sm:$0xf]
  %v209 = vld [vmem:[%s3 + $0x74] sm:$0xf]
  %v210 = vld [vmem:[%s3 + $0x78] sm:$0xf]
  %v211 = vld [vmem:[%s3 + $0x7c] sm:$0xf]
  %v212 = vld [vmem:[%s4] sm:$0x1]
  %v214 = vperm.slane %v212, 0
  %v248 = vunpack.c.l.b16 %v180
  %v249 = vunpack.c.l.b16 %v181
  %v250 = vunpack.c.l.b16 %v182
  %v251 = vunpack.c.l.b16 %v183
  %v252 = vunpack.c.l.b16 %v184
  %v253 = vunpack.c.l.b16 %v185
  %v254 = vunpack.c.l.b16 %v186
  %v255 = vunpack.c.l.b16 %v187
  %v256 = vunpack.c.l.b16 %v188
  %v257 = vunpack.c.l.b16 %v189
  %v258 = vunpack.c.l.b16 %v190
  %v259 = vunpack.c.l.b16 %v191
  %v260 = vunpack.c.l.b16 %v192
  %v261 = vunpack.c.l.b16 %v193
  %v262 = vunpack.c.l.b16 %v194
  %v263 = vunpack.c.l.b16 %v195
  %v264 = vunpack.c.l.b16 %v196
  %v265 = vunpack.c.l.b16 %v197
  %v266 = vunpack.c.l.b16 %v198
  %v267 = vunpack.c.l.b16 %v199
  %v268 = vunpack.c.l.b16 %v200
  %v269 = vunpack.c.l.b16 %v201
  %v270 = vunpack.c.l.b16 %v202
  %v271 = vunpack.c.l.b16 %v203
  %v272 = vunpack.c.l.b16 %v204
  %v273 = vunpack.c.l.b16 %v205
  %v274 = vunpack.c.l.b16 %v206
  %v275 = vunpack.c.l.b16 %v207
  %v276 = vunpack.c.l.b16 %v208
  %v277 = vunpack.c.l.b16 %v209
  %v278 = vunpack.c.l.b16 %v210
  %v279 = vunpack.c.l.b16 %v211
  %v280 = vpack.c.b16 %v249, %v248
  %v281 = vpack.c.b16 %v251, %v250
  %v282 = vpack.c.b16 %v253, %v252
  %v283 = vpack.c.b16 %v255, %v254
  %v284 = vpack.c.b16 %v257, %v256
  %v285 = vpack.c.b16 %v259, %v258
  %v286 = vpack.c.b16 %v261, %v260
  %v287 = vpack.c.b16 %v263, %v262
  %v288 = vpack.c.b16 %v265, %v264
  %v289 = vpack.c.b16 %v267, %v266
  %v290 = vpack.c.b16 %v269, %v268
  %v291 = vpack.c.b16 %v271, %v270
  %v292 = vpack.c.b16 %v273, %v272
  %v293 = vpack.c.b16 %v275, %v274
  %v294 = vpack.c.b16 %v277, %v276
  %v295 = vpack.c.b16 %v279, %v278
  %312 = vmatpush.bf16.msra.mxu0 %v287
  %313 = vmatpush.bf16.msra.mxu0 %v286
  %314 = vmatpush.bf16.msra.mxu0 %v285
  %315 = vmatpush.bf16.msra.mxu0 %v284
  %316 = vmatpush.bf16.msra.mxu0 %v283
  %317 = vmatpush.bf16.msra.mxu0 %v282
  %318 = vmatpush.bf16.msra.mxu0 %v281
  %319 = vmatpush.bf16.msra.mxu0 %v280
  %320 = vmatmul.bf16.gmra.mxu0 %v176
  %v321 = vpop.f32.mrf.mxu0
  %v322 = vadd.f32 %v214, %v321
  %v323 = vpop.f32.mrf.mxu0
  %v324 = vadd.f32 %v214, %v323
  %325 = vmatmul.bf16.gmra.mxu0 %v178
  %v326 = vpop.f32.mrf.mxu0
  %v327 = vadd.f32 %v214, %v326
  %v328 = vpop.f32.mrf.mxu0
  %v329 = vadd.f32 %v214, %v328
  %330 = vdwg.mxu0
  %331 = vmatpush.bf16.msra.mxu0 %v295
  %332 = vmatpush.bf16.msra.mxu0 %v294
  %333 = vmatpush.bf16.msra.mxu0 %v293
  %334 = vmatpush.bf16.msra.mxu0 %v292
  %335 = vmatpush.bf16.msra.mxu0 %v291
  %336 = vmatpush.bf16.msra.mxu0 %v290
  %337 = vmatpush.bf16.msra.mxu0 %v289
  %338 = vmatpush.bf16.msra.mxu0 %v288
  %339 = vmatmul.bf16.gmra.mxu0 %v177
  %v340 = vpop.f32.mrf.mxu0
  %v341 = vadd.f32 %v322, %v340
  %v342 = vpop.f32.mrf.mxu0
  %v343 = vadd.f32 %v324, %v342
  %344 = vmatmul.bf16.gmra.mxu0 %v179
  %v345 = vpop.f32.mrf.mxu0
  %v346 = vadd.f32 %v327, %v345
  %v347 = vpop.f32.mrf.mxu0
  %v348 = vadd.f32 %v329, %v347
  %349 = vdwg.mxu0
  %350 = vst [vmem:[%s5] sm:$0xff] %v341
  %351 = vst [vmem:[%s5 + $0x8] sm:$0xff] %v343
  %352 = vst [vmem:[%s5 + $0x10] sm:$0xff] %v346
  %353 = vst [vmem:[%s5 + $0x18] sm:$0xff] %v348
  // Predicated region
  $region22: #{_lambda_.7} parent=0 // pred_check
    _
  $region23: #{_lambda_.7} parent=0 // pred_check_branch
    %355 = sbr.rel (0) target = $region25
  $region24: #{_lambda_.7} parent=0 // pred_region
    _
  $region25: #{_lambda_.7} parent=0 // pred_fallthru
    _
  // Predicated region
  $region26: #{_lambda_.7} parent=0 // pred_check
    _
  $region27: #{_lambda_.7} parent=0 // pred_check_branch
    %357 = sbr.rel (0) target = $region29
  $region28: #{_lambda_.7} parent=0 // pred_region
    _
  $region29: #{_lambda_.7} parent=0 // pred_fallthru
    _

// kernel: _lambda_.5
$region0: #{_lambda_.5}
  #allocation0 [shape = 'u32[]', space=smem, size = 0x4, offset = 0x4, fixed_abs, tag = 'smem constant byte address 0x4 - core index']
  #allocation1 [shape = 'u32[72,128]{1,0:T(1,128)}', space=vmem, size = 0x9000, scoped, tag = 'internal scratch']
  %s0 = inlined_call_operand.vmem [shape: bf16[2,16,128], index: 0, kind: input, shape index: {}]
  %s1 = inlined_call_operand.vmem [shape: f32[2,1,16], index: 1, kind: input, shape index: {}]
  %s2 = inlined_call_operand.vmem [shape: bf16[4,128,32], index: 2, kind: input, shape index: {}]
  %s3 = inlined_call_operand.vmem [shape: f32[4,1,32], index: 3, kind: input, shape index: {}]
  %s4 = inlined_call_operand.vmem [shape: bf16[4,128,32], index: 4, kind: input, shape index: {}]
  %s5 = inlined_call_operand.vmem [shape: f32[4,1,32], index: 5, kind: input, shape index: {}]
  %s6 = inlined_call_operand.vmem [shape: bf16[4,128,32], index: 6, kind: input, shape index: {}]
  %s7 = inlined_call_operand.vmem [shape: f32[4,1,32], index: 7, kind: input, shape index: {}]
  %s8 = inlined_call_operand.vmem [shape: bf16[4,32,128], index: 8, kind: input, shape index: {}]
  %s9 = inlined_call_operand.vmem [shape: f32[1,128], index: 9, kind: input, shape index: {}]
  %s10 = inlined_call_operand.vmem [shape: f32[1,128], index: 10, kind: input, shape index: {}]
  %s11 = inlined_call_operand.vmem [shape: f32[1,128], index: 11, kind: input, shape index: {}]
  %s12 = inlined_call_operand.vmem [shape: bf16[128,256], index: 12, kind: input, shape index: {}]
  %s13 = inlined_call_operand.vmem [shape: f32[1,256], index: 13, kind: input, shape index: {}]
  %s14 = inlined_call_operand.vmem [shape: bf16[256,128], index: 14, kind: input, shape index: {}]
  %s15 = inlined_call_operand.vmem [shape: f32[1,128], index: 15, kind: input, shape index: {}]
  %s16 = inlined_call_operand.vmem [shape: f32[1,128], index: 16, kind: input, shape index: {}]
  %s17 = inlined_call_operand.vmem [shape: f32[1,128], index: 17, kind: input, shape index: {}]
  %s18 = inlined_call_operand.vmem [shape: bf16[2,16,128], index: 18, kind: output, shape index: {}]
  %s19 = sld [smem:[#allocation0]]
  $region105: #{_lambda_.5} parent=0
    _
  %s21 = ssub.s32 1, %s19
  %s22 = scalar_select 0, %s21, %s19
  loop: start=0, step=1, limit=4
  $region2: #{_lambda_.5} parent=0 // loop_pre_header
    _
  $region3: #{_lambda_.5} parent=0 // loop_header
    %s24 = sphi 0, %s28
    %p25 = scmp.ge.s32.totalorder %s24, 4
    %s34 = sphi 0, %s36
    %s37 = sphi 0, %s34
    %s38 = sphi 0, %s37
    %s54 = sphi 0, %s38
    %s60 = sphi 0, %s62
    %s63 = sphi 0, %s60
    %s64 = sphi 0, %s63
    %s80 = sphi 0, %s64
    %s84 = sphi 0, %s84
    %s86 = sphi 0, %s84
    %s87 = sphi 0, %s86
    %s101 = sphi 0, %s87
    %s105 = sphi 0, %s105
    %s107 = sphi 0, %s105
    %s108 = sphi 0, %s107
    %s122 = sphi 0, %s108
    %s126 = sphi 0, %s126
    %s128 = sphi 0, %s126
    %s129 = sphi 0, %s128
    %s143 = sphi 0, %s129
    %s147 = sphi 0, %s147
    %s149 = sphi 0, %s147
    %s150 = sphi 0, %s149
    %s164 = sphi 0, %s150
    %s168 = sphi 0, %s168
    %s170 = sphi 0, %s168
    %s171 = sphi 0, %s170
    %s185 = sphi 0, %s171
    %s189 = sphi 0, %s189
    %s191 = sphi 0, %s189
    %s192 = sphi 0, %s191
    %s206 = sphi 0, %s192
    %s210 = sphi 0, %s210
    %s212 = sphi 0, %s210
    %s213 = sphi 0, %s212
    %s227 = sphi 0, %s213
    %s231 = sphi 0, %s231
    %s233 = sphi 0, %s231
    %s234 = sphi 0, %s233
    %s248 = sphi 0, %s234
    %s252 = sphi 0, %s252
    %s254 = sphi 0, %s252
    %s255 = sphi 0, %s254
    %s269 = sphi 0, %s255
    %s273 = sphi 0, %s273
    %s275 = sphi 0, %s273
    %s276 = sphi 0, %s275
    %s290 = sphi 0, %s276
    %s294 = sphi 0, %s294
    %s296 = sphi 0, %s294
    %s297 = sphi 0, %s296
    %s311 = sphi 0, %s297
    %s315 = sphi 0, %s315
    %s317 = sphi 0, %s315
    %s318 = sphi 0, %s317
    %s332 = sphi 0, %s318
    %s336 = sphi 0, %s336
    %s338 = sphi 0, %s336
    %s339 = sphi 0, %s338
    %s353 = sphi 0, %s339
    %s357 = sphi 0, %s357
    %s359 = sphi 0, %s357
    %s360 = sphi 0, %s359
    %s374 = sphi 0, %s360
    %s378 = sphi 0, %s378
    %s380 = sphi 0, %s378
    %s381 = sphi 0, %s380
    %s395 = sphi 0, %s381
    %s399 = sphi 0, %s399
    %s401 = sphi 0, %s399
    %s402 = sphi 0, %s401
    %s416 = sphi 0, %s402
    %s422 = sphi 0, %s424
    %s425 = sphi 0, %s422
    %s426 = sphi 0, %s425
    %s442 = sphi 0, %s426
  $region4: #{_lambda_.5} parent=0 // loop_header_branch
    %27 = sbr.rel (%p25) target = $region8
  $region5: #{_lambda_.5} parent=0 // loop_body
    %s29 = ssub.s32 %s24, 1
    %s30 = ssub.s32 %s24, 2
    %s31 = sadd.s32 %s24, 1
    %s32 = ssub.s32 %s24, %s31
    %p33 = scmp.eq.s32.totalorder %s32, 0
    %s35 = sadd.s32 %s34, 1
    %s36 = scalar_select %p33, %s34, %s35
    %p39 = pneg %p33
    %p40 = scmp.eq.s32.totalorder %s24, 1
    %p41 = por %p39, %p40
    %p42 = scmp.ne.s32.totalorder %s34, %s37
    %p43 = scmp.eq.s32.totalorder %s24, 0
    %p44 = por %p42, %p43
    %p45 = scmp.ne.s32.totalorder %s34, %s37
    %p46 = scmp.eq.s32.totalorder %s29, 1
    %p47 = por %p45, %p46
    %p48 = scmp.ne.s32.totalorder %s37, %s38
    %p49 = scmp.eq.s32.totalorder %s29, 0
    %p50 = por %p48, %p49
    %p51 = scmp.ne.s32.totalorder %s37, %s38
    %p52 = scmp.eq.s32.totalorder %s30, 1
    %p53 = por %p51, %p52
    %p55 = scmp.ne.s32.totalorder %s38, %s54
    %p56 = scmp.eq.s32.totalorder %s30, 0
    %p57 = por %p55, %p56
    %s58 = ssub.s32 %s24, %s31
    %p59 = scmp.eq.s32.totalorder %s58, 0
    %s61 = sadd.s32 %s60, 1
    %s62 = scalar_select %p59, %s60, %s61
    %p65 = pneg %p59
    %p66 = scmp.eq.s32.totalorder %s24, 1
    %p67 = por %p65, %p66
    %p68 = scmp.ne.s32.totalorder %s60, %s63
    %p69 = scmp.eq.s32.totalorder %s24, 0
    %p70 = por %p68, %p69
    %p71 = scmp.ne.s32.totalorder %s60, %s63
    %p72 = scmp.eq.s32.totalorder %s29, 1
    %p73 = por %p71, %p72
    %p74 = scmp.ne.s32.totalorder %s63, %s64
    %p75 = scmp.eq.s32.totalorder %s29, 0
    %p76 = por %p74, %p75
    %p77 = scmp.ne.s32.totalorder %s63, %s64
    %p78 = scmp.eq.s32.totalorder %s30, 1
    %p79 = por %p77, %p78
    %p81 = scmp.ne.s32.totalorder %s64, %s80
    %p82 = scmp.eq.s32.totalorder %s30, 0
    %p83 = por %p81, %p82
    %s85 = sadd.s32 %s84, 1
    %p88 = scmp.eq.s32.totalorder %s24, 1
    %p89 = scmp.ne.s32.totalorder %s84, %s86
    %p90 = scmp.eq.s32.totalorder %s24, 0
    %p91 = por %p89, %p90
    %p92 = scmp.ne.s32.totalorder %s84, %s86
    %p93 = scmp.eq.s32.totalorder %s29, 1
    %p94 = por %p92, %p93
    %p95 = scmp.ne.s32.totalorder %s86, %s87
    %p96 = scmp.eq.s32.totalorder %s29, 0
    %p97 = por %p95, %p96
    %p98 = scmp.ne.s32.totalorder %s86, %s87
    %p99 = scmp.eq.s32.totalorder %s30, 1
    %p100 = por %p98, %p99
    %p102 = scmp.ne.s32.totalorder %s87, %s101
    %p103 = scmp.eq.s32.totalorder %s30, 0
    %p104 = por %p102, %p103
    %s106 = sadd.s32 %s105, 1
    %p109 = scmp.eq.s32.totalorder %s24, 1
    %p110 = scmp.ne.s32.totalorder %s105, %s107
    %p111 = scmp.eq.s32.totalorder %s24, 0
    %p112 = por %p110, %p111
    %p113 = scmp.ne.s32.totalorder %s105, %s107
    %p114 = scmp.eq.s32.totalorder %s29, 1
    %p115 = por %p113, %p114
    %p116 = scmp.ne.s32.totalorder %s107, %s108
    %p117 = scmp.eq.s32.totalorder %s29, 0
    %p118 = por %p116, %p117
    %p119 = scmp.ne.s32.totalorder %s107, %s108
    %p120 = scmp.eq.s32.totalorder %s30, 1
    %p121 = por %p119, %p120
    %p123 = scmp.ne.s32.totalorder %s108, %s122
    %p124 = scmp.eq.s32.totalorder %s30, 0
    %p125 = por %p123, %p124
    %s127 = sadd.s32 %s126, 1
    %p130 = scmp.eq.s32.totalorder %s24, 1
    %p131 = scmp.ne.s32.totalorder %s126, %s128
    %p132 = scmp.eq.s32.totalorder %s24, 0
    %p133 = por %p131, %p132
    %p134 = scmp.ne.s32.totalorder %s126, %s128
    %p135 = scmp.eq.s32.totalorder %s29, 1
    %p136 = por %p134, %p135
    %p137 = scmp.ne.s32.totalorder %s128, %s129
    %p138 = scmp.eq.s32.totalorder %s29, 0
    %p139 = por %p137, %p138
    %p140 = scmp.ne.s32.totalorder %s128, %s129
    %p141 = scmp.eq.s32.totalorder %s30, 1
    %p142 = por %p140, %p141
    %p144 = scmp.ne.s32.totalorder %s129, %s143
    %p145 = scmp.eq.s32.totalorder %s30, 0
    %p146 = por %p144, %p145
    %s148 = sadd.s32 %s147, 1
    %p151 = scmp.eq.s32.totalorder %s24, 1
    %p152 = scmp.ne.s32.totalorder %s147, %s149
    %p153 = scmp.eq.s32.totalorder %s24, 0
    %p154 = por %p152, %p153
    %p155 = scmp.ne.s32.totalorder %s147, %s149
    %p156 = scmp.eq.s32.totalorder %s29, 1
    %p157 = por %p155, %p156
    %p158 = scmp.ne.s32.totalorder %s149, %s150
    %p159 = scmp.eq.s32.totalorder %s29, 0
    %p160 = por %p158, %p159
    %p161 = scmp.ne.s32.totalorder %s149, %s150
    %p162 = scmp.eq.s32.totalorder %s30, 1
    %p163 = por %p161, %p162
    %p165 = scmp.ne.s32.totalorder %s150, %s164
    %p166 = scmp.eq.s32.totalorder %s30, 0
    %p167 = por %p165, %p166
    %s169 = sadd.s32 %s168, 1
    %p172 = scmp.eq.s32.totalorder %s24, 1
    %p173 = scmp.ne.s32.totalorder %s168, %s170
    %p174 = scmp.eq.s32.totalorder %s24, 0
    %p175 = por %p173, %p174
    %p176 = scmp.ne.s32.totalorder %s168, %s170
    %p177 = scmp.eq.s32.totalorder %s29, 1
    %p178 = por %p176, %p177
    %p179 = scmp.ne.s32.totalorder %s170, %s171
    %p180 = scmp.eq.s32.totalorder %s29, 0
    %p181 = por %p179, %p180
    %p182 = scmp.ne.s32.totalorder %s170, %s171
    %p183 = scmp.eq.s32.totalorder %s30, 1
    %p184 = por %p182, %p183
    %p186 = scmp.ne.s32.totalorder %s171, %s185
    %p187 = scmp.eq.s32.totalorder %s30, 0
    %p188 = por %p186, %p187
    %s190 = sadd.s32 %s189, 1
    %p193 = scmp.eq.s32.totalorder %s24, 1
    %p194 = scmp.ne.s32.totalorder %s189, %s191
    %p195 = scmp.eq.s32.totalorder %s24, 0
    %p196 = por %p194, %p195
    %p197 = scmp.ne.s32.totalorder %s189, %s191
    %p198 = scmp.eq.s32.totalorder %s29, 1
    %p199 = por %p197, %p198
    %p200 = scmp.ne.s32.totalorder %s191, %s192
    %p201 = scmp.eq.s32.totalorder %s29, 0
    %p202 = por %p200, %p201
    %p203 = scmp.ne.s32.totalorder %s191, %s192
    %p204 = scmp.eq.s32.totalorder %s30, 1
    %p205 = por %p203, %p204
    %p207 = scmp.ne.s32.totalorder %s192, %s206
    %p208 = scmp.eq.s32.totalorder %s30, 0
    %p209 = por %p207, %p208
    %s211 = sadd.s32 %s210, 1
    %p214 = scmp.eq.s32.totalorder %s24, 1
    %p215 = scmp.ne.s32.totalorder %s210, %s212
    %p216 = scmp.eq.s32.totalorder %s24, 0
    %p217 = por %p215, %p216
    %p218 = scmp.ne.s32.totalorder %s210, %s212
    %p219 = scmp.eq.s32.totalorder %s29, 1
    %p220 = por %p218, %p219
    %p221 = scmp.ne.s32.totalorder %s212, %s213
    %p222 = scmp.eq.s32.totalorder %s29, 0
    %p223 = por %p221, %p222
    %p224 = scmp.ne.s32.totalorder %s212, %s213
    %p225 = scmp.eq.s32.totalorder %s30, 1
    %p226 = por %p224, %p225
    %p228 = scmp.ne.s32.totalorder %s213, %s227
    %p229 = scmp.eq.s32.totalorder %s30, 0
    %p230 = por %p228, %p229
    %s232 = sadd.s32 %s231, 1
    %p235 = scmp.eq.s32.totalorder %s24, 1
    %p236 = scmp.ne.s32.totalorder %s231, %s233
    %p237 = scmp.eq.s32.totalorder %s24, 0
    %p238 = por %p236, %p237
    %p239 = scmp.ne.s32.totalorder %s231, %s233
    %p240 = scmp.eq.s32.totalorder %s29, 1
    %p241 = por %p239, %p240
    %p242 = scmp.ne.s32.totalorder %s233, %s234
    %p243 = scmp.eq.s32.totalorder %s29, 0
    %p244 = por %p242, %p243
    %p245 = scmp.ne.s32.totalorder %s233, %s234
    %p246 = scmp.eq.s32.totalorder %s30, 1
    %p247 = por %p245, %p246
    %p249 = scmp.ne.s32.totalorder %s234, %s248
    %p250 = scmp.eq.s32.totalorder %s30, 0
    %p251 = por %p249, %p250
    %s253 = sadd.s32 %s252, 1
    %p256 = scmp.eq.s32.totalorder %s24, 1
    %p257 = scmp.ne.s32.totalorder %s252, %s254
    %p258 = scmp.eq.s32.totalorder %s24, 0
    %p259 = por %p257, %p258
    %p260 = scmp.ne.s32.totalorder %s252, %s254
    %p261 = scmp.eq.s32.totalorder %s29, 1
    %p262 = por %p260, %p261
    %p263 = scmp.ne.s32.totalorder %s254, %s255
    %p264 = scmp.eq.s32.totalorder %s29, 0
    %p265 = por %p263, %p264
    %p266 = scmp.ne.s32.totalorder %s254, %s255
    %p267 = scmp.eq.s32.totalorder %s30, 1
    %p268 = por %p266, %p267
    %p270 = scmp.ne.s32.totalorder %s255, %s269
    %p271 = scmp.eq.s32.totalorder %s30, 0
    %p272 = por %p270, %p271
    %s274 = sadd.s32 %s273, 1
    %p277 = scmp.eq.s32.totalorder %s24, 1
    %p278 = scmp.ne.s32.totalorder %s273, %s275
    %p279 = scmp.eq.s32.totalorder %s24, 0
    %p280 = por %p278, %p279
    %p281 = scmp.ne.s32.totalorder %s273, %s275
    %p282 = scmp.eq.s32.totalorder %s29, 1
    %p283 = por %p281, %p282
    %p284 = scmp.ne.s32.totalorder %s275, %s276
    %p285 = scmp.eq.s32.totalorder %s29, 0
    %p286 = por %p284, %p285
    %p287 = scmp.ne.s32.totalorder %s275, %s276
    %p288 = scmp.eq.s32.totalorder %s30, 1
    %p289 = por %p287, %p288
    %p291 = scmp.ne.s32.totalorder %s276, %s290
    %p292 = scmp.eq.s32.totalorder %s30, 0
    %p293 = por %p291, %p292
    %s295 = sadd.s32 %s294, 1
    %p298 = scmp.eq.s32.totalorder %s24, 1
    %p299 = scmp.ne.s32.totalorder %s294, %s296
    %p300 = scmp.eq.s32.totalorder %s24, 0
    %p301 = por %p299, %p300
    %p302 = scmp.ne.s32.totalorder %s294, %s296
    %p303 = scmp.eq.s32.totalorder %s29, 1
    %p304 = por %p302, %p303
    %p305 = scmp.ne.s32.totalorder %s296, %s297
    %p306 = scmp.eq.s32.totalorder %s29, 0
    %p307 = por %p305, %p306
    %p308 = scmp.ne.s32.totalorder %s296, %s297
    %p309 = scmp.eq.s32.totalorder %s30, 1
    %p310 = por %p308, %p309
    %p312 = scmp.ne.s32.totalorder %s297, %s311
    %p313 = scmp.eq.s32.totalorder %s30, 0
    %p314 = por %p312, %p313
    %s316 = sadd.s32 %s315, 1
    %p319 = scmp.eq.s32.totalorder %s24, 1
    %p320 = scmp.ne.s32.totalorder %s315, %s317
    %p321 = scmp.eq.s32.totalorder %s24, 0
    %p322 = por %p320, %p321
    %p323 = scmp.ne.s32.totalorder %s315, %s317
    %p324 = scmp.eq.s32.totalorder %s29, 1
    %p325 = por %p323, %p324
    %p326 = scmp.ne.s32.totalorder %s317, %s318
    %p327 = scmp.eq.s32.totalorder %s29, 0
    %p328 = por %p326, %p327
    %p329 = scmp.ne.s32.totalorder %s317, %s318
    %p330 = scmp.eq.s32.totalorder %s30, 1
    %p331 = por %p329, %p330
    %p333 = scmp.ne.s32.totalorder %s318, %s332
    %p334 = scmp.eq.s32.totalorder %s30, 0
    %p335 = por %p333, %p334
    %s337 = sadd.s32 %s336, 1
    %p340 = scmp.eq.s32.totalorder %s24, 1
    %p341 = scmp.ne.s32.totalorder %s336, %s338
    %p342 = scmp.eq.s32.totalorder %s24, 0
    %p343 = por %p341, %p342
    %p344 = scmp.ne.s32.totalorder %s336, %s338
    %p345 = scmp.eq.s32.totalorder %s29, 1
    %p346 = por %p344, %p345
    %p347 = scmp.ne.s32.totalorder %s338, %s339
    %p348 = scmp.eq.s32.totalorder %s29, 0
    %p349 = por %p347, %p348
    %p350 = scmp.ne.s32.totalorder %s338, %s339
    %p351 = scmp.eq.s32.totalorder %s30, 1
    %p352 = por %p350, %p351
    %p354 = scmp.ne.s32.totalorder %s339, %s353
    %p355 = scmp.eq.s32.totalorder %s30, 0
    %p356 = por %p354, %p355
    %s358 = sadd.s32 %s357, 1
    %p361 = scmp.eq.s32.totalorder %s24, 1
    %p362 = scmp.ne.s32.totalorder %s357, %s359
    %p363 = scmp.eq.s32.totalorder %s24, 0
    %p364 = por %p362, %p363
    %p365 = scmp.ne.s32.totalorder %s357, %s359
    %p366 = scmp.eq.s32.totalorder %s29, 1
    %p367 = por %p365, %p366
    %p368 = scmp.ne.s32.totalorder %s359, %s360
    %p369 = scmp.eq.s32.totalorder %s29, 0
    %p370 = por %p368, %p369
    %p371 = scmp.ne.s32.totalorder %s359, %s360
    %p372 = scmp.eq.s32.totalorder %s30, 1
    %p373 = por %p371, %p372
    %p375 = scmp.ne.s32.totalorder %s360, %s374
    %p376 = scmp.eq.s32.totalorder %s30, 0
    %p377 = por %p375, %p376
    %s379 = sadd.s32 %s378, 1
    %p382 = scmp.eq.s32.totalorder %s24, 1
    %p383 = scmp.ne.s32.totalorder %s378, %s380
    %p384 = scmp.eq.s32.totalorder %s24, 0
    %p385 = por %p383, %p384
    %p386 = scmp.ne.s32.totalorder %s378, %s380
    %p387 = scmp.eq.s32.totalorder %s29, 1
    %p388 = por %p386, %p387
    %p389 = scmp.ne.s32.totalorder %s380, %s381
    %p390 = scmp.eq.s32.totalorder %s29, 0
    %p391 = por %p389, %p390
    %p392 = scmp.ne.s32.totalorder %s380, %s381
    %p393 = scmp.eq.s32.totalorder %s30, 1
    %p394 = por %p392, %p393
    %p396 = scmp.ne.s32.totalorder %s381, %s395
    %p397 = scmp.eq.s32.totalorder %s30, 0
    %p398 = por %p396, %p397
    %s400 = sadd.s32 %s399, 1
    %p403 = scmp.eq.s32.totalorder %s24, 1
    %p404 = scmp.ne.s32.totalorder %s399, %s401
    %p405 = scmp.eq.s32.totalorder %s24, 0
    %p406 = por %p404, %p405
    %p407 = scmp.ne.s32.totalorder %s399, %s401
    %p408 = scmp.eq.s32.totalorder %s29, 1
    %p409 = por %p407, %p408
    %p410 = scmp.ne.s32.totalorder %s401, %s402
    %p411 = scmp.eq.s32.totalorder %s29, 0
    %p412 = por %p410, %p411
    %p413 = scmp.ne.s32.totalorder %s401, %s402
    %p414 = scmp.eq.s32.totalorder %s30, 1
    %p415 = por %p413, %p414
    %p417 = scmp.ne.s32.totalorder %s402, %s416
    %p418 = scmp.eq.s32.totalorder %s30, 0
    %p419 = por %p417, %p418
    %s420 = ssub.s32 %s24, %s31
    %p421 = scmp.eq.s32.totalorder %s420, 0
    %s423 = sadd.s32 %s422, 1
    %s424 = scalar_select %p421, %s422, %s423
    %p427 = pneg %p421
    %p428 = scmp.eq.s32.totalorder %s24, 1
    %p429 = por %p427, %p428
    %p430 = scmp.ne.s32.totalorder %s422, %s425
    %p431 = scmp.eq.s32.totalorder %s24, 0
    %p432 = por %p430, %p431
    %p433 = scmp.ne.s32.totalorder %s422, %s425
    %p434 = scmp.eq.s32.totalorder %s29, 1
    %p435 = por %p433, %p434
    %p436 = scmp.ne.s32.totalorder %s425, %s426
    %p437 = scmp.eq.s32.totalorder %s29, 0
    %p438 = por %p436, %p437
    %p439 = scmp.ne.s32.totalorder %s425, %s426
    %p440 = scmp.eq.s32.totalorder %s30, 1
    %p441 = por %p439, %p440
    %p443 = scmp.ne.s32.totalorder %s426, %s442
    %p444 = scmp.eq.s32.totalorder %s30, 0
    %p445 = por %p443, %p444
    %p446 = scmp.le.s32.totalorder 1, %s24
    %p447 = scmp.lt.s32.totalorder %s24, 3
    %p448 = pnand %p446, %p447
    %p449 = pneg %p448
    // Predicated region
    $region9: #{_lambda_.5} parent=5 // pred_check
      _
    $region10: #{_lambda_.5} parent=5 // pred_check_branch
      %451 = sbr.rel (%p448) target = $region12
    $region11: #{_lambda_.5} parent=5 // pred_region
      %s452 = ssub.s32 %s24, 1
      // Predicated region
      $region13: #{_lambda_.5} parent=11 // pred_check
        %p453 = pneg %p97
      $region14: #{_lambda_.5} parent=11 // pred_check_branch
        %455 = sbr.rel (%p453) target = $region16
      $region15: #{_lambda_.5} parent=11 // pred_region
        _
      $region16: #{_lambda_.5} parent=11 // pred_fallthru
        _
      // Predicated region
      $region17: #{_lambda_.5} parent=11 // pred_check
        %p456 = pneg %p118
      $region18: #{_lambda_.5} parent=11 // pred_check_branch
        %458 = sbr.rel (%p456) target = $region20
      $region19: #{_lambda_.5} parent=11 // pred_region
        _
      $region20: #{_lambda_.5} parent=11 // pred_fallthru
        _
      // Predicated region
      $region21: #{_lambda_.5} parent=11 // pred_check
        %p459 = pneg %p139
      $region22: #{_lambda_.5} parent=11 // pred_check_branch
        %461 = sbr.rel (%p459) target = $region24
      $region23: #{_lambda_.5} parent=11 // pred_region
        _
      $region24: #{_lambda_.5} parent=11 // pred_fallthru
        _
      // Predicated region
      $region25: #{_lambda_.5} parent=11 // pred_check
        %p462 = pneg %p160
      $region26: #{_lambda_.5} parent=11 // pred_check_branch
        %464 = sbr.rel (%p462) target = $region28
      $region27: #{_lambda_.5} parent=11 // pred_region
        _
      $region28: #{_lambda_.5} parent=11 // pred_fallthru
        _
      // Predicated region
      $region29: #{_lambda_.5} parent=11 // pred_check
        %p465 = pneg %p181
      $region30: #{_lambda_.5} parent=11 // pred_check_branch
        %467 = sbr.rel (%p465) target = $region32
      $region31: #{_lambda_.5} parent=11 // pred_region
        _
      $region32: #{_lambda_.5} parent=11 // pred_fallthru
        _
      // Predicated region
      $region33: #{_lambda_.5} parent=11 // pred_check
        %p468 = pneg %p202
      $region34: #{_lambda_.5} parent=11 // pred_check_branch
        %470 = sbr.rel (%p468) target = $region36
      $region35: #{_lambda_.5} parent=11 // pred_region
        _
      $region36: #{_lambda_.5} parent=11 // pred_fallthru
        _
      // Predicated region
      $region37: #{_lambda_.5} parent=11 // pred_check
        %p471 = pneg %p223
      $region38: #{_lambda_.5} parent=11 // pred_check_branch
        %473 = sbr.rel (%p471) target = $region40
      $region39: #{_lambda_.5} parent=11 // pred_region
        _
      $region40: #{_lambda_.5} parent=11 // pred_fallthru
        _
      // Predicated region
      $region41: #{_lambda_.5} parent=11 // pred_check
        %p474 = pneg %p244
      $region42: #{_lambda_.5} parent=11 // pred_check_branch
        %476 = sbr.rel (%p474) target = $region44
      $region43: #{_lambda_.5} parent=11 // pred_region
        _
      $region44: #{_lambda_.5} parent=11 // pred_fallthru
        _
      // Predicated region
      $region45: #{_lambda_.5} parent=11 // pred_check
        %p477 = pneg %p265
      $region46: #{_lambda_.5} parent=11 // pred_check_branch
        %479 = sbr.rel (%p477) target = $region48
      $region47: #{_lambda_.5} parent=11 // pred_region
        _
      $region48: #{_lambda_.5} parent=11 // pred_fallthru
        _
      // Predicated region
      $region49: #{_lambda_.5} parent=11 // pred_check
        %p480 = pneg %p286
      $region50: #{_lambda_.5} parent=11 // pred_check_branch
        %482 = sbr.rel (%p480) target = $region52
      $region51: #{_lambda_.5} parent=11 // pred_region
        _
      $region52: #{_lambda_.5} parent=11 // pred_fallthru
        _
      // Predicated region
      $region53: #{_lambda_.5} parent=11 // pred_check
        %p483 = pneg %p307
      $region54: #{_lambda_.5} parent=11 // pred_check_branch
        %485 = sbr.rel (%p483) target = $region56
      $region55: #{_lambda_.5} parent=11 // pred_region
        _
      $region56: #{_lambda_.5} parent=11 // pred_fallthru
        _
      // Predicated region
      $region57: #{_lambda_.5} parent=11 // pred_check
        %p486 = pneg %p328
      $region58: #{_lambda_.5} parent=11 // pred_check_branch
        %488 = sbr.rel (%p486) target = $region60
      $region59: #{_lambda_.5} parent=11 // pred_region
        _
      $region60: #{_lambda_.5} parent=11 // pred_fallthru
        _
      // Predicated region
      $region61: #{_lambda_.5} parent=11 // pred_check
        %p489 = pneg %p349
      $region62: #{_lambda_.5} parent=11 // pred_check_branch
        %491 = sbr.rel (%p489) target = $region64
      $region63: #{_lambda_.5} parent=11 // pred_region
        _
      $region64: #{_lambda_.5} parent=11 // pred_fallthru
        _
      // Predicated region
      $region65: #{_lambda_.5} parent=11 // pred_check
        %p492 = pneg %p370
      $region66: #{_lambda_.5} parent=11 // pred_check_branch
        %494 = sbr.rel (%p492) target = $region68
      $region67: #{_lambda_.5} parent=11 // pred_region
        _
      $region68: #{_lambda_.5} parent=11 // pred_fallthru
        _
      // Predicated region
      $region69: #{_lambda_.5} parent=11 // pred_check
        %p495 = pneg %p391
      $region70: #{_lambda_.5} parent=11 // pred_check_branch
        %497 = sbr.rel (%p495) target = $region72
      $region71: #{_lambda_.5} parent=11 // pred_region
        _
      $region72: #{_lambda_.5} parent=11 // pred_fallthru
        _
      // Predicated region
      $region73: #{_lambda_.5} parent=11 // pred_check
        %p498 = pneg %p412
      $region74: #{_lambda_.5} parent=11 // pred_check_branch
        %500 = sbr.rel (%p498) target = $region76
      $region75: #{_lambda_.5} parent=11 // pred_region
        _
      $region76: #{_lambda_.5} parent=11 // pred_fallthru
        _
    $region12: #{_lambda_.5} parent=5 // pred_fallthru
      _
    %p501 = scmp.lt.s32.totalorder %s24, 2
    // Predicated region
    $region77: #{_lambda_.5} parent=5 // pred_check
      %p502 = pneg %p501
    $region78: #{_lambda_.5} parent=5 // pred_check_branch
      %504 = sbr.rel (%p502) target = $region80
    $region79: #{_lambda_.5} parent=5 // pred_region
      // Predicated region
      $region81: #{_lambda_.5} parent=79 // pred_check
        %p505 = pneg %p44
      $region82: #{_lambda_.5} parent=79 // pred_check_branch
        %507 = sbr.rel (%p505) target = $region84
      $region83: #{_lambda_.5} parent=79 // pred_region
        %p508 = scmp.lt.s32.totalorder %s24, 1
        %s509 = scalar_select %p508, %s24, 1
        %s510 = smul.addr %s509, 2
        %s511 = smul.addr %s510, 4
        %s512 = scalar_lea.vmem %s0, %s511
      $region84: #{_lambda_.5} parent=79 // pred_fallthru
        _
      // Predicated region
      $region85: #{_lambda_.5} parent=79 // pred_check
        %p513 = pneg %p70
      $region86: #{_lambda_.5} parent=79 // pred_check_branch
        %515 = sbr.rel (%p513) target = $region88
      $region87: #{_lambda_.5} parent=79 // pred_region
        %p516 = scmp.lt.s32.totalorder %s24, 1
        %s517 = scalar_select %p516, %s24, 1
        %s518 = scalar_lea.vmem %s1, %s517
      $region88: #{_lambda_.5} parent=79 // pred_fallthru
        _
    $region80: #{_lambda_.5} parent=5 // pred_fallthru
      _
    %p519 = scmp.le.s32.totalorder 1, %s24
    %p520 = scmp.lt.s32.totalorder %s24, 3
    %p521 = pnand %p519, %p520
    %p522 = pneg %p521
    // Predicated region
    $region89: #{_lambda_.5} parent=5 // pred_check
      _
    $region90: #{_lambda_.5} parent=5 // pred_check_branch
      %524 = sbr.rel (%p521) target = $region92
    $region91: #{_lambda_.5} parent=5 // pred_region
      %s525 = ssub.s32 %s24, 1
      %p526 = scmp.lt.s32.totalorder %s29, 1
      %s527 = scalar_select %p526, %s29, 1
      %s528 = smul.addr %s527, 2
      %s529 = smul.addr %s528, 4
      %s530 = scalar_lea.vmem %s0, %s529
      %p531 = pneg %p50
      %p532 = pneg %p47
      %p533 = scmp.lt.s32.totalorder %s29, 1
      %s534 = scalar_select %p533, %s29, 1
      %s535 = scalar_lea.vmem %s1, %s534
      %p536 = pneg %p76
      %p537 = pneg %p73
      %p538 = pneg %p97
      %p539 = pneg %p94
      %p540 = pneg %p118
      %p541 = pneg %p115
      %p542 = pneg %p139
      %p543 = pneg %p136
      %p544 = pneg %p160
      %p545 = pneg %p157
      %p546 = pneg %p181
      %p547 = pneg %p178
      %p548 = pneg %p202
      %p549 = pneg %p199
      %p550 = pneg %p223
      %p551 = pneg %p220
      %p552 = pneg %p244
      %p553 = pneg %p241
      %p554 = pneg %p265
      %p555 = pneg %p262
      %p556 = pneg %p286
      %p557 = pneg %p283
      %p558 = pneg %p307
      %p559 = pneg %p304
      %p560 = pneg %p328
      %p561 = pneg %p325
      %p562 = pneg %p349
      %p563 = pneg %p346
      %p564 = pneg %p370
      %p565 = pneg %p367
      %p566 = pneg %p391
      %p567 = pneg %p388
      %p568 = pneg %p412
      %p569 = pneg %p409
      %p570 = pneg %p438
      %p571 = pneg %p435
      %p572 = scmp.lt.s32.totalorder %s29, 1
      %s573 = scalar_select %p572, %s29, 1
      %s574 = smul.addr %s573, 2
      %s575 = smul.addr %s574, 4
      %s576 = scalar_lea.vmem %s18, %s575
      %p577 = scmp.lt.s32.totalorder %s29, 1
      %s578 = scalar_select %p577, %s29, 1
      %s579 = smul.addr %s578, 2
      %s580 = smul.addr %s579, 4
      %s581 = scalar_lea.vmem %s0, %s580
      %p582 = scmp.lt.s32.totalorder %s29, 1
      %s583 = scalar_select %p582, %s29, 1
      %s584 = scalar_lea.vmem %s1, %s583
      %p585 = scmp.lt.s32.totalorder %s29, 1
      %s586 = scalar_select %p585, %s29, 1
      %s587 = smul.addr %s586, 2
      %s588 = smul.addr %s587, 4
      %s589 = scalar_lea.vmem %s18, %s588
      %v591 = vld [vmem:[%s581] sm:$0xf]
      %v592 = vld [vmem:[%s581 + $0x4] sm:$0xf]
      %v593 = vld [vmem:[%s584] sm:$0x1]
      %v594 = vld [vmem:[%s2] sm:$0xf]
      %v595 = vld [vmem:[%s2 + $0x4] sm:$0xf]
      %v596 = vld [vmem:[%s2 + $0x8] sm:$0xf]
      %v597 = vld [vmem:[%s2 + $0xc] sm:$0xf]
      %v598 = vld [vmem:[%s2 + $0x10] sm:$0xf]
      %v599 = vld [vmem:[%s2 + $0x14] sm:$0xf]
      %v600 = vld [vmem:[%s2 + $0x18] sm:$0xf]
      %v601 = vld [vmem:[%s2 + $0x1c] sm:$0xf]
      %v602 = vld [vmem:[%s2 + $0x20] sm:$0xf]
      %v603 = vld [vmem:[%s2 + $0x24] sm:$0xf]
      %v604 = vld [vmem:[%s2 + $0x28] sm:$0xf]
      %v605 = vld [vmem:[%s2 + $0x2c] sm:$0xf]
      %v606 = vld [vmem:[%s2 + $0x30] sm:$0xf]
      %v607 = vld [vmem:[%s2 + $0x34] sm:$0xf]
      %v608 = vld [vmem:[%s2 + $0x38] sm:$0xf]
      %v609 = vld [vmem:[%s2 + $0x3c] sm:$0xf]
      %v610 = vld [vmem:[%s3] sm:$0x1]
      %v612 = vperm.slane %v610, 0
      %v616 = vunpack.c.l.b16 %v591
      %v617 = vunpack.c.l.b16 %v592
      %v618 = vpack.c.b16 %v617, %v616
      %v636 = vunpack.c.l.b16 %v594
      %v637 = vunpack.c.l.b16 %v595
      %v638 = vunpack.c.l.b16 %v596
      %v639 = vunpack.c.l.b16 %v597
      %v640 = vunpack.c.l.b16 %v598
      %v641 = vunpack.c.l.b16 %v599
      %v642 = vunpack.c.l.b16 %v600
      %v643 = vunpack.c.l.b16 %v601
      %v644 = vunpack.c.l.b16 %v602
      %v645 = vunpack.c.l.b16 %v603
      %v646 = vunpack.c.l.b16 %v604
      %v647 = vunpack.c.l.b16 %v605
      %v648 = vunpack.c.l.b16 %v606
      %v649 = vunpack.c.l.b16 %v607
      %v650 = vunpack.c.l.b16 %v608
      %v651 = vunpack.c.l.b16 %v609
      %v652 = vpack.c.b16 %v637, %v636
      %v653 = vpack.c.b16 %v639, %v638
      %v654 = vpack.c.b16 %v641, %v640
      %v655 = vpack.c.b16 %v643, %v642
      %v656 = vpack.c.b16 %v645, %v644
      %v657 = vpack.c.b16 %v647, %v646
      %v658 = vpack.c.b16 %v649, %v648
      %v659 = vpack.c.b16 %v651, %v650
      %668 = vmatpush.bf16.msra.mxu0 %v659
      %669 = vmatpush.bf16.msra.mxu0 %v658
      %670 = vmatpush.bf16.msra.mxu0 %v657
      %671 = vmatpush.bf16.msra.mxu0 %v656
      %672 = vmatpush.bf16.msra.mxu0 %v655
      %673 = vmatpush.bf16.msra.mxu0 %v654
      %674 = vmatpush.bf16.msra.mxu0 %v653
      %675 = vmatpush.bf16.msra.mxu0 %v652
      %676 = vmatmul.bf16.gmra.mxu0 %v618
      %v677 = vpop.f32.mrf.mxu0
      %v678 = vadd.f32 %v612, %v677
      %v679 = vpop.f32.mrf.mxu0
      %v680 = vadd.f32 %v612, %v679
      %681 = vdwg.mxu0
      %v682 = vpack.c.bf16 %v680, %v678
      %v683 = vld [vmem:[%s4] sm:$0xf]
      %v684 = vld [vmem:[%s4 + $0x4] sm:$0xf]
      %v685 = vld [vmem:[%s4 + $0x8] sm:$0xf]
      %v686 = vld [vmem:[%s4 + $0xc] sm:$0xf]
      %v687 = vld [vmem:[%s4 + $0x10] sm:$0xf]
      %v688 = vld [vmem:[%s4 + $0x14] sm:$0xf]
      %v689 = vld [vmem:[%s4 + $0x18] sm:$0xf]
      %v690 = vld [vmem:[%s4 + $0x1c] sm:$0xf]
      %v691 = vld [vmem:[%s4 + $0x20] sm:$0xf]
      %v692 = vld [vmem:[%s4 + $0x24] sm:$0xf]
      %v693 = vld [vmem:[%s4 + $0x28] sm:$0xf]
      %v694 = vld [vmem:[%s4 + $0x2c] sm:$0xf]
      %v695 = vld [vmem:[%s4 + $0x30] sm:$0xf]
      %v696 = vld [vmem:[%s4 + $0x34] sm:$0xf]
      %v697 = vld [vmem:[%s4 + $0x38] sm:$0xf]
      %v698 = vld [vmem:[%s4 + $0x3c] sm:$0xf]
      %v699 = vld [vmem:[%s5] sm:$0x1]
      %v701 = vperm.slane %v699, 0
      %v719 = vunpack.c.l.b16 %v683
      %v720 = vunpack.c.l.b16 %v684
      %v721 = vunpack.c.l.b16 %v685
      %v722 = vunpack.c.l.b16 %v686
      %v723 = vunpack.c.l.b16 %v687
      %v724 = vunpack.c.l.b16 %v688
      %v725 = vunpack.c.l.b16 %v689
      %v726 = vunpack.c.l.b16 %v690
      %v727 = vunpack.c.l.b16 %v691
      %v728 = vunpack.c.l.b16 %v692
      %v729 = vunpack.c.l.b16 %v693
      %v730 = vunpack.c.l.b16 %v694
      %v731 = vunpack.c.l.b16 %v695
      %v732 = vunpack.c.l.b16 %v696
      %v733 = vunpack.c.l.b16 %v697
      %v734 = vunpack.c.l.b16 %v698
      %v735 = vpack.c.b16 %v720, %v719
      %v736 = vpack.c.b16 %v722, %v721
      %v737 = vpack.c.b16 %v724, %v723
      %v738 = vpack.c.b16 %v726, %v725
      %v739 = vpack.c.b16 %v728, %v727
      %v740 = vpack.c.b16 %v730, %v729
      %v741 = vpack.c.b16 %v732, %v731
      %v742 = vpack.c.b16 %v734, %v733
      %751 = vmatpush.bf16.msra.mxu0 %v742
      %752 = vmatpush.bf16.msra.mxu0 %v741
      %753 = vmatpush.bf16.msra.mxu0 %v740
      %754 = vmatpush.bf16.msra.mxu0 %v739
      %755 = vmatpush.bf16.msra.mxu0 %v738
      %756 = vmatpush.bf16.msra.mxu0 %v737
      %757 = vmatpush.bf16.msra.mxu0 %v736
      %758 = vmatpush.bf16.msra.mxu0 %v735
      %759 = vmatmul.bf16.gmra.mxu0 %v618
      %v760 = vpop.f32.mrf.mxu0
      %v761 = vadd.f32 %v701, %v760
      %v762 = vpop.f32.mrf.mxu0
      %v763 = vadd.f32 %v701, %v762
      %764 = vdwg.mxu0
      %v765 = vpack.c.bf16 %v763, %v761
      %v766 = vld [vmem:[%s6] sm:$0xf]
      %v767 = vld [vmem:[%s6 + $0x4] sm:$0xf]
      %v768 = vld [vmem:[%s6 + $0x8] sm:$0xf]
      %v769 = vld [vmem:[%s6 + $0xc] sm:$0xf]
      %v770 = vld [vmem:[%s6 + $0x10] sm:$0xf]
      %v771 = vld [vmem:[%s6 + $0x14] sm:$0xf]
      %v772 = vld [vmem:[%s6 + $0x18] sm:$0xf]
      %v773 = vld [vmem:[%s6 + $0x1c] sm:$0xf]
      %v774 = vld [vmem:[%s6 + $0x20] sm:$0xf]
      %v775 = vld [vmem:[%s6 + $0x24] sm:$0xf]
      %v776 = vld [vmem:[%s6 + $0x28] sm:$0xf]
      %v777 = vld [vmem:[%s6 + $0x2c] sm:$0xf]
      %v778 = vld [vmem:[%s6 + $0x30] sm:$0xf]
      %v779 = vld [vmem:[%s6 + $0x34] sm:$0xf]
      %v780 = vld [vmem:[%s6 + $0x38] sm:$0xf]
      %v781 = vld [vmem:[%s6 + $0x3c] sm:$0xf]
      %v782 = vld [vmem:[%s7] sm:$0x1]
      %v784 = vperm.slane %v782, 0
      %v802 = vunpack.c.l.b16 %v766
      %v803 = vunpack.c.l.b16 %v767
      %v804 = vunpack.c.l.b16 %v768
      %v805 = vunpack.c.l.b16 %v769
      %v806 = vunpack.c.l.b16 %v770
      %v807 = vunpack.c.l.b16 %v771
      %v808 = vunpack.c.l.b16 %v772
      %v809 = vunpack.c.l.b16 %v773
      %v810 = vunpack.c.l.b16 %v774
      %v811 = vunpack.c.l.b16 %v775
      %v812 = vunpack.c.l.b16 %v776
      %v813 = vunpack.c.l.b16 %v777
      %v814 = vunpack.c.l.b16 %v778
      %v815 = vunpack.c.l.b16 %v779
      %v816 = vunpack.c.l.b16 %v780
      %v817 = vunpack.c.l.b16 %v781
      %v818 = vpack.c.b16 %v803, %v802
      %v819 = vpack.c.b16 %v805, %v804
      %v820 = vpack.c.b16 %v807, %v806
      %v821 = vpack.c.b16 %v809, %v808
      %v822 = vpack.c.b16 %v811, %v810
      %v823 = vpack.c.b16 %v813, %v812
      %v824 = vpack.c.b16 %v815, %v814
      %v825 = vpack.c.b16 %v817, %v816
      %834 = vmatpush.bf16.msra.mxu0 %v825
      %835 = vmatpush.bf16.msra.mxu0 %v824
      %836 = vmatpush.bf16.msra.mxu0 %v823
      %837 = vmatpush.bf16.msra.mxu0 %v822
      %838 = vmatpush.bf16.msra.mxu0 %v821
      %839 = vmatpush.bf16.msra.mxu0 %v820
      %840 = vmatpush.bf16.msra.mxu0 %v819
      %841 = vmatpush.bf16.msra.mxu0 %v818
      %842 = vmatmul.bf16.gmra.mxu0 %v618
      %v843 = vpop.f32.mrf.mxu0
      %v844 = vadd.f32 %v784, %v843
      %v845 = vpop.f32.mrf.mxu0
      %v846 = vadd.f32 %v784, %v845
      %847 = vdwg.mxu0
      %v848 = vpack.c.bf16 %v846, %v844
      %v850 = vperm.slane %v593, 0
      %vm852 = vcmask 261120
      %v854 = vsel %vm852, %v682, 0
      %v857 = vsel %vm852, %v765, 0
      %859 = vmatpush.bf16.xpose.msra.mxu0 0
      %860 = vmatpush.bf16.xpose.msra.mxu0 0
      %861 = vmatpush.bf16.xpose.msra.mxu0 0
      %862 = vmatpush.bf16.xpose.msra.mxu0 0
      %863 = vmatpush.bf16.xpose.msra.mxu0 0
      %864 = vmatpush.bf16.xpose.msra.mxu0 0
      %865 = vmatpush.bf16.xpose.msra.mxu0 0
      %866 = vmatpush.bf16.xpose.msra.mxu0 %v857
      %867 = vmatmul.bf16.gmra.mxu0 %v854
      %v868 = vpop.f32.mrf.mxu0
      %v869 = vadd.f32 %v850, %v868
      %v870 = vpop.f32.mrf.mxu0
      %v871 = vadd.f32 %v850, %v870
      %872 = vdwg.mxu0
      %vm873 = vcmask 130048
      %v874 = vsel %vm873, %v869, -inf
      %875 = vmax.xlane.f32.xlu0 %v874
      %v876 = vpop.xlane.xlu0 %875
      %v877 = vsel %vm873, %v871, -inf
      %878 = vmax.xlane.f32.xlu0 %v877
      %v879 = vpop.xlane.xlu0 %878
      %v880 = vsub.f32 %v869, %v876
      %v881 = vsub.f32 %v871, %v879
      %v882 = vmul.f32 %v880, 1.442695
      %v883 = vpow.pop %v882
      %v884 = vmul.f32 %v881, 1.442695
      %v885 = vpow.pop %v884
      %v886 = vsel %vm873, %v883, 0.0
      %887 = vadd.xlane.f32.xlu0 %v886
      %v888 = vpop.xlane.xlu0 %887
      %v889 = vsel %vm873, %v885, 0.0
      %890 = vadd.xlane.f32.xlu0 %v889
      %v891 = vpop.xlane.xlu0 %890
      %v892 = vrcp.pop %v888
      %v893 = vrcp.pop %v891
      %v894 = vmul.f32 %v883, %v892
      %v895 = vmul.f32 %v885, %v893
      %v896 = vpack.c.bf16 %v895, %v894
      %v898 = vsel %vm873, %v896, 0
      %900 = vmatpush.bf16.msra.mxu0 0
      %901 = vmatpush.bf16.msra.mxu0 0
      %902 = vmatpush.bf16.msra.mxu0 0
      %903 = vmatpush.bf16.msra.mxu0 0
      %904 = vmatpush.bf16.msra.mxu0 0
      %905 = vmatpush.bf16.msra.mxu0 0
      %906 = vmatpush.bf16.msra.mxu0 0
      %907 = vmatpush.bf16.msra.mxu0 %v848
      %908 = vmatmul.bf16.gmra.mxu0 %v898
      %v909 = vpop.f32.mrf.mxu0
      %v910 = vadd.f32 0.0, %v909
      %v911 = vpop.f32.mrf.mxu0
      %v912 = vadd.f32 0.0, %v911
      %913 = vdwg.mxu0
      %v914 = vpack.c.bf16 %v912, %v910
      %v915 = vld [vmem:[%s8] sm:$0xf]
      %v916 = vld [vmem:[%s8 + $0x4] sm:$0xf]
      %v917 = vld [vmem:[%s8 + $0x8] sm:$0xf]
      %v918 = vld [vmem:[%s8 + $0xc] sm:$0xf]
      %s919 = scalar_lea.vmem %s2, 64
      %v920 = vld [vmem:[%s919] sm:$0xf]
      %v921 = vld [vmem:[%s919 + $0x4] sm:$0xf]
      %v922 = vld [vmem:[%s919 + $0x8] sm:$0xf]
      %v923 = vld [vmem:[%s919 + $0xc] sm:$0xf]
      %v924 = vld [vmem:[%s919 + $0x10] sm:$0xf]
      %v925 = vld [vmem:[%s919 + $0x14] sm:$0xf]
      %v926 = vld [vmem:[%s919 + $0x18] sm:$0xf]
      %v927 = vld [vmem:[%s919 + $0x1c] sm:$0xf]
      %v928 = vld [vmem:[%s919 + $0x20] sm:$0xf]
      %v929 = vld [vmem:[%s919 + $0x24] sm:$0xf]
      %v930 = vld [vmem:[%s919 + $0x28] sm:$0xf]
      %v931 = vld [vmem:[%s919 + $0x2c] sm:$0xf]
      %v932 = vld [vmem:[%s919 + $0x30] sm:$0xf]
      %v933 = vld [vmem:[%s919 + $0x34] sm:$0xf]
      %v934 = vld [vmem:[%s919 + $0x38] sm:$0xf]
      %v935 = vld [vmem:[%s919 + $0x3c] sm:$0xf]
      %s936 = scalar_lea.vmem %s3, 1
      %v937 = vld [vmem:[%s936] sm:$0x1]
      %v939 = vperm.slane %v937, 0
      %v957 = vunpack.c.l.b16 %v920
      %v958 = vunpack.c.l.b16 %v921
      %v959 = vunpack.c.l.b16 %v922
      %v960 = vunpack.c.l.b16 %v923
      %v961 = vunpack.c.l.b16 %v924
      %v962 = vunpack.c.l.b16 %v925
      %v963 = vunpack.c.l.b16 %v926
      %v964 = vunpack.c.l.b16 %v927
      %v965 = vunpack.c.l.b16 %v928
      %v966 = vunpack.c.l.b16 %v929
      %v967 = vunpack.c.l.b16 %v930
      %v968 = vunpack.c.l.b16 %v931
      %v969 = vunpack.c.l.b16 %v932
      %v970 = vunpack.c.l.b16 %v933
      %v971 = vunpack.c.l.b16 %v934
      %v972 = vunpack.c.l.b16 %v935
      %v973 = vpack.c.b16 %v958, %v957
      %v974 = vpack.c.b16 %v960, %v959
      %v975 = vpack.c.b16 %v962, %v961
      %v976 = vpack.c.b16 %v964, %v963
      %v977 = vpack.c.b16 %v966, %v965
      %v978 = vpack.c.b16 %v968, %v967
      %v979 = vpack.c.b16 %v970, %v969
      %v980 = vpack.c.b16 %v972, %v971
      %989 = vmatpush.bf16.msra.mxu0 %v980
      %990 = vmatpush.bf16.msra.mxu0 %v979
      %991 = vmatpush.bf16.msra.mxu0 %v978
      %992 = vmatpush.bf16.msra.mxu0 %v977
      %993 = vmatpush.bf16.msra.mxu0 %v976
      %994 = vmatpush.bf16.msra.mxu0 %v975
      %995 = vmatpush.bf16.msra.mxu0 %v974
      %996 = vmatpush.bf16.msra.mxu0 %v973
      %997 = vmatmul.bf16.gmra.mxu0 %v618
      %v998 = vpop.f32.mrf.mxu0
      %v999 = vadd.f32 %v939, %v998
      %v1000 = vpop.f32.mrf.mxu0
      %v1001 = vadd.f32 %v939, %v1000
      %1002 = vdwg.mxu0
      %v1003 = vpack.c.bf16 %v1001, %v999
      %s1004 = scalar_lea.vmem %s4, 64
      %v1005 = vld [vmem:[%s1004] sm:$0xf]
      %v1006 = vld [vmem:[%s1004 + $0x4] sm:$0xf]
      %v1007 = vld [vmem:[%s1004 + $0x8] sm:$0xf]
      %v1008 = vld [vmem:[%s1004 + $0xc] sm:$0xf]
      %v1009 = vld [vmem:[%s1004 + $0x10] sm:$0xf]
      %v1010 = vld [vmem:[%s1004 + $0x14] sm:$0xf]
      %v1011 = vld [vmem:[%s1004 + $0x18] sm:$0xf]
      %v1012 = vld [vmem:[%s1004 + $0x1c] sm:$0xf]
      %v1013 = vld [vmem:[%s1004 + $0x20] sm:$0xf]
      %v1014 = vld [vmem:[%s1004 + $0x24] sm:$0xf]
      %v1015 = vld [vmem:[%s1004 + $0x28] sm:$0xf]
      %v1016 = vld [vmem:[%s1004 + $0x2c] sm:$0xf]
      %v1017 = vld [vmem:[%s1004 + $0x30] sm:$0xf]
      %v1018 = vld [vmem:[%s1004 + $0x34] sm:$0xf]
      %v1019 = vld [vmem:[%s1004 + $0x38] sm:$0xf]
      %v1020 = vld [vmem:[%s1004 + $0x3c] sm:$0xf]
      %s1021 = scalar_lea.vmem %s5, 1
      %v1022 = vld [vmem:[%s1021] sm:$0x1]
      %v1024 = vperm.slane %v1022, 0
      %v1042 = vunpack.c.l.b16 %v1005
      %v1043 = vunpack.c.l.b16 %v1006
      %v1044 = vunpack.c.l.b16 %v1007
      %v1045 = vunpack.c.l.b16 %v1008
      %v1046 = vunpack.c.l.b16 %v1009
      %v1047 = vunpack.c.l.b16 %v1010
      %v1048 = vunpack.c.l.b16 %v1011
      %v1049 = vunpack.c.l.b16 %v1012
      %v1050 = vunpack.c.l.b16 %v1013
      %v1051 = vunpack.c.l.b16 %v1014
      %v1052 = vunpack.c.l.b16 %v1015
      %v1053 = vunpack.c.l.b16 %v1016
      %v1054 = vunpack.c.l.b16 %v1017
      %v1055 = vunpack.c.l.b16 %v1018
      %v1056 = vunpack.c.l.b16 %v1019
      %v1057 = vunpack.c.l.b16 %v1020
      %v1058 = vpack.c.b16 %v1043, %v1042
      %v1059 = vpack.c.b16 %v1045, %v1044
      %v1060 = vpack.c.b16 %v1047, %v1046
      %v1061 = vpack.c.b16 %v1049, %v1048
      %v1062 = vpack.c.b16 %v1051, %v1050
      %v1063 = vpack.c.b16 %v1053, %v1052
      %v1064 = vpack.c.b16 %v1055, %v1054
      %v1065 = vpack.c.b16 %v1057, %v1056
      %1074 = vmatpush.bf16.msra.mxu0 %v1065
      %1075 = vmatpush.bf16.msra.mxu0 %v1064
      %1076 = vmatpush.bf16.msra.mxu0 %v1063
      %1077 = vmatpush.bf16.msra.mxu0 %v1062
      %1078 = vmatpush.bf16.msra.mxu0 %v1061
      %1079 = vmatpush.bf16.msra.mxu0 %v1060
      %1080 = vmatpush.bf16.msra.mxu0 %v1059
      %1081 = vmatpush.bf16.msra.mxu0 %v1058
      %1082 = vmatmul.bf16.gmra.mxu0 %v618
      %v1083 = vpop.f32.mrf.mxu0
      %v1084 = vadd.f32 %v1024, %v1083
      %v1085 = vpop.f32.mrf.mxu0
      %v1086 = vadd.f32 %v1024, %v1085
      %1087 = vdwg.mxu0
      %v1088 = vpack.c.bf16 %v1086, %v1084
      %s1089 = scalar_lea.vmem %s6, 64
      %v1090 = vld [vmem:[%s1089] sm:$0xf]
      %v1091 = vld [vmem:[%s1089 + $0x4] sm:$0xf]
      %v1092 = vld [vmem:[%s1089 + $0x8] sm:$0xf]
      %v1093 = vld [vmem:[%s1089 + $0xc] sm:$0xf]
      %v1094 = vld [vmem:[%s1089 + $0x10] sm:$0xf]
      %v1095 = vld [vmem:[%s1089 + $0x14] sm:$0xf]
      %v1096 = vld [vmem:[%s1089 + $0x18] sm:$0xf]
      %v1097 = vld [vmem:[%s1089 + $0x1c] sm:$0xf]
      %v1098 = vld [vmem:[%s1089 + $0x20] sm:$0xf]
      %v1099 = vld [vmem:[%s1089 + $0x24] sm:$0xf]
      %v1100 = vld [vmem:[%s1089 + $0x28] sm:$0xf]
      %v1101 = vld [vmem:[%s1089 + $0x2c] sm:$0xf]
      %v1102 = vld [vmem:[%s1089 + $0x30] sm:$0xf]
      %v1103 = vld [vmem:[%s1089 + $0x34] sm:$0xf]
      %v1104 = vld [vmem:[%s1089 + $0x38] sm:$0xf]
      %v1105 = vld [vmem:[%s1089 + $0x3c] sm:$0xf]
      %s1106 = scalar_lea.vmem %s7, 1
      %v1107 = vld [vmem:[%s1106] sm:$0x1]
      %v1109 = vperm.slane %v1107, 0
      %v1127 = vunpack.c.l.b16 %v1090
      %v1128 = vunpack.c.l.b16 %v1091
      %v1129 = vunpack.c.l.b16 %v1092
      %v1130 = vunpack.c.l.b16 %v1093
      %v1131 = vunpack.c.l.b16 %v1094
      %v1132 = vunpack.c.l.b16 %v1095
      %v1133 = vunpack.c.l.b16 %v1096
      %v1134 = vunpack.c.l.b16 %v1097
      %v1135 = vunpack.c.l.b16 %v1098
      %v1136 = vunpack.c.l.b16 %v1099
      %v1137 = vunpack.c.l.b16 %v1100
      %v1138 = vunpack.c.l.b16 %v1101
      %v1139 = vunpack.c.l.b16 %v1102
      %v1140 = vunpack.c.l.b16 %v1103
      %v1141 = vunpack.c.l.b16 %v1104
      %v1142 = vunpack.c.l.b16 %v1105
      %v1143 = vpack.c.b16 %v1128, %v1127
      %v1144 = vpack.c.b16 %v1130, %v1129
      %v1145 = vpack.c.b16 %v1132, %v1131
      %v1146 = vpack.c.b16 %v1134, %v1133
      %v1147 = vpack.c.b16 %v1136, %v1135
      %v1148 = vpack.c.b16 %v1138, %v1137
      %v1149 = vpack.c.b16 %v1140, %v1139
      %v1150 = vpack.c.b16 %v1142, %v1141
      %1159 = vmatpush.bf16.msra.mxu0 %v1150
      %1160 = vmatpush.bf16.msra.mxu0 %v1149
      %1161 = vmatpush.bf16.msra.mxu0 %v1148
      %1162 = vmatpush.bf16.msra.mxu0 %v1147
      %1163 = vmatpush.bf16.msra.mxu0 %v1146
      %1164 = vmatpush.bf16.msra.mxu0 %v1145
      %1165 = vmatpush.bf16.msra.mxu0 %v1144
      %1166 = vmatpush.bf16.msra.mxu0 %v1143
      %1167 = vmatmul.bf16.gmra.mxu0 %v618
      %v1168 = vpop.f32.mrf.mxu0
      %v1169 = vadd.f32 %v1109, %v1168
      %v1170 = vpop.f32.mrf.mxu0
      %v1171 = vadd.f32 %v1109, %v1170
      %1172 = vdwg.mxu0
      %v1173 = vpack.c.bf16 %v1171, %v1169
      %v1175 = vsel %vm852, %v1003, 0
      %v1178 = vsel %vm852, %v1088, 0
      %1180 = vmatpush.bf16.xpose.msra.mxu0 0
      %1181 = vmatpush.bf16.xpose.msra.mxu0 0
      %1182 = vmatpush.bf16.xpose.msra.mxu0 0
      %1183 = vmatpush.bf16.xpose.msra.mxu0 0
      %1184 = vmatpush.bf16.xpose.msra.mxu0 0
      %1185 = vmatpush.bf16.xpose.msra.mxu0 0
      %1186 = vmatpush.bf16.xpose.msra.mxu0 0
      %1187 = vmatpush.bf16.xpose.msra.mxu0 %v1178
      %1188 = vmatmul.bf16.gmra.mxu0 %v1175
      %v1189 = vpop.f32.mrf.mxu0
      %v1190 = vadd.f32 %v850, %v1189
      %v1191 = vpop.f32.mrf.mxu0
      %v1192 = vadd.f32 %v850, %v1191
      %1193 = vdwg.mxu0
      %v1194 = vsel %vm873, %v1190, -inf
      %1195 = vmax.xlane.f32.xlu0 %v1194
      %v1196 = vpop.xlane.xlu0 %1195
      %v1197 = vsel %vm873, %v1192, -inf
      %1198 = vmax.xlane.f32.xlu0 %v1197
      %v1199 = vpop.xlane.xlu0 %1198
      %v1200 = vsub.f32 %v1190, %v1196
      %v1201 = vsub.f32 %v1192, %v1199
      %v1202 = vmul.f32 %v1200, 1.442695
      %v1203 = vpow.pop %v1202
      %v1204 = vmul.f32 %v1201, 1.442695
      %v1205 = vpow.pop %v1204
      %v1206 = vsel %vm873, %v1203, 0.0
      %1207 = vadd.xlane.f32.xlu0 %v1206
      %v1208 = vpop.xlane.xlu0 %1207
      %v1209 = vsel %vm873, %v1205, 0.0
      %1210 = vadd.xlane.f32.xlu0 %v1209
      %v1211 = vpop.xlane.xlu0 %1210
      %v1212 = vrcp.pop %v1208
      %v1213 = vrcp.pop %v1211
      %v1214 = vmul.f32 %v1203, %v1212
      %v1215 = vmul.f32 %v1205, %v1213
      %v1216 = vpack.c.bf16 %v1215, %v1214
      %v1218 = vsel %vm873, %v1216, 0
      %1220 = vmatpush.bf16.msra.mxu0 0
      %1221 = vmatpush.bf16.msra.mxu0 0
      %1222 = vmatpush.bf16.msra.mxu0 0
      %1223 = vmatpush.bf16.msra.mxu0 0
      %1224 = vmatpush.bf16.msra.mxu0 0
      %1225 = vmatpush.bf16.msra.mxu0 0
      %1226 = vmatpush.bf16.msra.mxu0 0
      %1227 = vmatpush.bf16.msra.mxu0 %v1173
      %1228 = vmatmul.bf16.gmra.mxu0 %v1218
      %v1229 = vpop.f32.mrf.mxu0
      %v1230 = vadd.f32 0.0, %v1229
      %v1231 = vpop.f32.mrf.mxu0
      %v1232 = vadd.f32 0.0, %v1231
      %1233 = vdwg.mxu0
      %v1234 = vpack.c.bf16 %v1232, %v1230
      %s1235 = scalar_lea.vmem %s8, 16
      %v1236 = vld [vmem:[%s1235] sm:$0xf]
      %v1237 = vld [vmem:[%s1235 + $0x4] sm:$0xf]
      %v1238 = vld [vmem:[%s1235 + $0x8] sm:$0xf]
      %v1239 = vld [vmem:[%s1235 + $0xc] sm:$0xf]
      %v1244 = vunpack.c.l.b16 %v1236
      %v1245 = vunpack.c.l.b16 %v1237
      %v1246 = vunpack.c.l.b16 %v1238
      %v1247 = vunpack.c.l.b16 %v1239
      %v1248 = vpack.c.b16 %v1245, %v1244
      %v1249 = vpack.c.b16 %v1247, %v1246
      %v1253 = vsel %vm852, %v1234, 0
      %1255 = vmatpush.bf16.msra.mxu0 0
      %1256 = vmatpush.bf16.msra.mxu0 0
      %1257 = vmatpush.bf16.msra.mxu0 0
      %1258 = vmatpush.bf16.msra.mxu0 0
      %1259 = vmatpush.bf16.msra.mxu0 0
      %1260 = vmatpush.bf16.msra.mxu0 0
      %1261 = vmatpush.bf16.msra.mxu0 %v1249
      %1262 = vmatpush.bf16.msra.mxu0 %v1248
      %1263 = vmatmul.bf16.gmra.mxu0 %v1253
      %v1264 = vpop.f32.mrf.mxu0
      %v1265 = vadd.f32 0.0, %v1264
      %v1266 = vpop.f32.mrf.mxu0
      %v1267 = vadd.f32 0.0, %v1266
      %1268 = vdwg.mxu0
      %v1273 = vunpack.c.l.b16 %v915
      %v1274 = vunpack.c.l.b16 %v916
      %v1275 = vunpack.c.l.b16 %v917
      %v1276 = vunpack.c.l.b16 %v918
      %v1277 = vpack.c.b16 %v1274, %v1273
      %v1278 = vpack.c.b16 %v1276, %v1275
      %v1282 = vsel %vm852, %v914, 0
      %1284 = vmatpush.bf16.msra.mxu0 0
      %1285 = vmatpush.bf16.msra.mxu0 0
      %1286 = vmatpush.bf16.msra.mxu0 0
      %1287 = vmatpush.bf16.msra.mxu0 0
      %1288 = vmatpush.bf16.msra.mxu0 0
      %1289 = vmatpush.bf16.msra.mxu0 0
      %1290 = vmatpush.bf16.msra.mxu0 %v1278
      %1291 = vmatpush.bf16.msra.mxu0 %v1277
      %1292 = vmatmul.bf16.gmra.mxu0 %v1282
      %v1293 = vpop.f32.mrf.mxu0
      %v1294 = vadd.f32 %v1265, %v1293
      %v1295 = vpop.f32.mrf.mxu0
      %v1296 = vadd.f32 %v1267, %v1295
      %1297 = vdwg.mxu0
      %s1298 = scalar_lea.vmem %s2, 128
      %v1299 = vld [vmem:[%s1298] sm:$0xf]
      %v1300 = vld [vmem:[%s1298 + $0x4] sm:$0xf]
      %v1301 = vld [vmem:[%s1298 + $0x8] sm:$0xf]
      %v1302 = vld [vmem:[%s1298 + $0xc] sm:$0xf]
      %v1303 = vld [vmem:[%s1298 + $0x10] sm:$0xf]
      %v1304 = vld [vmem:[%s1298 + $0x14] sm:$0xf]
      %v1305 = vld [vmem:[%s1298 + $0x18] sm:$0xf]
      %v1306 = vld [vmem:[%s1298 + $0x1c] sm:$0xf]
      %v1307 = vld [vmem:[%s1298 + $0x20] sm:$0xf]
      %v1308 = vld [vmem:[%s1298 + $0x24] sm:$0xf]
      %v1309 = vld [vmem:[%s1298 + $0x28] sm:$0xf]
      %v1310 = vld [vmem:[%s1298 + $0x2c] sm:$0xf]
      %v1311 = vld [vmem:[%s1298 + $0x30] sm:$0xf]
      %v1312 = vld [vmem:[%s1298 + $0x34] sm:$0xf]
      %v1313 = vld [vmem:[%s1298 + $0x38] sm:$0xf]
      %v1314 = vld [vmem:[%s1298 + $0x3c] sm:$0xf]
      %s1315 = scalar_lea.vmem %s3, 2
      %v1316 = vld [vmem:[%s1315] sm:$0x1]
      %v1318 = vperm.slane %v1316, 0
      %v1336 = vunpack.c.l.b16 %v1299
      %v1337 = vunpack.c.l.b16 %v1300
      %v1338 = vunpack.c.l.b16 %v1301
      %v1339 = vunpack.c.l.b16 %v1302
      %v1340 = vunpack.c.l.b16 %v1303
      %v1341 = vunpack.c.l.b16 %v1304
      %v1342 = vunpack.c.l.b16 %v1305
      %v1343 = vunpack.c.l.b16 %v1306
      %v1344 = vunpack.c.l.b16 %v1307
      %v1345 = vunpack.c.l.b16 %v1308
      %v1346 = vunpack.c.l.b16 %v1309
      %v1347 = vunpack.c.l.b16 %v1310
      %v1348 = vunpack.c.l.b16 %v1311
      %v1349 = vunpack.c.l.b16 %v1312
      %v1350 = vunpack.c.l.b16 %v1313
      %v1351 = vunpack.c.l.b16 %v1314
      %v1352 = vpack.c.b16 %v1337, %v1336
      %v1353 = vpack.c.b16 %v1339, %v1338
      %v1354 = vpack.c.b16 %v1341, %v1340
      %v1355 = vpack.c.b16 %v1343, %v1342
      %v1356 = vpack.c.b16 %v1345, %v1344
      %v1357 = vpack.c.b16 %v1347, %v1346
      %v1358 = vpack.c.b16 %v1349, %v1348
      %v1359 = vpack.c.b16 %v1351, %v1350
      %1368 = vmatpush.bf16.msra.mxu0 %v1359
      %1369 = vmatpush.bf16.msra.mxu0 %v1358
      %1370 = vmatpush.bf16.msra.mxu0 %v1357
      %1371 = vmatpush.bf16.msra.mxu0 %v1356
      %1372 = vmatpush.bf16.msra.mxu0 %v1355
      %1373 = vmatpush.bf16.msra.mxu0 %v1354
      %1374 = vmatpush.bf16.msra.mxu0 %v1353
      %1375 = vmatpush.bf16.msra.mxu0 %v1352
      %1376 = vmatmul.bf16.gmra.mxu0 %v618
      %v1377 = vpop.f32.mrf.mxu0
      %v1378 = vadd.f32 %v1318, %v1377
      %v1379 = vpop.f32.mrf.mxu0
      %v1380 = vadd.f32 %v1318, %v1379
      %1381 = vdwg.mxu0
      %v1382 = vpack.c.bf16 %v1380, %v1378
      %s1383 = scalar_lea.vmem %s4, 128
      %v1384 = vld [vmem:[%s1383] sm:$0xf]
      %v1385 = vld [vmem:[%s1383 + $0x4] sm:$0xf]
      %v1386 = vld [vmem:[%s1383 + $0x8] sm:$0xf]
      %v1387 = vld [vmem:[%s1383 + $0xc] sm:$0xf]
      %v1388 = vld [vmem:[%s1383 + $0x10] sm:$0xf]
      %v1389 = vld [vmem:[%s1383 + $0x14] sm:$0xf]
      %v1390 = vld [vmem:[%s1383 + $0x18] sm:$0xf]
      %v1391 = vld [vmem:[%s1383 + $0x1c] sm:$0xf]
      %v1392 = vld [vmem:[%s1383 + $0x20] sm:$0xf]
      %v1393 = vld [vmem:[%s1383 + $0x24] sm:$0xf]
      %v1394 = vld [vmem:[%s1383 + $0x28] sm:$0xf]
      %v1395 = vld [vmem:[%s1383 + $0x2c] sm:$0xf]
      %v1396 = vld [vmem:[%s1383 + $0x30] sm:$0xf]
      %v1397 = vld [vmem:[%s1383 + $0x34] sm:$0xf]
      %v1398 = vld [vmem:[%s1383 + $0x38] sm:$0xf]
      %v1399 = vld [vmem:[%s1383 + $0x3c] sm:$0xf]
      %s1400 = scalar_lea.vmem %s5, 2
      %v1401 = vld [vmem:[%s1400] sm:$0x1]
      %v1403 = vperm.slane %v1401, 0
      %v1421 = vunpack.c.l.b16 %v1384
      %v1422 = vunpack.c.l.b16 %v1385
      %v1423 = vunpack.c.l.b16 %v1386
      %v1424 = vunpack.c.l.b16 %v1387
      %v1425 = vunpack.c.l.b16 %v1388
      %v1426 = vunpack.c.l.b16 %v1389
      %v1427 = vunpack.c.l.b16 %v1390
      %v1428 = vunpack.c.l.b16 %v1391
      %v1429 = vunpack.c.l.b16 %v1392
      %v1430 = vunpack.c.l.b16 %v1393
      %v1431 = vunpack.c.l.b16 %v1394
      %v1432 = vunpack.c.l.b16 %v1395
      %v1433 = vunpack.c.l.b16 %v1396
      %v1434 = vunpack.c.l.b16 %v1397
      %v1435 = vunpack.c.l.b16 %v1398
      %v1436 = vunpack.c.l.b16 %v1399
      %v1437 = vpack.c.b16 %v1422, %v1421
      %v1438 = vpack.c.b16 %v1424, %v1423
      %v1439 = vpack.c.b16 %v1426, %v1425
      %v1440 = vpack.c.b16 %v1428, %v1427
      %v1441 = vpack.c.b16 %v1430, %v1429
      %v1442 = vpack.c.b16 %v1432, %v1431
      %v1443 = vpack.c.b16 %v1434, %v1433
      %v1444 = vpack.c.b16 %v1436, %v1435
      %1453 = vmatpush.bf16.msra.mxu0 %v1444
      %1454 = vmatpush.bf16.msra.mxu0 %v1443
      %1455 = vmatpush.bf16.msra.mxu0 %v1442
      %1456 = vmatpush.bf16.msra.mxu0 %v1441
      %1457 = vmatpush.bf16.msra.mxu0 %v1440
      %1458 = vmatpush.bf16.msra.mxu0 %v1439
      %1459 = vmatpush.bf16.msra.mxu0 %v1438
      %1460 = vmatpush.bf16.msra.mxu0 %v1437
      %1461 = vmatmul.bf16.gmra.mxu0 %v618
      %v1462 = vpop.f32.mrf.mxu0
      %v1463 = vadd.f32 %v1403, %v1462
      %v1464 = vpop.f32.mrf.mxu0
      %v1465 = vadd.f32 %v1403, %v1464
      %1466 = vdwg.mxu0
      %v1467 = vpack.c.bf16 %v1465, %v1463
      %s1468 = scalar_lea.vmem %s6, 128
      %v1469 = vld [vmem:[%s1468] sm:$0xf]
      %v1470 = vld [vmem:[%s1468 + $0x4] sm:$0xf]
      %v1471 = vld [vmem:[%s1468 + $0x8] sm:$0xf]
      %v1472 = vld [vmem:[%s1468 + $0xc] sm:$0xf]
      %v1473 = vld [vmem:[%s1468 + $0x10] sm:$0xf]
      %v1474 = vld [vmem:[%s1468 + $0x14] sm:$0xf]
      %v1475 = vld [vmem:[%s1468 + $0x18] sm:$0xf]
      %v1476 = vld [vmem:[%s1468 + $0x1c] sm:$0xf]
      %v1477 = vld [vmem:[%s1468 + $0x20] sm:$0xf]
      %v1478 = vld [vmem:[%s1468 + $0x24] sm:$0xf]
      %v1479 = vld [vmem:[%s1468 + $0x28] sm:$0xf]
      %v1480 = vld [vmem:[%s1468 + $0x2c] sm:$0xf]
      %v1481 = vld [vmem:[%s1468 + $0x30] sm:$0xf]
      %v1482 = vld [vmem:[%s1468 + $0x34] sm:$0xf]
      %v1483 = vld [vmem:[%s1468 + $0x38] sm:$0xf]
      %v1484 = vld [vmem:[%s1468 + $0x3c] sm:$0xf]
      %s1485 = scalar_lea.vmem %s7, 2
      %v1486 = vld [vmem:[%s1485] sm:$0x1]
      %v1488 = vperm.slane %v1486, 0
      %v1506 = vunpack.c.l.b16 %v1469
      %v1507 = vunpack.c.l.b16 %v1470
      %v1508 = vunpack.c.l.b16 %v1471
      %v1509 = vunpack.c.l.b16 %v1472
      %v1510 = vunpack.c.l.b16 %v1473
      %v1511 = vunpack.c.l.b16 %v1474
      %v1512 = vunpack.c.l.b16 %v1475
      %v1513 = vunpack.c.l.b16 %v1476
      %v1514 = vunpack.c.l.b16 %v1477
      %v1515 = vunpack.c.l.b16 %v1478
      %v1516 = vunpack.c.l.b16 %v1479
      %v1517 = vunpack.c.l.b16 %v1480
      %v1518 = vunpack.c.l.b16 %v1481
      %v1519 = vunpack.c.l.b16 %v1482
      %v1520 = vunpack.c.l.b16 %v1483
      %v1521 = vunpack.c.l.b16 %v1484
      %v1522 = vpack.c.b16 %v1507, %v1506
      %v1523 = vpack.c.b16 %v1509, %v1508
      %v1524 = vpack.c.b16 %v1511, %v1510
      %v1525 = vpack.c.b16 %v1513, %v1512
      %v1526 = vpack.c.b16 %v1515, %v1514
      %v1527 = vpack.c.b16 %v1517, %v1516
      %v1528 = vpack.c.b16 %v1519, %v1518
      %v1529 = vpack.c.b16 %v1521, %v1520
      %1538 = vmatpush.bf16.msra.mxu0 %v1529
      %1539 = vmatpush.bf16.msra.mxu0 %v1528
      %1540 = vmatpush.bf16.msra.mxu0 %v1527
      %1541 = vmatpush.bf16.msra.mxu0 %v1526
      %1542 = vmatpush.bf16.msra.mxu0 %v1525
      %1543 = vmatpush.bf16.msra.mxu0 %v1524
      %1544 = vmatpush.bf16.msra.mxu0 %v1523
      %1545 = vmatpush.bf16.msra.mxu0 %v1522
      %1546 = vmatmul.bf16.gmra.mxu0 %v618
      %v1547 = vpop.f32.mrf.mxu0
      %v1548 = vadd.f32 %v1488, %v1547
      %v1549 = vpop.f32.mrf.mxu0
      %v1550 = vadd.f32 %v1488, %v1549
      %1551 = vdwg.mxu0
      %v1552 = vpack.c.bf16 %v1550, %v1548
      %v1554 = vsel %vm852, %v1382, 0
      %v1557 = vsel %vm852, %v1467, 0
      %1559 = vmatpush.bf16.xpose.msra.mxu0 0
      %1560 = vmatpush.bf16.xpose.msra.mxu0 0
      %1561 = vmatpush.bf16.xpose.msra.mxu0 0
      %1562 = vmatpush.bf16.xpose.msra.mxu0 0
      %1563 = vmatpush.bf16.xpose.msra.mxu0 0
      %1564 = vmatpush.bf16.xpose.msra.mxu0 0
      %1565 = vmatpush.bf16.xpose.msra.mxu0 0
      %1566 = vmatpush.bf16.xpose.msra.mxu0 %v1557
      %1567 = vmatmul.bf16.gmra.mxu0 %v1554
      %v1568 = vpop.f32.mrf.mxu0
      %v1569 = vadd.f32 %v850, %v1568
      %v1570 = vpop.f32.mrf.mxu0
      %v1571 = vadd.f32 %v850, %v1570
      %1572 = vdwg.mxu0
      %v1573 = vsel %vm873, %v1569, -inf
      %1574 = vmax.xlane.f32.xlu0 %v1573
      %v1575 = vpop.xlane.xlu0 %1574
      %v1576 = vsel %vm873, %v1571, -inf
      %1577 = vmax.xlane.f32.xlu0 %v1576
      %v1578 = vpop.xlane.xlu0 %1577
      %v1579 = vsub.f32 %v1569, %v1575
      %v1580 = vsub.f32 %v1571, %v1578
      %v1581 = vmul.f32 %v1579, 1.442695
      %v1582 = vpow.pop %v1581
      %v1583 = vmul.f32 %v1580, 1.442695
      %v1584 = vpow.pop %v1583
      %v1585 = vsel %vm873, %v1582, 0.0
      %1586 = vadd.xlane.f32.xlu0 %v1585
      %v1587 = vpop.xlane.xlu0 %1586
      %v1588 = vsel %vm873, %v1584, 0.0
      %1589 = vadd.xlane.f32.xlu0 %v1588
      %v1590 = vpop.xlane.xlu0 %1589
      %v1591 = vrcp.pop %v1587
      %v1592 = vrcp.pop %v1590
      %v1593 = vmul.f32 %v1582, %v1591
      %v1594 = vmul.f32 %v1584, %v1592
      %v1595 = vpack.c.bf16 %v1594, %v1593
      %v1597 = vsel %vm873, %v1595, 0
      %1599 = vmatpush.bf16.msra.mxu0 0
      %1600 = vmatpush.bf16.msra.mxu0 0
      %1601 = vmatpush.bf16.msra.mxu0 0
      %1602 = vmatpush.bf16.msra.mxu0 0
      %1603 = vmatpush.bf16.msra.mxu0 0
      %1604 = vmatpush.bf16.msra.mxu0 0
      %1605 = vmatpush.bf16.msra.mxu0 0
      %1606 = vmatpush.bf16.msra.mxu0 %v1552
      %1607 = vmatmul.bf16.gmra.mxu0 %v1597
      %v1608 = vpop.f32.mrf.mxu0
      %v1609 = vadd.f32 0.0, %v1608
      %v1610 = vpop.f32.mrf.mxu0
      %v1611 = vadd.f32 0.0, %v1610
      %1612 = vdwg.mxu0
      %v1613 = vpack.c.bf16 %v1611, %v1609
      %s1614 = scalar_lea.vmem %s8, 32
      %v1615 = vld [vmem:[%s1614] sm:$0xf]
      %v1616 = vld [vmem:[%s1614 + $0x4] sm:$0xf]
      %v1617 = vld [vmem:[%s1614 + $0x8] sm:$0xf]
      %v1618 = vld [vmem:[%s1614 + $0xc] sm:$0xf]
      %v1623 = vunpack.c.l.b16 %v1615
      %v1624 = vunpack.c.l.b16 %v1616
      %v1625 = vunpack.c.l.b16 %v1617
      %v1626 = vunpack.c.l.b16 %v1618
      %v1627 = vpack.c.b16 %v1624, %v1623
      %v1628 = vpack.c.b16 %v1626, %v1625
      %v1632 = vsel %vm852, %v1613, 0
      %1634 = vmatpush.bf16.msra.mxu0 0
      %1635 = vmatpush.bf16.msra.mxu0 0
      %1636 = vmatpush.bf16.msra.mxu0 0
      %1637 = vmatpush.bf16.msra.mxu0 0
      %1638 = vmatpush.bf16.msra.mxu0 0
      %1639 = vmatpush.bf16.msra.mxu0 0
      %1640 = vmatpush.bf16.msra.mxu0 %v1628
      %1641 = vmatpush.bf16.msra.mxu0 %v1627
      %1642 = vmatmul.bf16.gmra.mxu0 %v1632
      %v1643 = vpop.f32.mrf.mxu0
      %v1644 = vadd.f32 0.0, %v1643
      %v1645 = vpop.f32.mrf.mxu0
      %v1646 = vadd.f32 0.0, %v1645
      %1647 = vdwg.mxu0
      %v1648 = vadd.f32 %v1294, %v1644
      %v1649 = vadd.f32 %v1296, %v1646
      %s1650 = scalar_lea.vmem %s2, 192
      %v1651 = vld [vmem:[%s1650] sm:$0xf]
      %v1652 = vld [vmem:[%s1650 + $0x4] sm:$0xf]
      %v1653 = vld [vmem:[%s1650 + $0x8] sm:$0xf]
      %v1654 = vld [vmem:[%s1650 + $0xc] sm:$0xf]
      %v1655 = vld [vmem:[%s1650 + $0x10] sm:$0xf]
      %v1656 = vld [vmem:[%s1650 + $0x14] sm:$0xf]
      %v1657 = vld [vmem:[%s1650 + $0x18] sm:$0xf]
      %v1658 = vld [vmem:[%s1650 + $0x1c] sm:$0xf]
      %v1659 = vld [vmem:[%s1650 + $0x20] sm:$0xf]
      %v1660 = vld [vmem:[%s1650 + $0x24] sm:$0xf]
      %v1661 = vld [vmem:[%s1650 + $0x28] sm:$0xf]
      %v1662 = vld [vmem:[%s1650 + $0x2c] sm:$0xf]
      %v1663 = vld [vmem:[%s1650 + $0x30] sm:$0xf]
      %v1664 = vld [vmem:[%s1650 + $0x34] sm:$0xf]
      %v1665 = vld [vmem:[%s1650 + $0x38] sm:$0xf]
      %v1666 = vld [vmem:[%s1650 + $0x3c] sm:$0xf]
      %s1667 = scalar_lea.vmem %s3, 3
      %v1668 = vld [vmem:[%s1667] sm:$0x1]
      %v1670 = vperm.slane %v1668, 0
      %v1688 = vunpack.c.l.b16 %v1651
      %v1689 = vunpack.c.l.b16 %v1652
      %v1690 = vunpack.c.l.b16 %v1653
      %v1691 = vunpack.c.l.b16 %v1654
      %v1692 = vunpack.c.l.b16 %v1655
      %v1693 = vunpack.c.l.b16 %v1656
      %v1694 = vunpack.c.l.b16 %v1657
      %v1695 = vunpack.c.l.b16 %v1658
      %v1696 = vunpack.c.l.b16 %v1659
      %v1697 = vunpack.c.l.b16 %v1660
      %v1698 = vunpack.c.l.b16 %v1661
      %v1699 = vunpack.c.l.b16 %v1662
      %v1700 = vunpack.c.l.b16 %v1663
      %v1701 = vunpack.c.l.b16 %v1664
      %v1702 = vunpack.c.l.b16 %v1665
      %v1703 = vunpack.c.l.b16 %v1666
      %v1704 = vpack.c.b16 %v1689, %v1688
      %v1705 = vpack.c.b16 %v1691, %v1690
      %v1706 = vpack.c.b16 %v1693, %v1692
      %v1707 = vpack.c.b16 %v1695, %v1694
      %v1708 = vpack.c.b16 %v1697, %v1696
      %v1709 = vpack.c.b16 %v1699, %v1698
      %v1710 = vpack.c.b16 %v1701, %v1700
      %v1711 = vpack.c.b16 %v1703, %v1702
      %1720 = vmatpush.bf16.msra.mxu0 %v1711
      %1721 = vmatpush.bf16.msra.mxu0 %v1710
      %1722 = vmatpush.bf16.msra.mxu0 %v1709
      %1723 = vmatpush.bf16.msra.mxu0 %v1708
      %1724 = vmatpush.bf16.msra.mxu0 %v1707
      %1725 = vmatpush.bf16.msra.mxu0 %v1706
      %1726 = vmatpush.bf16.msra.mxu0 %v1705
      %1727 = vmatpush.bf16.msra.mxu0 %v1704
      %1728 = vmatmul.bf16.gmra.mxu0 %v618
      %v1729 = vpop.f32.mrf.mxu0
      %v1730 = vadd.f32 %v1670, %v1729
      %v1731 = vpop.f32.mrf.mxu0
      %v1732 = vadd.f32 %v1670, %v1731
      %1733 = vdwg.mxu0
      %v1734 = vpack.c.bf16 %v1732, %v1730
      %s1735 = scalar_lea.vmem %s4, 192
      %v1736 = vld [vmem:[%s1735] sm:$0xf]
      %v1737 = vld [vmem:[%s1735 + $0x4] sm:$0xf]
      %v1738 = vld [vmem:[%s1735 + $0x8] sm:$0xf]
      %v1739 = vld [vmem:[%s1735 + $0xc] sm:$0xf]
      %v1740 = vld [vmem:[%s1735 + $0x10] sm:$0xf]
      %v1741 = vld [vmem:[%s1735 + $0x14] sm:$0xf]
      %v1742 = vld [vmem:[%s1735 + $0x18] sm:$0xf]
      %v1743 = vld [vmem:[%s1735 + $0x1c] sm:$0xf]
      %v1744 = vld [vmem:[%s1735 + $0x20] sm:$0xf]
      %v1745 = vld [vmem:[%s1735 + $0x24] sm:$0xf]
      %v1746 = vld [vmem:[%s1735 + $0x28] sm:$0xf]
      %v1747 = vld [vmem:[%s1735 + $0x2c] sm:$0xf]
      %v1748 = vld [vmem:[%s1735 + $0x30] sm:$0xf]
      %v1749 = vld [vmem:[%s1735 + $0x34] sm:$0xf]
      %v1750 = vld [vmem:[%s1735 + $0x38] sm:$0xf]
      %v1751 = vld [vmem:[%s1735 + $0x3c] sm:$0xf]
      %s1752 = scalar_lea.vmem %s5, 3
      %v1753 = vld [vmem:[%s1752] sm:$0x1]
      %v1755 = vperm.slane %v1753, 0
      %v1773 = vunpack.c.l.b16 %v1736
      %v1774 = vunpack.c.l.b16 %v1737
      %v1775 = vunpack.c.l.b16 %v1738
      %v1776 = vunpack.c.l.b16 %v1739
      %v1777 = vunpack.c.l.b16 %v1740
      %v1778 = vunpack.c.l.b16 %v1741
      %v1779 = vunpack.c.l.b16 %v1742
      %v1780 = vunpack.c.l.b16 %v1743
      %v1781 = vunpack.c.l.b16 %v1744
      %v1782 = vunpack.c.l.b16 %v1745
      %v1783 = vunpack.c.l.b16 %v1746
      %v1784 = vunpack.c.l.b16 %v1747
      %v1785 = vunpack.c.l.b16 %v1748
      %v1786 = vunpack.c.l.b16 %v1749
      %v1787 = vunpack.c.l.b16 %v1750
      %v1788 = vunpack.c.l.b16 %v1751
      %v1789 = vpack.c.b16 %v1774, %v1773
      %v1790 = vpack.c.b16 %v1776, %v1775
      %v1791 = vpack.c.b16 %v1778, %v1777
      %v1792 = vpack.c.b16 %v1780, %v1779
      %v1793 = vpack.c.b16 %v1782, %v1781
      %v1794 = vpack.c.b16 %v1784, %v1783
      %v1795 = vpack.c.b16 %v1786, %v1785
      %v1796 = vpack.c.b16 %v1788, %v1787
      %1805 = vmatpush.bf16.msra.mxu0 %v1796
      %1806 = vmatpush.bf16.msra.mxu0 %v1795
      %1807 = vmatpush.bf16.msra.mxu0 %v1794
      %1808 = vmatpush.bf16.msra.mxu0 %v1793
      %1809 = vmatpush.bf16.msra.mxu0 %v1792
      %1810 = vmatpush.bf16.msra.mxu0 %v1791
      %1811 = vmatpush.bf16.msra.mxu0 %v1790
      %1812 = vmatpush.bf16.msra.mxu0 %v1789
      %1813 = vmatmul.bf16.gmra.mxu0 %v618
      %v1814 = vpop.f32.mrf.mxu0
      %v1815 = vadd.f32 %v1755, %v1814
      %v1816 = vpop.f32.mrf.mxu0
      %v1817 = vadd.f32 %v1755, %v1816
      %1818 = vdwg.mxu0
      %v1819 = vpack.c.bf16 %v1817, %v1815
      %s1820 = scalar_lea.vmem %s6, 192
      %v1821 = vld [vmem:[%s1820] sm:$0xf]
      %v1822 = vld [vmem:[%s1820 + $0x4] sm:$0xf]
      %v1823 = vld [vmem:[%s1820 + $0x8] sm:$0xf]
      %v1824 = vld [vmem:[%s1820 + $0xc] sm:$0xf]
      %v1825 = vld [vmem:[%s1820 + $0x10] sm:$0xf]
      %v1826 = vld [vmem:[%s1820 + $0x14] sm:$0xf]
      %v1827 = vld [vmem:[%s1820 + $0x18] sm:$0xf]
      %v1828 = vld [vmem:[%s1820 + $0x1c] sm:$0xf]
      %v1829 = vld [vmem:[%s1820 + $0x20] sm:$0xf]
      %v1830 = vld [vmem:[%s1820 + $0x24] sm:$0xf]
      %v1831 = vld [vmem:[%s1820 + $0x28] sm:$0xf]
      %v1832 = vld [vmem:[%s1820 + $0x2c] sm:$0xf]
      %v1833 = vld [vmem:[%s1820 + $0x30] sm:$0xf]
      %v1834 = vld [vmem:[%s1820 + $0x34] sm:$0xf]
      %v1835 = vld [vmem:[%s1820 + $0x38] sm:$0xf]
      %v1836 = vld [vmem:[%s1820 + $0x3c] sm:$0xf]
      %s1837 = scalar_lea.vmem %s7, 3
      %v1838 = vld [vmem:[%s1837] sm:$0x1]
      %v1840 = vperm.slane %v1838, 0
      %v1858 = vunpack.c.l.b16 %v1821
      %v1859 = vunpack.c.l.b16 %v1822
      %v1860 = vunpack.c.l.b16 %v1823
      %v1861 = vunpack.c.l.b16 %v1824
      %v1862 = vunpack.c.l.b16 %v1825
      %v1863 = vunpack.c.l.b16 %v1826
      %v1864 = vunpack.c.l.b16 %v1827
      %v1865 = vunpack.c.l.b16 %v1828
      %v1866 = vunpack.c.l.b16 %v1829
      %v1867 = vunpack.c.l.b16 %v1830
      %v1868 = vunpack.c.l.b16 %v1831
      %v1869 = vunpack.c.l.b16 %v1832
      %v1870 = vunpack.c.l.b16 %v1833
      %v1871 = vunpack.c.l.b16 %v1834
      %v1872 = vunpack.c.l.b16 %v1835
      %v1873 = vunpack.c.l.b16 %v1836
      %v1874 = vpack.c.b16 %v1859, %v1858
      %v1875 = vpack.c.b16 %v1861, %v1860
      %v1876 = vpack.c.b16 %v1863, %v1862
      %v1877 = vpack.c.b16 %v1865, %v1864
      %v1878 = vpack.c.b16 %v1867, %v1866
      %v1879 = vpack.c.b16 %v1869, %v1868
      %v1880 = vpack.c.b16 %v1871, %v1870
      %v1881 = vpack.c.b16 %v1873, %v1872
      %1890 = vmatpush.bf16.msra.mxu0 %v1881
      %1891 = vmatpush.bf16.msra.mxu0 %v1880
      %1892 = vmatpush.bf16.msra.mxu0 %v1879
      %1893 = vmatpush.bf16.msra.mxu0 %v1878
      %1894 = vmatpush.bf16.msra.mxu0 %v1877
      %1895 = vmatpush.bf16.msra.mxu0 %v1876
      %1896 = vmatpush.bf16.msra.mxu0 %v1875
      %1897 = vmatpush.bf16.msra.mxu0 %v1874
      %1898 = vmatmul.bf16.gmra.mxu0 %v618
      %v1899 = vpop.f32.mrf.mxu0
      %v1900 = vadd.f32 %v1840, %v1899
      %v1901 = vpop.f32.mrf.mxu0
      %v1902 = vadd.f32 %v1840, %v1901
      %1903 = vdwg.mxu0
      %v1904 = vpack.c.bf16 %v1902, %v1900
      %v1906 = vsel %vm852, %v1734, 0
      %v1909 = vsel %vm852, %v1819, 0
      %1911 = vmatpush.bf16.xpose.msra.mxu0 0
      %1912 = vmatpush.bf16.xpose.msra.mxu0 0
      %1913 = vmatpush.bf16.xpose.msra.mxu0 0
      %1914 = vmatpush.bf16.xpose.msra.mxu0 0
      %1915 = vmatpush.bf16.xpose.msra.mxu0 0
      %1916 = vmatpush.bf16.xpose.msra.mxu0 0
      %1917 = vmatpush.bf16.xpose.msra.mxu0 0
      %1918 = vmatpush.bf16.xpose.msra.mxu0 %v1909
      %1919 = vmatmul.bf16.gmra.mxu0 %v1906
      %v1920 = vpop.f32.mrf.mxu0
      %v1921 = vadd.f32 %v850, %v1920
      %v1922 = vpop.f32.mrf.mxu0
      %v1923 = vadd.f32 %v850, %v1922
      %1924 = vdwg.mxu0
      %v1925 = vsel %vm873, %v1921, -inf
      %1926 = vmax.xlane.f32.xlu0 %v1925
      %v1927 = vpop.xlane.xlu0 %1926
      %v1928 = vsel %vm873, %v1923, -inf
      %1929 = vmax.xlane.f32.xlu0 %v1928
      %v1930 = vpop.xlane.xlu0 %1929
      %v1931 = vsub.f32 %v1921, %v1927
      %v1932 = vsub.f32 %v1923, %v1930
      %v1933 = vmul.f32 %v1931, 1.442695
      %v1934 = vpow.pop %v1933
      %v1935 = vmul.f32 %v1932, 1.442695
      %v1936 = vpow.pop %v1935
      %v1937 = vsel %vm873, %v1934, 0.0
      %1938 = vadd.xlane.f32.xlu0 %v1937
      %v1939 = vpop.xlane.xlu0 %1938
      %v1940 = vsel %vm873, %v1936, 0.0
      %1941 = vadd.xlane.f32.xlu0 %v1940
      %v1942 = vpop.xlane.xlu0 %1941
      %v1943 = vrcp.pop %v1939
      %v1944 = vrcp.pop %v1942
      %v1945 = vmul.f32 %v1934, %v1943
      %v1946 = vmul.f32 %v1936, %v1944
      %v1947 = vpack.c.bf16 %v1946, %v1945
      %v1949 = vsel %vm873, %v1947, 0
      %1951 = vmatpush.bf16.msra.mxu0 0
      %1952 = vmatpush.bf16.msra.mxu0 0
      %1953 = vmatpush.bf16.msra.mxu0 0
      %1954 = vmatpush.bf16.msra.mxu0 0
      %1955 = vmatpush.bf16.msra.mxu0 0
      %1956 = vmatpush.bf16.msra.mxu0 0
      %1957 = vmatpush.bf16.msra.mxu0 0
      %1958 = vmatpush.bf16.msra.mxu0 %v1904
      %1959 = vmatmul.bf16.gmra.mxu0 %v1949
      %v1960 = vpop.f32.mrf.mxu0
      %v1961 = vadd.f32 0.0, %v1960
      %v1962 = vpop.f32.mrf.mxu0
      %v1963 = vadd.f32 0.0, %v1962
      %1964 = vdwg.mxu0
      %v1965 = vpack.c.bf16 %v1963, %v1961
      %s1966 = scalar_lea.vmem %s8, 48
      %v1967 = vld [vmem:[%s1966] sm:$0xf]
      %v1968 = vld [vmem:[%s1966 + $0x4] sm:$0xf]
      %v1969 = vld [vmem:[%s1966 + $0x8] sm:$0xf]
      %v1970 = vld [vmem:[%s1966 + $0xc] sm:$0xf]
      %v1975 = vunpack.c.l.b16 %v1967
      %v1976 = vunpack.c.l.b16 %v1968
      %v1977 = vunpack.c.l.b16 %v1969
      %v1978 = vunpack.c.l.b16 %v1970
      %v1979 = vpack.c.b16 %v1976, %v1975
      %v1980 = vpack.c.b16 %v1978, %v1977
      %v1984 = vsel %vm852, %v1965, 0
      %1986 = vmatpush.bf16.msra.mxu0 0
      %1987 = vmatpush.bf16.msra.mxu0 0
      %1988 = vmatpush.bf16.msra.mxu0 0
      %1989 = vmatpush.bf16.msra.mxu0 0
      %1990 = vmatpush.bf16.msra.mxu0 0
      %1991 = vmatpush.bf16.msra.mxu0 0
      %1992 = vmatpush.bf16.msra.mxu0 %v1980
      %1993 = vmatpush.bf16.msra.mxu0 %v1979
      %1994 = vmatmul.bf16.gmra.mxu0 %v1984
      %v1995 = vpop.f32.mrf.mxu0
      %v1996 = vadd.f32 0.0, %v1995
      %v1997 = vpop.f32.mrf.mxu0
      %v1998 = vadd.f32 0.0, %v1997
      %1999 = vdwg.mxu0
      %v2000 = vadd.f32 %v1648, %v1996
      %v2001 = vadd.f32 %v1649, %v1998
      %v2002 = vld [vmem:[%s9] sm:$0x1]
      %v2004 = vperm.slane %v2002, 0
      %v2006 = vadd.f32 %v2000, %v2004
      %v2007 = vadd.f32 %v2001, %v2004
      %v2008 = vunpack.c.l.bf16 %v591
      %v2009 = vunpack.c.l.bf16 %v592
      %v2010 = vadd.f32 %v2006, %v2008
      %v2011 = vadd.f32 %v2007, %v2009
      %2012 = vadd.xlane.f32.xlu0 %v2010
      %v2013 = vpop.xlane.xlu0 %2012
      %2014 = vadd.xlane.f32.xlu0 %v2011
      %v2015 = vpop.xlane.xlu0 %2014
      %v2016 = vrcp.pop 128.0
      %v2017 = vmul.f32 128.0, %v2016
      %v2018 = vsub.f32 1.0, %v2017
      %v2019 = vmul.f32 %v2016, %v2018
      %v2020 = vadd.f32 %v2016, %v2019
      %vm2021 = vweird.f32 %v2016
      %v2022 = vsel %vm2021, %v2016, %v2020
      %v2023 = vmul.f32 %v2013, %v2022
      %v2024 = vmul.f32 %v2015, %v2022
      %v2025 = vsub.f32 %v2010, %v2023
      %v2026 = vsub.f32 %v2011, %v2024
      %v2027 = vmul.f32 %v2025, %v2025
      %v2028 = vmul.f32 %v2026, %v2026
      %2029 = vadd.xlane.f32.xlu0 %v2027
      %v2030 = vpop.xlane.xlu0 %2029
      %2031 = vadd.xlane.f32.xlu0 %v2028
      %v2032 = vpop.xlane.xlu0 %2031
      %v2033 = vmul.f32 %v2030, %v2022
      %v2034 = vmul.f32 %v2032, %v2022
      %v2035 = vadd.f32 %v2033, 1e-12
      %v2036 = vadd.f32 %v2034, 1e-12
      %v2037 = vrsqrt.pop %v2035
      %v2038 = vmul.f32 %v2037, %v2035
      %v2039 = vmul.f32 %v2038, %v2037
      %v2040 = vmul.f32 0.5, %v2039
      %v2041 = vsub.f32 1.5, %v2040
      %v2042 = vmul.f32 %v2037, %v2041
      %vm2043 = vweird.f32 %v2035
      %vm2044 = vweird.f32 %v2037
      %vm2045 = vmor %vm2043, %vm2044
      %v2046 = vsel %vm2045, %v2037, %v2042
      %v2047 = vrsqrt.pop %v2036
      %v2048 = vmul.f32 %v2047, %v2036
      %v2049 = vmul.f32 %v2048, %v2047
      %v2050 = vmul.f32 0.5, %v2049
      %v2051 = vsub.f32 1.5, %v2050
      %v2052 = vmul.f32 %v2047, %v2051
      %vm2053 = vweird.f32 %v2036
      %vm2054 = vweird.f32 %v2047
      %vm2055 = vmor %vm2053, %vm2054
      %v2056 = vsel %vm2055, %v2047, %v2052
      %v2057 = vmul.f32 %v2025, %v2046
      %v2058 = vmul.f32 %v2026, %v2056
      %v2059 = vld [vmem:[%s10] sm:$0x1]
      %v2061 = vperm.slane %v2059, 0
      %v2063 = vmul.f32 %v2057, %v2061
      %v2064 = vmul.f32 %v2058, %v2061
      %v2065 = vld [vmem:[%s11] sm:$0x1]
      %v2067 = vperm.slane %v2065, 0
      %v2069 = vadd.f32 %v2063, %v2067
      %v2070 = vadd.f32 %v2064, %v2067
      %v2071 = vpack.c.bf16 %v2070, %v2069
      %v2072 = vld [vmem:[%s12] sm:$0xff]
      %v2073 = vld [vmem:[%s12 + $0x8] sm:$0xff]
      %v2074 = vld [vmem:[%s12 + $0x10] sm:$0xff]
      %v2075 = vld [vmem:[%s12 + $0x18] sm:$0xff]
      %v2076 = vld [vmem:[%s12 + $0x20] sm:$0xff]
      %v2077 = vld [vmem:[%s12 + $0x28] sm:$0xff]
      %v2078 = vld [vmem:[%s12 + $0x30] sm:$0xff]
      %v2079 = vld [vmem:[%s12 + $0x38] sm:$0xff]
      %v2080 = vld [vmem:[%s12 + $0x40] sm:$0xff]
      %v2081 = vld [vmem:[%s12 + $0x48] sm:$0xff]
      %v2082 = vld [vmem:[%s12 + $0x50] sm:$0xff]
      %v2083 = vld [vmem:[%s12 + $0x58] sm:$0xff]
      %v2084 = vld [vmem:[%s12 + $0x60] sm:$0xff]
      %v2085 = vld [vmem:[%s12 + $0x68] sm:$0xff]
      %v2086 = vld [vmem:[%s12 + $0x70] sm:$0xff]
      %v2087 = vld [vmem:[%s12 + $0x78] sm:$0xff]
      %v2088 = vld [vmem:[%s13] sm:$0x3]
      %v2090 = vperm.slane %v2088, 0
      %v2091 = vperm.slane %v2088, 1
      %v2110 = vunpack.c.l.b16 %v2072
      %v2111 = vunpack.c.h.b16 %v2072
      %v2112 = vunpack.c.l.b16 %v2073
      %v2113 = vunpack.c.h.b16 %v2073
      %v2114 = vunpack.c.l.b16 %v2074
      %v2115 = vunpack.c.h.b16 %v2074
      %v2116 = vunpack.c.l.b16 %v2075
      %v2117 = vunpack.c.h.b16 %v2075
      %v2118 = vunpack.c.l.b16 %v2076
      %v2119 = vunpack.c.h.b16 %v2076
      %v2120 = vunpack.c.l.b16 %v2077
      %v2121 = vunpack.c.h.b16 %v2077
      %v2122 = vunpack.c.l.b16 %v2078
      %v2123 = vunpack.c.h.b16 %v2078
      %v2124 = vunpack.c.l.b16 %v2079
      %v2125 = vunpack.c.h.b16 %v2079
      %v2126 = vunpack.c.l.b16 %v2080
      %v2127 = vunpack.c.h.b16 %v2080
      %v2128 = vunpack.c.l.b16 %v2081
      %v2129 = vunpack.c.h.b16 %v2081
      %v2130 = vunpack.c.l.b16 %v2082
      %v2131 = vunpack.c.h.b16 %v2082
      %v2132 = vunpack.c.l.b16 %v2083
      %v2133 = vunpack.c.h.b16 %v2083
      %v2134 = vunpack.c.l.b16 %v2084
      %v2135 = vunpack.c.h.b16 %v2084
      %v2136 = vunpack.c.l.b16 %v2085
      %v2137 = vunpack.c.h.b16 %v2085
      %v2138 = vunpack.c.l.b16 %v2086
      %v2139 = vunpack.c.h.b16 %v2086
      %v2140 = vunpack.c.l.b16 %v2087
      %v2141 = vunpack.c.h.b16 %v2087
      %v2142 = vpack.c.b16 %v2112, %v2110
      %v2143 = vpack.c.b16 %v2113, %v2111
      %v2144 = vpack.c.b16 %v2116, %v2114
      %v2145 = vpack.c.b16 %v2117, %v2115
      %v2146 = vpack.c.b16 %v2120, %v2118
      %v2147 = vpack.c.b16 %v2121, %v2119
      %v2148 = vpack.c.b16 %v2124, %v2122
      %v2149 = vpack.c.b16 %v2125, %v2123
      %v2150 = vpack.c.b16 %v2128, %v2126
      %v2151 = vpack.c.b16 %v2129, %v2127
      %v2152 = vpack.c.b16 %v2132, %v2130
      %v2153 = vpack.c.b16 %v2133, %v2131
      %v2154 = vpack.c.b16 %v2136, %v2134
      %v2155 = vpack.c.b16 %v2137, %v2135
      %v2156 = vpack.c.b16 %v2140, %v2138
      %v2157 = vpack.c.b16 %v2141, %v2139
      %2174 = vmatpush.bf16.msra.mxu0 %v2156
      %2175 = vmatpush.bf16.msra.mxu0 %v2154
      %2176 = vmatpush.bf16.msra.mxu0 %v2152
      %2177 = vmatpush.bf16.msra.mxu0 %v2150
      %2178 = vmatpush.bf16.msra.mxu0 %v2148
      %2179 = vmatpush.bf16.msra.mxu0 %v2146
      %2180 = vmatpush.bf16.msra.mxu0 %v2144
      %2181 = vmatpush.bf16.msra.mxu0 %v2142
      %2182 = vmatmul.bf16.gmra.mxu0 %v2071
      %v2183 = vpop.f32.mrf.mxu0
      %v2184 = vadd.f32 %v2090, %v2183
      %v2185 = vpop.f32.mrf.mxu0
      %v2186 = vadd.f32 %v2090, %v2185
      %2187 = vdwg.mxu0
      %2188 = vmatpush.bf16.msra.mxu0 %v2157
      %2189 = vmatpush.bf16.msra.mxu0 %v2155
      %2190 = vmatpush.bf16.msra.mxu0 %v2153
      %2191 = vmatpush.bf16.msra.mxu0 %v2151
      %2192 = vmatpush.bf16.msra.mxu0 %v2149
      %2193 = vmatpush.bf16.msra.mxu0 %v2147
      %2194 = vmatpush.bf16.msra.mxu0 %v2145
      %2195 = vmatpush.bf16.msra.mxu0 %v2143
      %2196 = vmatmul.bf16.gmra.mxu0 %v2071
      %v2197 = vpop.f32.mrf.mxu0
      %v2198 = vadd.f32 %v2091, %v2197
      %v2199 = vpop.f32.mrf.mxu0
      %v2200 = vadd.f32 %v2091, %v2199
      %2201 = vdwg.mxu0
      %v2202 = vmul.f32 %v2184, %v2184
      %v2203 = vmul.f32 %v2198, %v2198
      %v2204 = vmul.f32 %v2186, %v2186
      %v2205 = vmul.f32 %v2200, %v2200
      %v2206 = vmul.f32 %v2184, %v2202
      %v2207 = vmul.f32 %v2198, %v2203
      %v2208 = vmul.f32 %v2186, %v2204
      %v2209 = vmul.f32 %v2200, %v2205
      %v2210 = vmul.f32 %v2206, 0.044715
      %v2211 = vmul.f32 %v2207, 0.044715
      %v2212 = vmul.f32 %v2208, 0.044715
      %v2213 = vmul.f32 %v2209, 0.044715
      %v2214 = vadd.f32 %v2184, %v2210
      %v2215 = vadd.f32 %v2198, %v2211
      %v2216 = vadd.f32 %v2186, %v2212
      %v2217 = vadd.f32 %v2200, %v2213
      %v2218 = vmul.f32 %v2214, 0.7978846
      %v2219 = vmul.f32 %v2215, 0.7978846
      %v2220 = vmul.f32 %v2216, 0.7978846
      %v2221 = vmul.f32 %v2217, 0.7978846
      %v2222 = vtanh.pop %v2218
      %v2223 = vtanh.pop %v2219
      %v2224 = vtanh.pop %v2220
      %v2225 = vtanh.pop %v2221
      %v2226 = vadd.f32 %v2222, 1.0
      %v2227 = vadd.f32 %v2223, 1.0
      %v2228 = vadd.f32 %v2224, 1.0
      %v2229 = vadd.f32 %v2225, 1.0
      %v2230 = vmul.f32 %v2226, 0.5
      %v2231 = vmul.f32 %v2227, 0.5
      %v2232 = vmul.f32 %v2228, 0.5
      %v2233 = vmul.f32 %v2229, 0.5
      %v2234 = vmul.f32 %v2184, %v2230
      %v2235 = vmul.f32 %v2198, %v2231
      %v2236 = vmul.f32 %v2186, %v2232
      %v2237 = vmul.f32 %v2200, %v2233
      %v2238 = vpack.c.bf16 %v2236, %v2234
      %v2239 = vpack.c.bf16 %v2237, %v2235
      %v2240 = vld [vmem:[%s14] sm:$0xf]
      %v2241 = vld [vmem:[%s14 + $0x4] sm:$0xf]
      %v2242 = vld [vmem:[%s14 + $0x8] sm:$0xf]
      %v2243 = vld [vmem:[%s14 + $0xc] sm:$0xf]
      %v2244 = vld [vmem:[%s14 + $0x10] sm:$0xf]
      %v2245 = vld [vmem:[%s14 + $0x14] sm:$0xf]
      %v2246 = vld [vmem:[%s14 + $0x18] sm:$0xf]
      %v2247 = vld [vmem:[%s14 + $0x1c] sm:$0xf]
      %v2248 = vld [vmem:[%s14 + $0x20] sm:$0xf]
      %v2249 = vld [vmem:[%s14 + $0x24] sm:$0xf]
      %v2250 = vld [vmem:[%s14 + $0x28] sm:$0xf]
      %v2251 = vld [vmem:[%s14 + $0x2c] sm:$0xf]
      %v2252 = vld [vmem:[%s14 + $0x30] sm:$0xf]
      %v2253 = vld [vmem:[%s14 + $0x34] sm:$0xf]
      %v2254 = vld [vmem:[%s14 + $0x38] sm:$0xf]
      %v2255 = vld [vmem:[%s14 + $0x3c] sm:$0xf]
      %v2256 = vld [vmem:[%s14 + $0x40] sm:$0xf]
      %v2257 = vld [vmem:[%s14 + $0x44] sm:$0xf]
      %v2258 = vld [vmem:[%s14 + $0x48] sm:$0xf]
      %v2259 = vld [vmem:[%s14 + $0x4c] sm:$0xf]
      %v2260 = vld [vmem:[%s14 + $0x50] sm:$0xf]
      %v2261 = vld [vmem:[%s14 + $0x54] sm:$0xf]
      %v2262 = vld [vmem:[%s14 + $0x58] sm:$0xf]
      %v2263 = vld [vmem:[%s14 + $0x5c] sm:$0xf]
      %v2264 = vld [vmem:[%s14 + $0x60] sm:$0xf]
      %v2265 = vld [vmem:[%s14 + $0x64] sm:$0xf]
      %v2266 = vld [vmem:[%s14 + $0x68] sm:$0xf]
      %v2267 = vld [vmem:[%s14 + $0x6c] sm:$0xf]
      %v2268 = vld [vmem:[%s14 + $0x70] sm:$0xf]
      %v2269 = vld [vmem:[%s14 + $0x74] sm:$0xf]
      %v2270 = vld [vmem:[%s14 + $0x78] sm:$0xf]
      %v2271 = vld [vmem:[%s14 + $0x7c] sm:$0xf]
      %v2272 = vld [vmem:[%s15] sm:$0x1]
      %v2274 = vperm.slane %v2272, 0
      %v2308 = vunpack.c.l.b16 %v2240
      %v2309 = vunpack.c.l.b16 %v2241
      %v2310 = vunpack.c.l.b16 %v2242
      %v2311 = vunpack.c.l.b16 %v2243
      %v2312 = vunpack.c.l.b16 %v2244
      %v2313 = vunpack.c.l.b16 %v2245
      %v2314 = vunpack.c.l.b16 %v2246
      %v2315 = vunpack.c.l.b16 %v2247
      %v2316 = vunpack.c.l.b16 %v2248
      %v2317 = vunpack.c.l.b16 %v2249
      %v2318 = vunpack.c.l.b16 %v2250
      %v2319 = vunpack.c.l.b16 %v2251
      %v2320 = vunpack.c.l.b16 %v2252
      %v2321 = vunpack.c.l.b16 %v2253
      %v2322 = vunpack.c.l.b16 %v2254
      %v2323 = vunpack.c.l.b16 %v2255
      %v2324 = vunpack.c.l.b16 %v2256
      %v2325 = vunpack.c.l.b16 %v2257
      %v2326 = vunpack.c.l.b16 %v2258
      %v2327 = vunpack.c.l.b16 %v2259
      %v2328 = vunpack.c.l.b16 %v2260
      %v2329 = vunpack.c.l.b16 %v2261
      %v2330 = vunpack.c.l.b16 %v2262
      %v2331 = vunpack.c.l.b16 %v2263
      %v2332 = vunpack.c.l.b16 %v2264
      %v2333 = vunpack.c.l.b16 %v2265
      %v2334 = vunpack.c.l.b16 %v2266
      %v2335 = vunpack.c.l.b16 %v2267
      %v2336 = vunpack.c.l.b16 %v2268
      %v2337 = vunpack.c.l.b16 %v2269
      %v2338 = vunpack.c.l.b16 %v2270
      %v2339 = vunpack.c.l.b16 %v2271
      %v2340 = vpack.c.b16 %v2309, %v2308
      %v2341 = vpack.c.b16 %v2311, %v2310
      %v2342 = vpack.c.b16 %v2313, %v2312
      %v2343 = vpack.c.b16 %v2315, %v2314
      %v2344 = vpack.c.b16 %v2317, %v2316
      %v2345 = vpack.c.b16 %v2319, %v2318
      %v2346 = vpack.c.b16 %v2321, %v2320
      %v2347 = vpack.c.b16 %v2323, %v2322
      %v2348 = vpack.c.b16 %v2325, %v2324
      %v2349 = vpack.c.b16 %v2327, %v2326
      %v2350 = vpack.c.b16 %v2329, %v2328
      %v2351 = vpack.c.b16 %v2331, %v2330
      %v2352 = vpack.c.b16 %v2333, %v2332
      %v2353 = vpack.c.b16 %v2335, %v2334
      %v2354 = vpack.c.b16 %v2337, %v2336
      %v2355 = vpack.c.b16 %v2339, %v2338
      %2372 = vmatpush.bf16.msra.mxu0 %v2347
      %2373 = vmatpush.bf16.msra.mxu0 %v2346
      %2374 = vmatpush.bf16.msra.mxu0 %v2345
      %2375 = vmatpush.bf16.msra.mxu0 %v2344
      %2376 = vmatpush.bf16.msra.mxu0 %v2343
      %2377 = vmatpush.bf16.msra.mxu0 %v2342
      %2378 = vmatpush.bf16.msra.mxu0 %v2341
      %2379 = vmatpush.bf16.msra.mxu0 %v2340
      %2380 = vmatmul.bf16.gmra.mxu0 %v2238
      %v2381 = vpop.f32.mrf.mxu0
      %v2382 = vadd.f32 %v2274, %v2381
      %v2383 = vpop.f32.mrf.mxu0
      %v2384 = vadd.f32 %v2274, %v2383
      %2385 = vdwg.mxu0
      %2386 = vmatpush.bf16.msra.mxu0 %v2355
      %2387 = vmatpush.bf16.msra.mxu0 %v2354
      %2388 = vmatpush.bf16.msra.mxu0 %v2353
      %2389 = vmatpush.bf16.msra.mxu0 %v2352
      %2390 = vmatpush.bf16.msra.mxu0 %v2351
      %2391 = vmatpush.bf16.msra.mxu0 %v2350
      %2392 = vmatpush.bf16.msra.mxu0 %v2349
      %2393 = vmatpush.bf16.msra.mxu0 %v2348
      %2394 = vmatmul.bf16.gmra.mxu0 %v2239
      %v2395 = vpop.f32.mrf.mxu0
      %v2396 = vadd.f32 %v2382, %v2395
      %v2397 = vpop.f32.mrf.mxu0
      %v2398 = vadd.f32 %v2384, %v2397
      %2399 = vdwg.mxu0
      %v2400 = vadd.f32 %v2396, %v2069
      %v2401 = vadd.f32 %v2398, %v2070
      %2402 = vadd.xlane.f32.xlu0 %v2400
      %v2403 = vpop.xlane.xlu0 %2402
      %2404 = vadd.xlane.f32.xlu0 %v2401
      %v2405 = vpop.xlane.xlu0 %2404
      %v2406 = vmul.f32 %v2403, %v2022
      %v2407 = vmul.f32 %v2405, %v2022
      %v2408 = vsub.f32 %v2400, %v2406
      %v2409 = vsub.f32 %v2401, %v2407
      %v2410 = vmul.f32 %v2408, %v2408
      %v2411 = vmul.f32 %v2409, %v2409
      %2412 = vadd.xlane.f32.xlu0 %v2410
      %v2413 = vpop.xlane.xlu0 %2412
      %2414 = vadd.xlane.f32.xlu0 %v2411
      %v2415 = vpop.xlane.xlu0 %2414
      %v2416 = vmul.f32 %v2413, %v2022
      %v2417 = vmul.f32 %v2415, %v2022
      %v2418 = vadd.f32 %v2416, 1e-12
      %v2419 = vadd.f32 %v2417, 1e-12
      %v2420 = vrsqrt.pop %v2418
      %v2421 = vmul.f32 %v2420, %v2418
      %v2422 = vmul.f32 %v2421, %v2420
      %v2423 = vmul.f32 0.5, %v2422
      %v2424 = vsub.f32 1.5, %v2423
      %v2425 = vmul.f32 %v2420, %v2424
      %vm2426 = vweird.f32 %v2418
      %vm2427 = vweird.f32 %v2420
      %vm2428 = vmor %vm2426, %vm2427
      %v2429 = vsel %vm2428, %v2420, %v2425
      %v2430 = vrsqrt.pop %v2419
      %v2431 = vmul.f32 %v2430, %v2419
      %v2432 = vmul.f32 %v2431, %v2430
      %v2433 = vmul.f32 0.5, %v2432
      %v2434 = vsub.f32 1.5, %v2433
      %v2435 = vmul.f32 %v2430, %v2434
      %vm2436 = vweird.f32 %v2419
      %vm2437 = vweird.f32 %v2430
      %vm2438 = vmor %vm2436, %vm2437
      %v2439 = vsel %vm2438, %v2430, %v2435
      %v2440 = vmul.f32 %v2408, %v2429
      %v2441 = vmul.f32 %v2409, %v2439
      %v2442 = vld [vmem:[%s16] sm:$0x1]
      %v2444 = vperm.slane %v2442, 0
      %v2446 = vmul.f32 %v2440, %v2444
      %v2447 = vmul.f32 %v2441, %v2444
      %v2448 = vld [vmem:[%s17] sm:$0x1]
      %v2450 = vperm.slane %v2448, 0
      %v2452 = vadd.f32 %v2446, %v2450
      %v2453 = vadd.f32 %v2447, %v2450
      %v2454 = vpack.c.bf16 %v2452, %v2452
      %v2455 = vpack.c.bf16 %v2453, %v2453
      %2456 = vst [vmem:[%s589] sm:$0xf] %v2454
      %2457 = vst [vmem:[%s589 + $0x4] sm:$0xf] %v2455
      %p2458 = scmp.lt.s32.totalorder %s29, 1
      %s2459 = scalar_select %p2458, %s29, 1
      %s2460 = smul.addr %s2459, 2
      %s2461 = smul.addr %s2460, 4
      %s2462 = scalar_lea.vmem %s18, %s2461
      // Predicated region
      $region93: #{_lambda_.5} parent=91 // pred_check
        %p2463 = pneg %p435
      $region94: #{_lambda_.5} parent=91 // pred_check_branch
        %2465 = sbr.rel (%p2463) target = $region96
      $region95: #{_lambda_.5} parent=91 // pred_region
        _
      $region96: #{_lambda_.5} parent=91 // pred_fallthru
        _
    $region92: #{_lambda_.5} parent=5 // pred_fallthru
      _
    %p2466 = scmp.le.s32.totalorder 2, %s24
    // Predicated region
    $region97: #{_lambda_.5} parent=5 // pred_check
      %p2467 = pneg %p2466
    $region98: #{_lambda_.5} parent=5 // pred_check_branch
      %2469 = sbr.rel (%p2467) target = $region100
    $region99: #{_lambda_.5} parent=5 // pred_region
      %s2470 = ssub.s32 %s24, 2
      // Predicated region
      $region101: #{_lambda_.5} parent=99 // pred_check
        %p2471 = pneg %p441
      $region102: #{_lambda_.5} parent=99 // pred_check_branch
        %2473 = sbr.rel (%p2471) target = $region104
      $region103: #{_lambda_.5} parent=99 // pred_region
        %p2474 = scmp.lt.s32.totalorder %s30, 1
        %s2475 = scalar_select %p2474, %s30, 1
        %s2476 = smul.addr %s2475, 2
        %s2477 = smul.addr %s2476, 4
        %s2478 = scalar_lea.vmem %s18, %s2477
      $region104: #{_lambda_.5} parent=99 // pred_fallthru
        _
    $region100: #{_lambda_.5} parent=5 // pred_fallthru
      _
  $region6: #{_lambda_.5} parent=0 // loop_footer
    %s28 = sadd.s32 1, %s24
  $region7: #{_lambda_.5} parent=0 // loop_footer_branch
    %23 = sbr.rel target = $region3
  $region8: #{_lambda_.5} parent=0 // loop_exit
    _

</llo_original>
